<compile_context>
chip_gen: v7x
topology: tpu7x:2x2x1
jax: 0.10.0
libtpu: 0.0.40
codegen_flags: <defaults>
</compile_context>

<pallas_src>
import functools

import jax
import jax.numpy as jnp
from jax.experimental import pallas as pl
from jax.experimental.pallas import tpu as pltpu


def _eta_fusion_kernel(nbr_ref, ref_ref, mask_ref,
                       w1n_ref, w1r_ref, w1m_ref, w2_ref,
                       b1_ref, b2_ref, wff_ref, wfm_ref, bf_ref,
                       o_ref,
                       sc_ref, acc_ref, xb_ref, xbm_ref,
                       *, H, W, N, PAD):
    HW = H * W
    i = pl.program_id(1)
    bf16 = jnp.bfloat16

    # Horizontal-boundary masks for the 3x3 taps.  Vertical boundaries are
    # handled by the zero border rows of the flattened buffers.
    w_idx = jax.lax.broadcasted_iota(jnp.int32, (HW, 1), 0) % W
    m_left = (w_idx >= 1).astype(jnp.float32)        # tap reads column w-1
    m_right = (w_idx <= W - 2).astype(jnp.float32)   # tap reads column w+1

    def conv3x3(xbuf, w_ref):
        # xbuf : (XB, Cin) zero-bordered flattened input (rows = h*W + w + PAD)
        # w_ref: (3, 3, Cin, Cout) bf16
        acc = jnp.zeros((HW, w_ref.shape[-1]), jnp.float32)
        for dh in range(3):
            for dw in range(3):
                off = (dh - 1) * W + (dw - 1)
                x = xbuf[pl.ds(PAD + off, HW), :]
                if dw == 0:
                    x = x * m_left
                elif dw == 2:
                    x = x * m_right
                acc += jnp.dot(x.astype(bf16), w_ref[dh, dw],
                               preferred_element_type=jnp.float32)
        return acc

    nbr = nbr_ref[0, 0].reshape(HW, -1)              # (HW, C) f32

    @pl.when(i == 0)
    def _init():
        # Zero the borders once per batch element; interiors get overwritten.
        xb_ref[...] = jnp.zeros_like(xb_ref)
        xbm_ref[...] = jnp.zeros_like(xbm_ref)
        # tAtt_1 contribution of the reference frame + mask (+ bias) is the
        # same for every neighbour frame -> compute once, keep in VMEM.
        xb_ref[pl.ds(PAD, HW), :] = ref_ref[0].reshape(HW, -1)
        xbm_ref[pl.ds(PAD, HW), :] = mask_ref[0].reshape(HW, -1)
        sc_ref[...] = (conv3x3(xb_ref, w1r_ref) + conv3x3(xbm_ref, w1m_ref)
                       + b1_ref[0])
        # Initialise the 1x1-fusion accumulator with the mask columns + bias.
        acc_ref[...] = jnp.dot(mask_ref[0].reshape(HW, -1).astype(bf16),
                               wfm_ref[...],
                               preferred_element_type=jnp.float32) + bf_ref[0]

    # --- temporal attention for frame i (entirely in VMEM) ------------------
    xb_ref[pl.ds(PAD, HW), :] = nbr
    a1 = sc_ref[...] + conv3x3(xb_ref, w1n_ref)      # tAtt_1
    a1 = jnp.where(a1 >= 0, a1, 0.1 * a1)            # LeakyReLU(0.1)
    xb_ref[pl.ds(PAD, HW), :] = a1
    att = conv3x3(xb_ref, w2_ref) + b2_ref[0]        # tAtt_2

    # --- attention weighting + partial 1x1 fusion (accumulated over frames) --
    weighted = nbr * att
    acc_ref[...] += jnp.dot(weighted.astype(bf16), wff_ref[0],
                            preferred_element_type=jnp.float32)

    @pl.when(i == N - 1)
    def _finalize():
        fea = acc_ref[...]
        o_ref[0] = jnp.where(fea >= 0, fea, 0.1 * fea)   # LeakyReLU(0.1)


def eta_fusion_forward(aligned_fea, exp_mask, params, center=2):
    B, N, H, W, C = aligned_fea.shape
    nf = params["w1"].shape[-1]
    assert nf == C, "module semantics require nf == C (aligned_fea * att)"
    # W being a multiple of 8 keeps the (H, W, C) -> (H*W, C) reshapes layout-free.

    HW = H * W
    PAD = ((W + 1 + 7) // 8) * 8          # sublane-aligned top border >= W+1 rows
    XB = PAD + HW + W + 1                 # + bottom border rows

    bf16 = jnp.bfloat16
    w1 = params["w1"]                                 # (3, 3, 2C+3, nf)
    w1r = w1[:, :, :C, :].astype(bf16)                # reference-frame channels
    w1n = w1[:, :, C:2 * C, :].astype(bf16)           # neighbour-frame channels
    w1m = w1[:, :, 2 * C:, :].astype(bf16)            # mask channels
    w2 = params["w2"].astype(bf16)                    # (3, 3, nf, nf)
    wff = params["wf"][:N * C].reshape(N, C, nf).astype(bf16)
    wfm = params["wf"][N * C:].astype(bf16)           # (3, nf)
    b1 = params["b1"].reshape(1, nf).astype(jnp.float32)
    b2 = params["b2"].reshape(1, nf).astype(jnp.float32)
    bfb = params["bf"].reshape(1, nf).astype(jnp.float32)
    ref = aligned_fea[:, center]                      # (B, H, W, C)

    kernel = functools.partial(_eta_fusion_kernel, H=H, W=W, N=N, PAD=PAD)
    out = pl.pallas_call(
        kernel,
        out_shape=jax.ShapeDtypeStruct((B, HW, nf), jnp.float32),
        grid_spec=pltpu.PrefetchScalarGridSpec(
            num_scalar_prefetch=0,
            grid=(B, N),
            in_specs=[
                pl.BlockSpec((1, 1, H, W, C), lambda b, i: (b, i, 0, 0, 0)),  # nbr
                pl.BlockSpec((1, H, W, C), lambda b, i: (b, 0, 0, 0)),        # ref
                pl.BlockSpec((1, H, W, 3), lambda b, i: (b, 0, 0, 0)),        # mask
                pl.BlockSpec((3, 3, C, nf), lambda b, i: (0, 0, 0, 0)),       # w1 nbr
                pl.BlockSpec((3, 3, C, nf), lambda b, i: (0, 0, 0, 0)),       # w1 ref
                pl.BlockSpec((3, 3, 3, nf), lambda b, i: (0, 0, 0, 0)),       # w1 mask
                pl.BlockSpec((3, 3, nf, nf), lambda b, i: (0, 0, 0, 0)),      # w2
                pl.BlockSpec((1, nf), lambda b, i: (0, 0)),                   # b1
                pl.BlockSpec((1, nf), lambda b, i: (0, 0)),                   # b2
                pl.BlockSpec((1, C, nf), lambda b, i: (i, 0, 0)),             # wf frame i
                pl.BlockSpec((3, nf), lambda b, i: (0, 0)),                   # wf mask
                pl.BlockSpec((1, nf), lambda b, i: (0, 0)),                   # bf
            ],
            out_specs=pl.BlockSpec((1, HW, nf), lambda b, i: (b, 0, 0)),
            scratch_shapes=[
                pltpu.VMEM((HW, nf), jnp.float32),    # conv1 ref+mask part
                pltpu.VMEM((HW, nf), jnp.float32),    # fusion accumulator
                pltpu.VMEM((XB, nf), jnp.float32),    # zero-bordered conv input
                pltpu.VMEM((XB, 3), jnp.float32),     # zero-bordered mask input
            ],
        ),
        compiler_params=pltpu.CompilerParams(
            dimension_semantics=("parallel", "arbitrary")),
    )(aligned_fea, ref, exp_mask, w1n, w1r, w1m, w2, b1, b2, wff, wfm, bfb)
    return out.reshape(B, H, W, nf)


# ----------------------------------------------------------------------------
# Pure-JAX reference (same bf16-operand / f32-accumulation precision as kernel)
# ----------------------------------------------------------------------------
def reference_forward(aligned_fea, exp_mask, params, center=2):
    B, N, H, W, C = aligned_fea.shape
    dn = ("NHWC", "HWIO", "NHWC")
    bf16 = jnp.bfloat16

    def conv(x, w):
        return jax.lax.conv_general_dilated(
            x.astype(bf16), w.astype(bf16), (1, 1), "SAME",
            dimension_numbers=dn, preferred_element_type=jnp.float32)

    ref = aligned_fea[:, center]
    atts = []
    for i in range(N):
        att_in = jnp.concatenate([ref, aligned_fea[:, i], exp_mask], axis=-1)
        a = conv(att_in, params["w1"]) + params["b1"]
        a = jnp.where(a >= 0, a, 0.1 * a)
        a = conv(a, params["w2"]) + params["b2"]
        atts.append(a)
    att = jnp.stack(atts, axis=1)
    weighted = aligned_fea * att
    fuse_in = jnp.concatenate(
        [weighted.transpose(0, 2, 3, 1, 4).reshape(B, H, W, N * C), exp_mask],
        axis=-1)
    fea = jnp.einsum("bhwc,co->bhwo", fuse_in.astype(bf16),
                     params["wf"].astype(bf16),
                     preferred_element_type=jnp.float32)
    fea = fea + params["bf"]
    return jnp.where(fea >= 0, fea, 0.1 * fea)


if __name__ == "__main__":
    # Module-consistent small shapes: nf == C (required by the elementwise
    # multiply in the original module), nframes=5, center=2, in_mask=True.
    B, N, C, H, W = 2, 5, 32, 8, 8
    nf = C

    key = jax.random.PRNGKey(0)
    ks = jax.random.split(key, 8)
    params = {
        "w1": jax.random.normal(ks[0], (3, 3, 2 * nf + 3, nf), jnp.float32) * 0.05,
        "b1": jax.random.normal(ks[1], (nf,), jnp.float32) * 0.05,
        "w2": jax.random.normal(ks[2], (3, 3, nf, nf), jnp.float32) * 0.05,
        "b2": jax.random.normal(ks[3], (nf,), jnp.float32) * 0.05,
        "wf": jax.random.normal(ks[4], (N * nf + 3, nf), jnp.float32) * 0.05,
        "bf": jax.random.normal(ks[5], (nf,), jnp.float32) * 0.05,
    }
    aligned_fea = jax.random.normal(ks[6], (B, N, H, W, C), jnp.float32)
    exp_mask = jax.random.normal(ks[7], (B, H, W, 3), jnp.float32)

    out = eta_fusion_forward(aligned_fea, exp_mask, params, center=2)
    out = jax.block_until_ready(out)

    ref_out = reference_forward(aligned_fea, exp_mask, params, center=2)
    assert out.shape == (B, H, W, nf)
    max_err = float(jnp.max(jnp.abs(out - ref_out)))
    assert jnp.allclose(out, ref_out, rtol=2e-2, atol=2e-2), max_err

    print("KERNEL_OK")
</pallas_src>

<mosaic_0001>
module attributes {stable_mosaic.version = 11 : i64} {
  func.func @_eta_fusion_kernel(%arg0: i32, %arg1: i32, %arg2: memref<1x1x8x8x32xf32, #tpu.memory_space<vmem>>, %arg3: memref<1x8x8x32xf32, #tpu.memory_space<vmem>>, %arg4: memref<1x8x8x3xf32, #tpu.memory_space<vmem>>, %arg5: memref<3x3x32x32xbf16, #tpu.memory_space<vmem>>, %arg6: memref<3x3x32x32xbf16, #tpu.memory_space<vmem>>, %arg7: memref<3x3x3x32xbf16, #tpu.memory_space<vmem>>, %arg8: memref<3x3x32x32xbf16, #tpu.memory_space<vmem>>, %arg9: memref<1x32xf32, #tpu.memory_space<vmem>>, %arg10: memref<1x32xf32, #tpu.memory_space<vmem>>, %arg11: memref<1x32x32xbf16, #tpu.memory_space<vmem>>, %arg12: memref<3x32xbf16, #tpu.memory_space<vmem>>, %arg13: memref<1x32xf32, #tpu.memory_space<vmem>>, %arg14: memref<1x64x32xf32, #tpu.memory_space<vmem>>, %arg15: memref<64x32xf32, #tpu.memory_space<vmem>>, %arg16: memref<64x32xf32, #tpu.memory_space<vmem>>, %arg17: memref<89x32xf32, #tpu.memory_space<vmem>>, %arg18: memref<89x3xf32, #tpu.memory_space<vmem>>) attributes {dimension_semantics = [#tpu.dimension_semantics<parallel>, #tpu.dimension_semantics<arbitrary>], iteration_bounds = array<i64: 2, 5>, scalar_prefetch = 0 : i64, scratch_operands = 4 : i64, tpu.core_type = #tpu.core_type<tc>, window_params = [{transform_indices = @transform_0, window_bounds = array<i64: 1, 1, 8, 8, 32>}, {transform_indices = @transform_1, window_bounds = array<i64: 1, 8, 8, 32>}, {transform_indices = @transform_2, window_bounds = array<i64: 1, 8, 8, 3>}, {pipeline_mode = #tpu.pipeline_mode<synchronous>, transform_indices = @transform_3, window_bounds = array<i64: 3, 3, 32, 32>}, {pipeline_mode = #tpu.pipeline_mode<synchronous>, transform_indices = @transform_4, window_bounds = array<i64: 3, 3, 32, 32>}, {pipeline_mode = #tpu.pipeline_mode<synchronous>, transform_indices = @transform_5, window_bounds = array<i64: 3, 3, 3, 32>}, {pipeline_mode = #tpu.pipeline_mode<synchronous>, transform_indices = @transform_6, window_bounds = array<i64: 3, 3, 32, 32>}, {pipeline_mode = #tpu.pipeline_mode<synchronous>, transform_indices = @transform_7, window_bounds = array<i64: 1, 32>}, {pipeline_mode = #tpu.pipeline_mode<synchronous>, transform_indices = @transform_8, window_bounds = array<i64: 1, 32>}, {transform_indices = @transform_9, window_bounds = array<i64: 1, 32, 32>}, {pipeline_mode = #tpu.pipeline_mode<synchronous>, transform_indices = @transform_10, window_bounds = array<i64: 3, 32>}, {pipeline_mode = #tpu.pipeline_mode<synchronous>, transform_indices = @transform_11, window_bounds = array<i64: 1, 32>}, {transform_indices = @transform_12, window_bounds = array<i64: 1, 64, 32>}]} {
    %0 = tpu.iota {dimensions = array<i32: 0>} : vector<64x1xi32>
    %c8_i32 = arith.constant 8 : i32
    %c0_i32 = arith.constant 0 : i32
    %1 = arith.cmpi eq, %c8_i32, %c0_i32 : i32
    %c1_i32 = arith.constant 1 : i32
    %2 = arith.select %1, %c1_i32, %c8_i32 : i32
    %3 = vector.broadcast %2 : i32 to vector<64x1xi32>
    %4 = arith.remsi %0, %3 : vector<64x1xi32>
    %c0_i32_0 = arith.constant 0 : i32
    %5 = vector.broadcast %c0_i32_0 : i32 to vector<64x1xi32>
    %6 = arith.cmpi ne, %4, %5 : vector<64x1xi32>
    %c0_i32_1 = arith.constant 0 : i32
    %7 = vector.broadcast %c0_i32_1 : i32 to vector<64x1xi32>
    %8 = arith.cmpi slt, %4, %7 : vector<64x1xi32>
    %c0_i32_2 = arith.constant 0 : i32
    %9 = arith.cmpi slt, %2, %c0_i32_2 : i32
    %10 = vector.broadcast %9 : i1 to vector<64x1xi1>
    %11 = vector.broadcast %10 : vector<64x1xi1> to vector<64x1xi1>
    %12 = arith.xori %8, %11 : vector<64x1xi1>
    %13 = arith.andi %12, %6 : vector<64x1xi1>
    %14 = vector.broadcast %2 : i32 to vector<64x1xi32>
    %15 = arith.addi %4, %14 : vector<64x1xi32>
    %16 = arith.select %13, %15, %4 : vector<64x1xi1>, vector<64x1xi32>
    %c1_i32_3 = arith.constant 1 : i32
    %17 = vector.broadcast %c1_i32_3 : i32 to vector<64x1xi32>
    %18 = arith.cmpi sge, %16, %17 : vector<64x1xi32>
    %19 = arith.extui %18 : vector<64x1xi1> to vector<64x1xi32>
    %20 = arith.sitofp %19 : vector<64x1xi32> to vector<64x1xf32>
    %c6_i32 = arith.constant 6 : i32
    %21 = vector.broadcast %c6_i32 : i32 to vector<64x1xi32>
    %22 = arith.cmpi sle, %16, %21 : vector<64x1xi32>
    %23 = arith.extui %22 : vector<64x1xi1> to vector<64x1xi32>
    %24 = arith.sitofp %23 : vector<64x1xi32> to vector<64x1xf32>
    %c0 = arith.constant 0 : index
    %c0_4 = arith.constant 0 : index
    %c0_5 = arith.constant 0 : index
    %c0_6 = arith.constant 0 : index
    %c0_7 = arith.constant 0 : index
    %25 = vector.load %arg2[%c0, %c0_4, %c0_5, %c0_6, %c0_7] : memref<1x1x8x8x32xf32, #tpu.memory_space<vmem>>, vector<1x1x8x8x32xf32>
    %26 = vector.shape_cast %25 : vector<1x1x8x8x32xf32> to vector<8x8x32xf32>
    %27 = vector.shape_cast %26 : vector<8x8x32xf32> to vector<64x32xf32>
    %c0_i32_8 = arith.constant 0 : i32
    %28 = arith.cmpi eq, %arg1, %c0_i32_8 : i32
    %29 = arith.extui %28 : i1 to i32
    %c0_i32_9 = arith.constant 0 : i32
    %30 = arith.cmpi ne, %29, %c0_i32_9 : i32
    scf.if %30 {
      %cst_145 = arith.constant 0.000000e+00 : f32
      %190 = vector.broadcast %cst_145 : f32 to vector<89x32xf32>
      %c0_146 = arith.constant 0 : index
      %c0_147 = arith.constant 0 : index
      %191 = vector.load %arg17[%c0_146, %c0_147] : memref<89x32xf32, #tpu.memory_space<vmem>>, vector<89x32xf32>
      tpu.vector_store %arg17[%c0_146, %c0_147], %190 {strides = array<i32>} : memref<89x32xf32, #tpu.memory_space<vmem>>, vector<89x32xf32>,
      %cst_148 = arith.constant 0.000000e+00 : f32
      %192 = vector.broadcast %cst_148 : f32 to vector<89x3xf32>
      %c0_149 = arith.constant 0 : index
      %c0_150 = arith.constant 0 : index
      %193 = vector.load %arg18[%c0_149, %c0_150] : memref<89x3xf32, #tpu.memory_space<vmem>>, vector<89x3xf32>
      tpu.vector_store %arg18[%c0_149, %c0_150], %192 {strides = array<i32>} : memref<89x3xf32, #tpu.memory_space<vmem>>, vector<89x3xf32>,
      %c0_151 = arith.constant 0 : index
      %c0_152 = arith.constant 0 : index
      %c0_153 = arith.constant 0 : index
      %c0_154 = arith.constant 0 : index
      %194 = vector.load %arg3[%c0_151, %c0_152, %c0_153, %c0_154] : memref<1x8x8x32xf32, #tpu.memory_space<vmem>>, vector<1x8x8x32xf32>
      %195 = vector.shape_cast %194 : vector<1x8x8x32xf32> to vector<8x8x32xf32>
      %196 = vector.shape_cast %195 : vector<8x8x32xf32> to vector<64x32xf32>
      %c16_155 = arith.constant 16 : index
      %c0_156 = arith.constant 0 : index
      %197 = vector.load %arg17[%c16_155, %c0_156] : memref<89x32xf32, #tpu.memory_space<vmem>>, vector<64x32xf32>
      tpu.vector_store %arg17[%c16_155, %c0_156], %196 {strides = array<i32>} : memref<89x32xf32, #tpu.memory_space<vmem>>, vector<64x32xf32>,
      %c0_157 = arith.constant 0 : index
      %c0_158 = arith.constant 0 : index
      %c0_159 = arith.constant 0 : index
      %c0_160 = arith.constant 0 : index
      %198 = vector.load %arg4[%c0_157, %c0_158, %c0_159, %c0_160] : memref<1x8x8x3xf32, #tpu.memory_space<vmem>>, vector<1x8x8x3xf32>
      %199 = vector.shape_cast %198 : vector<1x8x8x3xf32> to vector<8x8x3xf32>
      %200 = vector.shape_cast %199 : vector<8x8x3xf32> to vector<64x3xf32>
      %c16_161 = arith.constant 16 : index
      %c0_162 = arith.constant 0 : index
      %201 = vector.load %arg18[%c16_161, %c0_162] : memref<89x3xf32, #tpu.memory_space<vmem>>, vector<64x3xf32>
      tpu.vector_store %arg18[%c16_161, %c0_162], %200 {strides = array<i32>} : memref<89x3xf32, #tpu.memory_space<vmem>>, vector<64x3xf32>,
      %cst_163 = arith.constant 0.000000e+00 : f32
      %202 = vector.broadcast %cst_163 : f32 to vector<64x32xf32>
      %c7_164 = arith.constant 7 : index
      %c0_165 = arith.constant 0 : index
      %203 = vector.load %arg17[%c7_164, %c0_165] : memref<89x32xf32, #tpu.memory_space<vmem>>, vector<64x32xf32>
      %204 = vector.broadcast %20 : vector<64x1xf32> to vector<64x32xf32>
      %205 = arith.mulf %203, %204 : vector<64x32xf32>
      %206 = arith.truncf %205 : vector<64x32xf32> to vector<64x32xbf16>
      %c0_166 = arith.constant 0 : index
      %c0_167 = arith.constant 0 : index
      %c0_168 = arith.constant 0 : index
      %c0_169 = arith.constant 0 : index
      %207 = vector.load %arg6[%c0_166, %c0_167, %c0_168, %c0_169] : memref<3x3x32x32xbf16, #tpu.memory_space<vmem>>, vector<1x1x32x32xbf16>
      %208 = vector.shape_cast %207 : vector<1x1x32x32xbf16> to vector<32x32xbf16>
      %cst_170 = arith.constant dense<0.000000e+00> : vector<64x32xf32>
      %209 = tpu.matmul %206, %208, %cst_170 {dimension_numbers = #tpu.dot_dimension_numbers<[1], [0], [0], [1], [0, 0, 1, 1], [], []>} : vector<64x32xbf16>, vector<32x32xbf16>, vector<64x32xf32> -> vector<64x32xf32>
      %210 = arith.addf %202, %209 : vector<64x32xf32>
      %c8_171 = arith.constant 8 : index
      %c0_172 = arith.constant 0 : index
      %211 = vector.load %arg17[%c8_171, %c0_172] : memref<89x32xf32, #tpu.memory_space<vmem>>, vector<64x32xf32>
      %212 = arith.truncf %211 : vector<64x32xf32> to vector<64x32xbf16>
      %c0_173 = arith.constant 0 : index
      %c1_174 = arith.constant 1 : index
      %c0_175 = arith.constant 0 : index
      %c0_176 = arith.constant 0 : index
      %213 = vector.load %arg6[%c0_173, %c1_174, %c0_175, %c0_176] : memref<3x3x32x32xbf16, #tpu.memory_space<vmem>>, vector<1x1x32x32xbf16>
      %214 = vector.shape_cast %213 : vector<1x1x32x32xbf16> to vector<32x32xbf16>
      %cst_177 = arith.constant dense<0.000000e+00> : vector<64x32xf32>
      %215 = tpu.matmul %212, %214, %cst_177 {dimension_numbers = #tpu.dot_dimension_numbers<[1], [0], [0], [1], [0, 0, 1, 1], [], []>} : vector<64x32xbf16>, vector<32x32xbf16>, vector<64x32xf32> -> vector<64x32xf32>
      %216 = arith.addf %210, %215 : vector<64x32xf32>
      %c9_178 = arith.constant 9 : index
      %c0_179 = arith.constant 0 : index
      %217 = vector.load %arg17[%c9_178, %c0_179] : memref<89x32xf32, #tpu.memory_space<vmem>>, vector<64x32xf32>
      %218 = vector.broadcast %24 : vector<64x1xf32> to vector<64x32xf32>
      %219 = arith.mulf %217, %218 : vector<64x32xf32>
      %220 = arith.truncf %219 : vector<64x32xf32> to vector<64x32xbf16>
      %c0_180 = arith.constant 0 : index
      %c2_181 = arith.constant 2 : index
      %c0_182 = arith.constant 0 : index
      %c0_183 = arith.constant 0 : index
      %221 = vector.load %arg6[%c0_180, %c2_181, %c0_182, %c0_183] : memref<3x3x32x32xbf16, #tpu.memory_space<vmem>>, vector<1x1x32x32xbf16>
      %222 = vector.shape_cast %221 : vector<1x1x32x32xbf16> to vector<32x32xbf16>
      %cst_184 = arith.constant dense<0.000000e+00> : vector<64x32xf32>
      %223 = tpu.matmul %220, %222, %cst_184 {dimension_numbers = #tpu.dot_dimension_numbers<[1], [0], [0], [1], [0, 0, 1, 1], [], []>} : vector<64x32xbf16>, vector<32x32xbf16>, vector<64x32xf32> -> vector<64x32xf32>
      %224 = arith.addf %216, %223 : vector<64x32xf32>
      %c15_185 = arith.constant 15 : index
      %c0_186 = arith.constant 0 : index
      %225 = vector.load %arg17[%c15_185, %c0_186] : memref<89x32xf32, #tpu.memory_space<vmem>>, vector<64x32xf32>
      %226 = vector.broadcast %20 : vector<64x1xf32> to vector<64x32xf32>
      %227 = arith.mulf %225, %226 : vector<64x32xf32>
      %228 = arith.truncf %227 : vector<64x32xf32> to vector<64x32xbf16>
      %c1_187 = arith.constant 1 : index
      %c0_188 = arith.constant 0 : index
      %c0_189 = arith.constant 0 : index
      %c0_190 = arith.constant 0 : index
      %229 = vector.load %arg6[%c1_187, %c0_188, %c0_189, %c0_190] : memref<3x3x32x32xbf16, #tpu.memory_space<vmem>>, vector<1x1x32x32xbf16>
      %230 = vector.shape_cast %229 : vector<1x1x32x32xbf16> to vector<32x32xbf16>
      %cst_191 = arith.constant dense<0.000000e+00> : vector<64x32xf32>
      %231 = tpu.matmul %228, %230, %cst_191 {dimension_numbers = #tpu.dot_dimension_numbers<[1], [0], [0], [1], [0, 0, 1, 1], [], []>} : vector<64x32xbf16>, vector<32x32xbf16>, vector<64x32xf32> -> vector<64x32xf32>
      %232 = arith.addf %224, %231 : vector<64x32xf32>
      %c16_192 = arith.constant 16 : index
      %c0_193 = arith.constant 0 : index
      %233 = vector.load %arg17[%c16_192, %c0_193] : memref<89x32xf32, #tpu.memory_space<vmem>>, vector<64x32xf32>
      %234 = arith.truncf %233 : vector<64x32xf32> to vector<64x32xbf16>
      %c1_194 = arith.constant 1 : index
      %c1_195 = arith.constant 1 : index
      %c0_196 = arith.constant 0 : index
      %c0_197 = arith.constant 0 : index
      %235 = vector.load %arg6[%c1_194, %c1_195, %c0_196, %c0_197] : memref<3x3x32x32xbf16, #tpu.memory_space<vmem>>, vector<1x1x32x32xbf16>
      %236 = vector.shape_cast %235 : vector<1x1x32x32xbf16> to vector<32x32xbf16>
      %cst_198 = arith.constant dense<0.000000e+00> : vector<64x32xf32>
      %237 = tpu.matmul %234, %236, %cst_198 {dimension_numbers = #tpu.dot_dimension_numbers<[1], [0], [0], [1], [0, 0, 1, 1], [], []>} : vector<64x32xbf16>, vector<32x32xbf16>, vector<64x32xf32> -> vector<64x32xf32>
      %238 = arith.addf %232, %237 : vector<64x32xf32>
      %c17_199 = arith.constant 17 : index
      %c0_200 = arith.constant 0 : index
      %239 = vector.load %arg17[%c17_199, %c0_200] : memref<89x32xf32, #tpu.memory_space<vmem>>, vector<64x32xf32>
      %240 = vector.broadcast %24 : vector<64x1xf32> to vector<64x32xf32>
      %241 = arith.mulf %239, %240 : vector<64x32xf32>
      %242 = arith.truncf %241 : vector<64x32xf32> to vector<64x32xbf16>
      %c1_201 = arith.constant 1 : index
      %c2_202 = arith.constant 2 : index
      %c0_203 = arith.constant 0 : index
      %c0_204 = arith.constant 0 : index
      %243 = vector.load %arg6[%c1_201, %c2_202, %c0_203, %c0_204] : memref<3x3x32x32xbf16, #tpu.memory_space<vmem>>, vector<1x1x32x32xbf16>
      %244 = vector.shape_cast %243 : vector<1x1x32x32xbf16> to vector<32x32xbf16>
      %cst_205 = arith.constant dense<0.000000e+00> : vector<64x32xf32>
      %245 = tpu.matmul %242, %244, %cst_205 {dimension_numbers = #tpu.dot_dimension_numbers<[1], [0], [0], [1], [0, 0, 1, 1], [], []>} : vector<64x32xbf16>, vector<32x32xbf16>, vector<64x32xf32> -> vector<64x32xf32>
      %246 = arith.addf %238, %245 : vector<64x32xf32>
      %c23_206 = arith.constant 23 : index
      %c0_207 = arith.constant 0 : index
      %247 = vector.load %arg17[%c23_206, %c0_207] : memref<89x32xf32, #tpu.memory_space<vmem>>, vector<64x32xf32>
      %248 = vector.broadcast %20 : vector<64x1xf32> to vector<64x32xf32>
      %249 = arith.mulf %247, %248 : vector<64x32xf32>
      %250 = arith.truncf %249 : vector<64x32xf32> to vector<64x32xbf16>
      %c2_208 = arith.constant 2 : index
      %c0_209 = arith.constant 0 : index
      %c0_210 = arith.constant 0 : index
      %c0_211 = arith.constant 0 : index
      %251 = vector.load %arg6[%c2_208, %c0_209, %c0_210, %c0_211] : memref<3x3x32x32xbf16, #tpu.memory_space<vmem>>, vector<1x1x32x32xbf16>
      %252 = vector.shape_cast %251 : vector<1x1x32x32xbf16> to vector<32x32xbf16>
      %cst_212 = arith.constant dense<0.000000e+00> : vector<64x32xf32>
      %253 = tpu.matmul %250, %252, %cst_212 {dimension_numbers = #tpu.dot_dimension_numbers<[1], [0], [0], [1], [0, 0, 1, 1], [], []>} : vector<64x32xbf16>, vector<32x32xbf16>, vector<64x32xf32> -> vector<64x32xf32>
      %254 = arith.addf %246, %253 : vector<64x32xf32>
      %c24_213 = arith.constant 24 : index
      %c0_214 = arith.constant 0 : index
      %255 = vector.load %arg17[%c24_213, %c0_214] : memref<89x32xf32, #tpu.memory_space<vmem>>, vector<64x32xf32>
      %256 = arith.truncf %255 : vector<64x32xf32> to vector<64x32xbf16>
      %c2_215 = arith.constant 2 : index
      %c1_216 = arith.constant 1 : index
      %c0_217 = arith.constant 0 : index
      %c0_218 = arith.constant 0 : index
      %257 = vector.load %arg6[%c2_215, %c1_216, %c0_217, %c0_218] : memref<3x3x32x32xbf16, #tpu.memory_space<vmem>>, vector<1x1x32x32xbf16>
      %258 = vector.shape_cast %257 : vector<1x1x32x32xbf16> to vector<32x32xbf16>
      %cst_219 = arith.constant dense<0.000000e+00> : vector<64x32xf32>
      %259 = tpu.matmul %256, %258, %cst_219 {dimension_numbers = #tpu.dot_dimension_numbers<[1], [0], [0], [1], [0, 0, 1, 1], [], []>} : vector<64x32xbf16>, vector<32x32xbf16>, vector<64x32xf32> -> vector<64x32xf32>
      %260 = arith.addf %254, %259 : vector<64x32xf32>
      %c25_220 = arith.constant 25 : index
      %c0_221 = arith.constant 0 : index
      %261 = vector.load %arg17[%c25_220, %c0_221] : memref<89x32xf32, #tpu.memory_space<vmem>>, vector<64x32xf32>
      %262 = vector.broadcast %24 : vector<64x1xf32> to vector<64x32xf32>
      %263 = arith.mulf %261, %262 : vector<64x32xf32>
      %264 = arith.truncf %263 : vector<64x32xf32> to vector<64x32xbf16>
      %c2_222 = arith.constant 2 : index
      %c2_223 = arith.constant 2 : index
      %c0_224 = arith.constant 0 : index
      %c0_225 = arith.constant 0 : index
      %265 = vector.load %arg6[%c2_222, %c2_223, %c0_224, %c0_225] : memref<3x3x32x32xbf16, #tpu.memory_space<vmem>>, vector<1x1x32x32xbf16>
      %266 = vector.shape_cast %265 : vector<1x1x32x32xbf16> to vector<32x32xbf16>
      %cst_226 = arith.constant dense<0.000000e+00> : vector<64x32xf32>
      %267 = tpu.matmul %264, %266, %cst_226 {dimension_numbers = #tpu.dot_dimension_numbers<[1], [0], [0], [1], [0, 0, 1, 1], [], []>} : vector<64x32xbf16>, vector<32x32xbf16>, vector<64x32xf32> -> vector<64x32xf32>
      %268 = arith.addf %260, %267 : vector<64x32xf32>
      %cst_227 = arith.constant 0.000000e+00 : f32
      %269 = vector.broadcast %cst_227 : f32 to vector<64x32xf32>
      %c7_228 = arith.constant 7 : index
      %c0_229 = arith.constant 0 : index
      %270 = vector.load %arg18[%c7_228, %c0_229] : memref<89x3xf32, #tpu.memory_space<vmem>>, vector<64x3xf32>
      %271 = vector.broadcast %20 : vector<64x1xf32> to vector<64x3xf32>
      %272 = arith.mulf %270, %271 : vector<64x3xf32>
      %273 = arith.truncf %272 : vector<64x3xf32> to vector<64x3xbf16>
      %c0_230 = arith.constant 0 : index
      %c0_231 = arith.constant 0 : index
      %c0_232 = arith.constant 0 : index
      %c0_233 = arith.constant 0 : index
      %274 = vector.load %arg7[%c0_230, %c0_231, %c0_232, %c0_233] : memref<3x3x3x32xbf16, #tpu.memory_space<vmem>>, vector<1x1x3x32xbf16>
      %275 = vector.shape_cast %274 : vector<1x1x3x32xbf16> to vector<3x32xbf16>
      %cst_234 = arith.constant dense<0.000000e+00> : vector<64x32xf32>
      %276 = tpu.matmul %273, %275, %cst_234 {dimension_numbers = #tpu.dot_dimension_numbers<[1], [0], [0], [1], [0, 0, 1, 1], [], []>} : vector<64x3xbf16>, vector<3x32xbf16>, vector<64x32xf32> -> vector<64x32xf32>
      %277 = arith.addf %269, %276 : vector<64x32xf32>
      %c8_235 = arith.constant 8 : index
      %c0_236 = arith.constant 0 : index
      %278 = vector.load %arg18[%c8_235, %c0_236] : memref<89x3xf32, #tpu.memory_space<vmem>>, vector<64x3xf32>
      %279 = arith.truncf %278 : vector<64x3xf32> to vector<64x3xbf16>
      %c0_237 = arith.constant 0 : index
      %c1_238 = arith.constant 1 : index
      %c0_239 = arith.constant 0 : index
      %c0_240 = arith.constant 0 : index
      %280 = vector.load %arg7[%c0_237, %c1_238, %c0_239, %c0_240] : memref<3x3x3x32xbf16, #tpu.memory_space<vmem>>, vector<1x1x3x32xbf16>
      %281 = vector.shape_cast %280 : vector<1x1x3x32xbf16> to vector<3x32xbf16>
      %cst_241 = arith.constant dense<0.000000e+00> : vector<64x32xf32>
      %282 = tpu.matmul %279, %281, %cst_241 {dimension_numbers = #tpu.dot_dimension_numbers<[1], [0], [0], [1], [0, 0, 1, 1], [], []>} : vector<64x3xbf16>, vector<3x32xbf16>, vector<64x32xf32> -> vector<64x32xf32>
      %283 = arith.addf %277, %282 : vector<64x32xf32>
      %c9_242 = arith.constant 9 : index
      %c0_243 = arith.constant 0 : index
      %284 = vector.load %arg18[%c9_242, %c0_243] : memref<89x3xf32, #tpu.memory_space<vmem>>, vector<64x3xf32>
      %285 = vector.broadcast %24 : vector<64x1xf32> to vector<64x3xf32>
      %286 = arith.mulf %284, %285 : vector<64x3xf32>
      %287 = arith.truncf %286 : vector<64x3xf32> to vector<64x3xbf16>
      %c0_244 = arith.constant 0 : index
      %c2_245 = arith.constant 2 : index
      %c0_246 = arith.constant 0 : index
      %c0_247 = arith.constant 0 : index
      %288 = vector.load %arg7[%c0_244, %c2_245, %c0_246, %c0_247] : memref<3x3x3x32xbf16, #tpu.memory_space<vmem>>, vector<1x1x3x32xbf16>
      %289 = vector.shape_cast %288 : vector<1x1x3x32xbf16> to vector<3x32xbf16>
      %cst_248 = arith.constant dense<0.000000e+00> : vector<64x32xf32>
      %290 = tpu.matmul %287, %289, %cst_248 {dimension_numbers = #tpu.dot_dimension_numbers<[1], [0], [0], [1], [0, 0, 1, 1], [], []>} : vector<64x3xbf16>, vector<3x32xbf16>, vector<64x32xf32> -> vector<64x32xf32>
      %291 = arith.addf %283, %290 : vector<64x32xf32>
      %c15_249 = arith.constant 15 : index
      %c0_250 = arith.constant 0 : index
      %292 = vector.load %arg18[%c15_249, %c0_250] : memref<89x3xf32, #tpu.memory_space<vmem>>, vector<64x3xf32>
      %293 = vector.broadcast %20 : vector<64x1xf32> to vector<64x3xf32>
      %294 = arith.mulf %292, %293 : vector<64x3xf32>
      %295 = arith.truncf %294 : vector<64x3xf32> to vector<64x3xbf16>
      %c1_251 = arith.constant 1 : index
      %c0_252 = arith.constant 0 : index
      %c0_253 = arith.constant 0 : index
      %c0_254 = arith.constant 0 : index
      %296 = vector.load %arg7[%c1_251, %c0_252, %c0_253, %c0_254] : memref<3x3x3x32xbf16, #tpu.memory_space<vmem>>, vector<1x1x3x32xbf16>
      %297 = vector.shape_cast %296 : vector<1x1x3x32xbf16> to vector<3x32xbf16>
      %cst_255 = arith.constant dense<0.000000e+00> : vector<64x32xf32>
      %298 = tpu.matmul %295, %297, %cst_255 {dimension_numbers = #tpu.dot_dimension_numbers<[1], [0], [0], [1], [0, 0, 1, 1], [], []>} : vector<64x3xbf16>, vector<3x32xbf16>, vector<64x32xf32> -> vector<64x32xf32>
      %299 = arith.addf %291, %298 : vector<64x32xf32>
      %c16_256 = arith.constant 16 : index
      %c0_257 = arith.constant 0 : index
      %300 = vector.load %arg18[%c16_256, %c0_257] : memref<89x3xf32, #tpu.memory_space<vmem>>, vector<64x3xf32>
      %301 = arith.truncf %300 : vector<64x3xf32> to vector<64x3xbf16>
      %c1_258 = arith.constant 1 : index
      %c1_259 = arith.constant 1 : index
      %c0_260 = arith.constant 0 : index
      %c0_261 = arith.constant 0 : index
      %302 = vector.load %arg7[%c1_258, %c1_259, %c0_260, %c0_261] : memref<3x3x3x32xbf16, #tpu.memory_space<vmem>>, vector<1x1x3x32xbf16>
      %303 = vector.shape_cast %302 : vector<1x1x3x32xbf16> to vector<3x32xbf16>
      %cst_262 = arith.constant dense<0.000000e+00> : vector<64x32xf32>
      %304 = tpu.matmul %301, %303, %cst_262 {dimension_numbers = #tpu.dot_dimension_numbers<[1], [0], [0], [1], [0, 0, 1, 1], [], []>} : vector<64x3xbf16>, vector<3x32xbf16>, vector<64x32xf32> -> vector<64x32xf32>
      %305 = arith.addf %299, %304 : vector<64x32xf32>
      %c17_263 = arith.constant 17 : index
      %c0_264 = arith.constant 0 : index
      %306 = vector.load %arg18[%c17_263, %c0_264] : memref<89x3xf32, #tpu.memory_space<vmem>>, vector<64x3xf32>
      %307 = vector.broadcast %24 : vector<64x1xf32> to vector<64x3xf32>
      %308 = arith.mulf %306, %307 : vector<64x3xf32>
      %309 = arith.truncf %308 : vector<64x3xf32> to vector<64x3xbf16>
      %c1_265 = arith.constant 1 : index
      %c2_266 = arith.constant 2 : index
      %c0_267 = arith.constant 0 : index
      %c0_268 = arith.constant 0 : index
      %310 = vector.load %arg7[%c1_265, %c2_266, %c0_267, %c0_268] : memref<3x3x3x32xbf16, #tpu.memory_space<vmem>>, vector<1x1x3x32xbf16>
      %311 = vector.shape_cast %310 : vector<1x1x3x32xbf16> to vector<3x32xbf16>
      %cst_269 = arith.constant dense<0.000000e+00> : vector<64x32xf32>
      %312 = tpu.matmul %309, %311, %cst_269 {dimension_numbers = #tpu.dot_dimension_numbers<[1], [0], [0], [1], [0, 0, 1, 1], [], []>} : vector<64x3xbf16>, vector<3x32xbf16>, vector<64x32xf32> -> vector<64x32xf32>
      %313 = arith.addf %305, %312 : vector<64x32xf32>
      %c23_270 = arith.constant 23 : index
      %c0_271 = arith.constant 0 : index
      %314 = vector.load %arg18[%c23_270, %c0_271] : memref<89x3xf32, #tpu.memory_space<vmem>>, vector<64x3xf32>
      %315 = vector.broadcast %20 : vector<64x1xf32> to vector<64x3xf32>
      %316 = arith.mulf %314, %315 : vector<64x3xf32>
      %317 = arith.truncf %316 : vector<64x3xf32> to vector<64x3xbf16>
      %c2_272 = arith.constant 2 : index
      %c0_273 = arith.constant 0 : index
      %c0_274 = arith.constant 0 : index
      %c0_275 = arith.constant 0 : index
      %318 = vector.load %arg7[%c2_272, %c0_273, %c0_274, %c0_275] : memref<3x3x3x32xbf16, #tpu.memory_space<vmem>>, vector<1x1x3x32xbf16>
      %319 = vector.shape_cast %318 : vector<1x1x3x32xbf16> to vector<3x32xbf16>
      %cst_276 = arith.constant dense<0.000000e+00> : vector<64x32xf32>
      %320 = tpu.matmul %317, %319, %cst_276 {dimension_numbers = #tpu.dot_dimension_numbers<[1], [0], [0], [1], [0, 0, 1, 1], [], []>} : vector<64x3xbf16>, vector<3x32xbf16>, vector<64x32xf32> -> vector<64x32xf32>
      %321 = arith.addf %313, %320 : vector<64x32xf32>
      %c24_277 = arith.constant 24 : index
      %c0_278 = arith.constant 0 : index
      %322 = vector.load %arg18[%c24_277, %c0_278] : memref<89x3xf32, #tpu.memory_space<vmem>>, vector<64x3xf32>
      %323 = arith.truncf %322 : vector<64x3xf32> to vector<64x3xbf16>
      %c2_279 = arith.constant 2 : index
      %c1_280 = arith.constant 1 : index
      %c0_281 = arith.constant 0 : index
      %c0_282 = arith.constant 0 : index
      %324 = vector.load %arg7[%c2_279, %c1_280, %c0_281, %c0_282] : memref<3x3x3x32xbf16, #tpu.memory_space<vmem>>, vector<1x1x3x32xbf16>
      %325 = vector.shape_cast %324 : vector<1x1x3x32xbf16> to vector<3x32xbf16>
      %cst_283 = arith.constant dense<0.000000e+00> : vector<64x32xf32>
      %326 = tpu.matmul %323, %325, %cst_283 {dimension_numbers = #tpu.dot_dimension_numbers<[1], [0], [0], [1], [0, 0, 1, 1], [], []>} : vector<64x3xbf16>, vector<3x32xbf16>, vector<64x32xf32> -> vector<64x32xf32>
      %327 = arith.addf %321, %326 : vector<64x32xf32>
      %c25_284 = arith.constant 25 : index
      %c0_285 = arith.constant 0 : index
      %328 = vector.load %arg18[%c25_284, %c0_285] : memref<89x3xf32, #tpu.memory_space<vmem>>, vector<64x3xf32>
      %329 = vector.broadcast %24 : vector<64x1xf32> to vector<64x3xf32>
      %330 = arith.mulf %328, %329 : vector<64x3xf32>
      %331 = arith.truncf %330 : vector<64x3xf32> to vector<64x3xbf16>
      %c2_286 = arith.constant 2 : index
      %c2_287 = arith.constant 2 : index
      %c0_288 = arith.constant 0 : index
      %c0_289 = arith.constant 0 : index
      %332 = vector.load %arg7[%c2_286, %c2_287, %c0_288, %c0_289] : memref<3x3x3x32xbf16, #tpu.memory_space<vmem>>, vector<1x1x3x32xbf16>
      %333 = vector.shape_cast %332 : vector<1x1x3x32xbf16> to vector<3x32xbf16>
      %cst_290 = arith.constant dense<0.000000e+00> : vector<64x32xf32>
      %334 = tpu.matmul %331, %333, %cst_290 {dimension_numbers = #tpu.dot_dimension_numbers<[1], [0], [0], [1], [0, 0, 1, 1], [], []>} : vector<64x3xbf16>, vector<3x32xbf16>, vector<64x32xf32> -> vector<64x32xf32>
      %335 = arith.addf %327, %334 : vector<64x32xf32>
      %336 = arith.addf %268, %335 : vector<64x32xf32>
      %c0_291 = arith.constant 0 : index
      %c0_292 = arith.constant 0 : index
      %337 = vector.load %arg9[%c0_291, %c0_292] : memref<1x32xf32, #tpu.memory_space<vmem>>, vector<1x32xf32>
      %338 = vector.shape_cast %337 : vector<1x32xf32> to vector<32xf32>
      %339 = vector.shape_cast %338 : vector<32xf32> to vector<1x32xf32>
      %340 = vector.broadcast %339 : vector<1x32xf32> to vector<64x32xf32>
      %341 = arith.addf %336, %340 : vector<64x32xf32>
      %c0_293 = arith.constant 0 : index
      %c0_294 = arith.constant 0 : index
      %342 = vector.load %arg15[%c0_293, %c0_294] : memref<64x32xf32, #tpu.memory_space<vmem>>, vector<64x32xf32>
      tpu.vector_store %arg15[%c0_293, %c0_294], %341 {strides = array<i32>} : memref<64x32xf32, #tpu.memory_space<vmem>>, vector<64x32xf32>,
      %c0_295 = arith.constant 0 : index
      %c0_296 = arith.constant 0 : index
      %c0_297 = arith.constant 0 : index
      %c0_298 = arith.constant 0 : index
      %343 = vector.load %arg4[%c0_295, %c0_296, %c0_297, %c0_298] : memref<1x8x8x3xf32, #tpu.memory_space<vmem>>, vector<1x8x8x3xf32>
      %344 = vector.shape_cast %343 : vector<1x8x8x3xf32> to vector<8x8x3xf32>
      %345 = vector.shape_cast %344 : vector<8x8x3xf32> to vector<64x3xf32>
      %346 = arith.truncf %345 : vector<64x3xf32> to vector<64x3xbf16>
      %c0_299 = arith.constant 0 : index
      %c0_300 = arith.constant 0 : index
      %347 = vector.load %arg12[%c0_299, %c0_300] : memref<3x32xbf16, #tpu.memory_space<vmem>>, vector<3x32xbf16>
      %cst_301 = arith.constant dense<0.000000e+00> : vector<64x32xf32>
      %348 = tpu.matmul %346, %347, %cst_301 {dimension_numbers = #tpu.dot_dimension_numbers<[1], [0], [0], [1], [0, 0, 1, 1], [], []>} : vector<64x3xbf16>, vector<3x32xbf16>, vector<64x32xf32> -> vector<64x32xf32>
      %c0_302 = arith.constant 0 : index
      %c0_303 = arith.constant 0 : index
      %349 = vector.load %arg13[%c0_302, %c0_303] : memref<1x32xf32, #tpu.memory_space<vmem>>, vector<1x32xf32>
      %350 = vector.shape_cast %349 : vector<1x32xf32> to vector<32xf32>
      %351 = vector.shape_cast %350 : vector<32xf32> to vector<1x32xf32>
      %352 = vector.broadcast %351 : vector<1x32xf32> to vector<64x32xf32>
      %353 = arith.addf %348, %352 : vector<64x32xf32>
      %c0_304 = arith.constant 0 : index
      %c0_305 = arith.constant 0 : index
      %354 = vector.load %arg16[%c0_304, %c0_305] : memref<64x32xf32, #tpu.memory_space<vmem>>, vector<64x32xf32>
      tpu.vector_store %arg16[%c0_304, %c0_305], %353 {strides = array<i32>} : memref<64x32xf32, #tpu.memory_space<vmem>>, vector<64x32xf32>,
    } else {
    }
    %c16 = arith.constant 16 : index
    %c0_10 = arith.constant 0 : index
    %31 = vector.load %arg17[%c16, %c0_10] : memref<89x32xf32, #tpu.memory_space<vmem>>, vector<64x32xf32>
    tpu.vector_store %arg17[%c16, %c0_10], %27 {strides = array<i32>} : memref<89x32xf32, #tpu.memory_space<vmem>>, vector<64x32xf32>,
    %c0_11 = arith.constant 0 : index
    %c0_12 = arith.constant 0 : index
    %32 = vector.load %arg15[%c0_11, %c0_12] : memref<64x32xf32, #tpu.memory_space<vmem>>, vector<64x32xf32>
    %cst = arith.constant 0.000000e+00 : f32
    %33 = vector.broadcast %cst : f32 to vector<64x32xf32>
    %c7 = arith.constant 7 : index
    %c0_13 = arith.constant 0 : index
    %34 = vector.load %arg17[%c7, %c0_13] : memref<89x32xf32, #tpu.memory_space<vmem>>, vector<64x32xf32>
    %35 = vector.broadcast %20 : vector<64x1xf32> to vector<64x32xf32>
    %36 = arith.mulf %34, %35 : vector<64x32xf32>
    %37 = arith.truncf %36 : vector<64x32xf32> to vector<64x32xbf16>
    %c0_14 = arith.constant 0 : index
    %c0_15 = arith.constant 0 : index
    %c0_16 = arith.constant 0 : index
    %c0_17 = arith.constant 0 : index
    %38 = vector.load %arg5[%c0_14, %c0_15, %c0_16, %c0_17] : memref<3x3x32x32xbf16, #tpu.memory_space<vmem>>, vector<1x1x32x32xbf16>
    %39 = vector.shape_cast %38 : vector<1x1x32x32xbf16> to vector<32x32xbf16>
    %cst_18 = arith.constant dense<0.000000e+00> : vector<64x32xf32>
    %40 = tpu.matmul %37, %39, %cst_18 {dimension_numbers = #tpu.dot_dimension_numbers<[1], [0], [0], [1], [0, 0, 1, 1], [], []>} : vector<64x32xbf16>, vector<32x32xbf16>, vector<64x32xf32> -> vector<64x32xf32>
    %41 = arith.addf %33, %40 : vector<64x32xf32>
    %c8 = arith.constant 8 : index
    %c0_19 = arith.constant 0 : index
    %42 = vector.load %arg17[%c8, %c0_19] : memref<89x32xf32, #tpu.memory_space<vmem>>, vector<64x32xf32>
    %43 = arith.truncf %42 : vector<64x32xf32> to vector<64x32xbf16>
    %c0_20 = arith.constant 0 : index
    %c1 = arith.constant 1 : index
    %c0_21 = arith.constant 0 : index
    %c0_22 = arith.constant 0 : index
    %44 = vector.load %arg5[%c0_20, %c1, %c0_21, %c0_22] : memref<3x3x32x32xbf16, #tpu.memory_space<vmem>>, vector<1x1x32x32xbf16>
    %45 = vector.shape_cast %44 : vector<1x1x32x32xbf16> to vector<32x32xbf16>
    %cst_23 = arith.constant dense<0.000000e+00> : vector<64x32xf32>
    %46 = tpu.matmul %43, %45, %cst_23 {dimension_numbers = #tpu.dot_dimension_numbers<[1], [0], [0], [1], [0, 0, 1, 1], [], []>} : vector<64x32xbf16>, vector<32x32xbf16>, vector<64x32xf32> -> vector<64x32xf32>
    %47 = arith.addf %41, %46 : vector<64x32xf32>
    %c9 = arith.constant 9 : index
    %c0_24 = arith.constant 0 : index
    %48 = vector.load %arg17[%c9, %c0_24] : memref<89x32xf32, #tpu.memory_space<vmem>>, vector<64x32xf32>
    %49 = vector.broadcast %24 : vector<64x1xf32> to vector<64x32xf32>
    %50 = arith.mulf %48, %49 : vector<64x32xf32>
    %51 = arith.truncf %50 : vector<64x32xf32> to vector<64x32xbf16>
    %c0_25 = arith.constant 0 : index
    %c2 = arith.constant 2 : index
    %c0_26 = arith.constant 0 : index
    %c0_27 = arith.constant 0 : index
    %52 = vector.load %arg5[%c0_25, %c2, %c0_26, %c0_27] : memref<3x3x32x32xbf16, #tpu.memory_space<vmem>>, vector<1x1x32x32xbf16>
    %53 = vector.shape_cast %52 : vector<1x1x32x32xbf16> to vector<32x32xbf16>
    %cst_28 = arith.constant dense<0.000000e+00> : vector<64x32xf32>
    %54 = tpu.matmul %51, %53, %cst_28 {dimension_numbers = #tpu.dot_dimension_numbers<[1], [0], [0], [1], [0, 0, 1, 1], [], []>} : vector<64x32xbf16>, vector<32x32xbf16>, vector<64x32xf32> -> vector<64x32xf32>
    %55 = arith.addf %47, %54 : vector<64x32xf32>
    %c15 = arith.constant 15 : index
    %c0_29 = arith.constant 0 : index
    %56 = vector.load %arg17[%c15, %c0_29] : memref<89x32xf32, #tpu.memory_space<vmem>>, vector<64x32xf32>
    %57 = vector.broadcast %20 : vector<64x1xf32> to vector<64x32xf32>
    %58 = arith.mulf %56, %57 : vector<64x32xf32>
    %59 = arith.truncf %58 : vector<64x32xf32> to vector<64x32xbf16>
    %c1_30 = arith.constant 1 : index
    %c0_31 = arith.constant 0 : index
    %c0_32 = arith.constant 0 : index
    %c0_33 = arith.constant 0 : index
    %60 = vector.load %arg5[%c1_30, %c0_31, %c0_32, %c0_33] : memref<3x3x32x32xbf16, #tpu.memory_space<vmem>>, vector<1x1x32x32xbf16>
    %61 = vector.shape_cast %60 : vector<1x1x32x32xbf16> to vector<32x32xbf16>
    %cst_34 = arith.constant dense<0.000000e+00> : vector<64x32xf32>
    %62 = tpu.matmul %59, %61, %cst_34 {dimension_numbers = #tpu.dot_dimension_numbers<[1], [0], [0], [1], [0, 0, 1, 1], [], []>} : vector<64x32xbf16>, vector<32x32xbf16>, vector<64x32xf32> -> vector<64x32xf32>
    %63 = arith.addf %55, %62 : vector<64x32xf32>
    %c16_35 = arith.constant 16 : index
    %c0_36 = arith.constant 0 : index
    %64 = vector.load %arg17[%c16_35, %c0_36] : memref<89x32xf32, #tpu.memory_space<vmem>>, vector<64x32xf32>
    %65 = arith.truncf %64 : vector<64x32xf32> to vector<64x32xbf16>
    %c1_37 = arith.constant 1 : index
    %c1_38 = arith.constant 1 : index
    %c0_39 = arith.constant 0 : index
    %c0_40 = arith.constant 0 : index
    %66 = vector.load %arg5[%c1_37, %c1_38, %c0_39, %c0_40] : memref<3x3x32x32xbf16, #tpu.memory_space<vmem>>, vector<1x1x32x32xbf16>
    %67 = vector.shape_cast %66 : vector<1x1x32x32xbf16> to vector<32x32xbf16>
    %cst_41 = arith.constant dense<0.000000e+00> : vector<64x32xf32>
    %68 = tpu.matmul %65, %67, %cst_41 {dimension_numbers = #tpu.dot_dimension_numbers<[1], [0], [0], [1], [0, 0, 1, 1], [], []>} : vector<64x32xbf16>, vector<32x32xbf16>, vector<64x32xf32> -> vector<64x32xf32>
    %69 = arith.addf %63, %68 : vector<64x32xf32>
    %c17 = arith.constant 17 : index
    %c0_42 = arith.constant 0 : index
    %70 = vector.load %arg17[%c17, %c0_42] : memref<89x32xf32, #tpu.memory_space<vmem>>, vector<64x32xf32>
    %71 = vector.broadcast %24 : vector<64x1xf32> to vector<64x32xf32>
    %72 = arith.mulf %70, %71 : vector<64x32xf32>
    %73 = arith.truncf %72 : vector<64x32xf32> to vector<64x32xbf16>
    %c1_43 = arith.constant 1 : index
    %c2_44 = arith.constant 2 : index
    %c0_45 = arith.constant 0 : index
    %c0_46 = arith.constant 0 : index
    %74 = vector.load %arg5[%c1_43, %c2_44, %c0_45, %c0_46] : memref<3x3x32x32xbf16, #tpu.memory_space<vmem>>, vector<1x1x32x32xbf16>
    %75 = vector.shape_cast %74 : vector<1x1x32x32xbf16> to vector<32x32xbf16>
    %cst_47 = arith.constant dense<0.000000e+00> : vector<64x32xf32>
    %76 = tpu.matmul %73, %75, %cst_47 {dimension_numbers = #tpu.dot_dimension_numbers<[1], [0], [0], [1], [0, 0, 1, 1], [], []>} : vector<64x32xbf16>, vector<32x32xbf16>, vector<64x32xf32> -> vector<64x32xf32>
    %77 = arith.addf %69, %76 : vector<64x32xf32>
    %c23 = arith.constant 23 : index
    %c0_48 = arith.constant 0 : index
    %78 = vector.load %arg17[%c23, %c0_48] : memref<89x32xf32, #tpu.memory_space<vmem>>, vector<64x32xf32>
    %79 = vector.broadcast %20 : vector<64x1xf32> to vector<64x32xf32>
    %80 = arith.mulf %78, %79 : vector<64x32xf32>
    %81 = arith.truncf %80 : vector<64x32xf32> to vector<64x32xbf16>
    %c2_49 = arith.constant 2 : index
    %c0_50 = arith.constant 0 : index
    %c0_51 = arith.constant 0 : index
    %c0_52 = arith.constant 0 : index
    %82 = vector.load %arg5[%c2_49, %c0_50, %c0_51, %c0_52] : memref<3x3x32x32xbf16, #tpu.memory_space<vmem>>, vector<1x1x32x32xbf16>
    %83 = vector.shape_cast %82 : vector<1x1x32x32xbf16> to vector<32x32xbf16>
    %cst_53 = arith.constant dense<0.000000e+00> : vector<64x32xf32>
    %84 = tpu.matmul %81, %83, %cst_53 {dimension_numbers = #tpu.dot_dimension_numbers<[1], [0], [0], [1], [0, 0, 1, 1], [], []>} : vector<64x32xbf16>, vector<32x32xbf16>, vector<64x32xf32> -> vector<64x32xf32>
    %85 = arith.addf %77, %84 : vector<64x32xf32>
    %c24 = arith.constant 24 : index
    %c0_54 = arith.constant 0 : index
    %86 = vector.load %arg17[%c24, %c0_54] : memref<89x32xf32, #tpu.memory_space<vmem>>, vector<64x32xf32>
    %87 = arith.truncf %86 : vector<64x32xf32> to vector<64x32xbf16>
    %c2_55 = arith.constant 2 : index
    %c1_56 = arith.constant 1 : index
    %c0_57 = arith.constant 0 : index
    %c0_58 = arith.constant 0 : index
    %88 = vector.load %arg5[%c2_55, %c1_56, %c0_57, %c0_58] : memref<3x3x32x32xbf16, #tpu.memory_space<vmem>>, vector<1x1x32x32xbf16>
    %89 = vector.shape_cast %88 : vector<1x1x32x32xbf16> to vector<32x32xbf16>
    %cst_59 = arith.constant dense<0.000000e+00> : vector<64x32xf32>
    %90 = tpu.matmul %87, %89, %cst_59 {dimension_numbers = #tpu.dot_dimension_numbers<[1], [0], [0], [1], [0, 0, 1, 1], [], []>} : vector<64x32xbf16>, vector<32x32xbf16>, vector<64x32xf32> -> vector<64x32xf32>
    %91 = arith.addf %85, %90 : vector<64x32xf32>
    %c25 = arith.constant 25 : index
    %c0_60 = arith.constant 0 : index
    %92 = vector.load %arg17[%c25, %c0_60] : memref<89x32xf32, #tpu.memory_space<vmem>>, vector<64x32xf32>
    %93 = vector.broadcast %24 : vector<64x1xf32> to vector<64x32xf32>
    %94 = arith.mulf %92, %93 : vector<64x32xf32>
    %95 = arith.truncf %94 : vector<64x32xf32> to vector<64x32xbf16>
    %c2_61 = arith.constant 2 : index
    %c2_62 = arith.constant 2 : index
    %c0_63 = arith.constant 0 : index
    %c0_64 = arith.constant 0 : index
    %96 = vector.load %arg5[%c2_61, %c2_62, %c0_63, %c0_64] : memref<3x3x32x32xbf16, #tpu.memory_space<vmem>>, vector<1x1x32x32xbf16>
    %97 = vector.shape_cast %96 : vector<1x1x32x32xbf16> to vector<32x32xbf16>
    %cst_65 = arith.constant dense<0.000000e+00> : vector<64x32xf32>
    %98 = tpu.matmul %95, %97, %cst_65 {dimension_numbers = #tpu.dot_dimension_numbers<[1], [0], [0], [1], [0, 0, 1, 1], [], []>} : vector<64x32xbf16>, vector<32x32xbf16>, vector<64x32xf32> -> vector<64x32xf32>
    %99 = arith.addf %91, %98 : vector<64x32xf32>
    %100 = arith.addf %32, %99 : vector<64x32xf32>
    %cst_66 = arith.constant 0.000000e+00 : f32
    %101 = vector.broadcast %cst_66 : f32 to vector<64x32xf32>
    %102 = arith.cmpf oge, %100, %101 : vector<64x32xf32>
    %cst_67 = arith.constant 1.000000e-01 : f32
    %103 = vector.broadcast %cst_67 : f32 to vector<64x32xf32>
    %104 = arith.mulf %103, %100 : vector<64x32xf32>
    %105 = arith.select %102, %100, %104 : vector<64x32xi1>, vector<64x32xf32>
    %c16_68 = arith.constant 16 : index
    %c0_69 = arith.constant 0 : index
    %106 = vector.load %arg17[%c16_68, %c0_69] : memref<89x32xf32, #tpu.memory_space<vmem>>, vector<64x32xf32>
    tpu.vector_store %arg17[%c16_68, %c0_69], %105 {strides = array<i32>} : memref<89x32xf32, #tpu.memory_space<vmem>>, vector<64x32xf32>,
    %cst_70 = arith.constant 0.000000e+00 : f32
    %107 = vector.broadcast %cst_70 : f32 to vector<64x32xf32>
    %c7_71 = arith.constant 7 : index
    %c0_72 = arith.constant 0 : index
    %108 = vector.load %arg17[%c7_71, %c0_72] : memref<89x32xf32, #tpu.memory_space<vmem>>, vector<64x32xf32>
    %109 = vector.broadcast %20 : vector<64x1xf32> to vector<64x32xf32>
    %110 = arith.mulf %108, %109 : vector<64x32xf32>
    %111 = arith.truncf %110 : vector<64x32xf32> to vector<64x32xbf16>
    %c0_73 = arith.constant 0 : index
    %c0_74 = arith.constant 0 : index
    %c0_75 = arith.constant 0 : index
    %c0_76 = arith.constant 0 : index
    %112 = vector.load %arg8[%c0_73, %c0_74, %c0_75, %c0_76] : memref<3x3x32x32xbf16, #tpu.memory_space<vmem>>, vector<1x1x32x32xbf16>
    %113 = vector.shape_cast %112 : vector<1x1x32x32xbf16> to vector<32x32xbf16>
    %cst_77 = arith.constant dense<0.000000e+00> : vector<64x32xf32>
    %114 = tpu.matmul %111, %113, %cst_77 {dimension_numbers = #tpu.dot_dimension_numbers<[1], [0], [0], [1], [0, 0, 1, 1], [], []>} : vector<64x32xbf16>, vector<32x32xbf16>, vector<64x32xf32> -> vector<64x32xf32>
    %115 = arith.addf %107, %114 : vector<64x32xf32>
    %c8_78 = arith.constant 8 : index
    %c0_79 = arith.constant 0 : index
    %116 = vector.load %arg17[%c8_78, %c0_79] : memref<89x32xf32, #tpu.memory_space<vmem>>, vector<64x32xf32>
    %117 = arith.truncf %116 : vector<64x32xf32> to vector<64x32xbf16>
    %c0_80 = arith.constant 0 : index
    %c1_81 = arith.constant 1 : index
    %c0_82 = arith.constant 0 : index
    %c0_83 = arith.constant 0 : index
    %118 = vector.load %arg8[%c0_80, %c1_81, %c0_82, %c0_83] : memref<3x3x32x32xbf16, #tpu.memory_space<vmem>>, vector<1x1x32x32xbf16>
    %119 = vector.shape_cast %118 : vector<1x1x32x32xbf16> to vector<32x32xbf16>
    %cst_84 = arith.constant dense<0.000000e+00> : vector<64x32xf32>
    %120 = tpu.matmul %117, %119, %cst_84 {dimension_numbers = #tpu.dot_dimension_numbers<[1], [0], [0], [1], [0, 0, 1, 1], [], []>} : vector<64x32xbf16>, vector<32x32xbf16>, vector<64x32xf32> -> vector<64x32xf32>
    %121 = arith.addf %115, %120 : vector<64x32xf32>
    %c9_85 = arith.constant 9 : index
    %c0_86 = arith.constant 0 : index
    %122 = vector.load %arg17[%c9_85, %c0_86] : memref<89x32xf32, #tpu.memory_space<vmem>>, vector<64x32xf32>
    %123 = vector.broadcast %24 : vector<64x1xf32> to vector<64x32xf32>
    %124 = arith.mulf %122, %123 : vector<64x32xf32>
    %125 = arith.truncf %124 : vector<64x32xf32> to vector<64x32xbf16>
    %c0_87 = arith.constant 0 : index
    %c2_88 = arith.constant 2 : index
    %c0_89 = arith.constant 0 : index
    %c0_90 = arith.constant 0 : index
    %126 = vector.load %arg8[%c0_87, %c2_88, %c0_89, %c0_90] : memref<3x3x32x32xbf16, #tpu.memory_space<vmem>>, vector<1x1x32x32xbf16>
    %127 = vector.shape_cast %126 : vector<1x1x32x32xbf16> to vector<32x32xbf16>
    %cst_91 = arith.constant dense<0.000000e+00> : vector<64x32xf32>
    %128 = tpu.matmul %125, %127, %cst_91 {dimension_numbers = #tpu.dot_dimension_numbers<[1], [0], [0], [1], [0, 0, 1, 1], [], []>} : vector<64x32xbf16>, vector<32x32xbf16>, vector<64x32xf32> -> vector<64x32xf32>
    %129 = arith.addf %121, %128 : vector<64x32xf32>
    %c15_92 = arith.constant 15 : index
    %c0_93 = arith.constant 0 : index
    %130 = vector.load %arg17[%c15_92, %c0_93] : memref<89x32xf32, #tpu.memory_space<vmem>>, vector<64x32xf32>
    %131 = vector.broadcast %20 : vector<64x1xf32> to vector<64x32xf32>
    %132 = arith.mulf %130, %131 : vector<64x32xf32>
    %133 = arith.truncf %132 : vector<64x32xf32> to vector<64x32xbf16>
    %c1_94 = arith.constant 1 : index
    %c0_95 = arith.constant 0 : index
    %c0_96 = arith.constant 0 : index
    %c0_97 = arith.constant 0 : index
    %134 = vector.load %arg8[%c1_94, %c0_95, %c0_96, %c0_97] : memref<3x3x32x32xbf16, #tpu.memory_space<vmem>>, vector<1x1x32x32xbf16>
    %135 = vector.shape_cast %134 : vector<1x1x32x32xbf16> to vector<32x32xbf16>
    %cst_98 = arith.constant dense<0.000000e+00> : vector<64x32xf32>
    %136 = tpu.matmul %133, %135, %cst_98 {dimension_numbers = #tpu.dot_dimension_numbers<[1], [0], [0], [1], [0, 0, 1, 1], [], []>} : vector<64x32xbf16>, vector<32x32xbf16>, vector<64x32xf32> -> vector<64x32xf32>
    %137 = arith.addf %129, %136 : vector<64x32xf32>
    %c16_99 = arith.constant 16 : index
    %c0_100 = arith.constant 0 : index
    %138 = vector.load %arg17[%c16_99, %c0_100] : memref<89x32xf32, #tpu.memory_space<vmem>>, vector<64x32xf32>
    %139 = arith.truncf %138 : vector<64x32xf32> to vector<64x32xbf16>
    %c1_101 = arith.constant 1 : index
    %c1_102 = arith.constant 1 : index
    %c0_103 = arith.constant 0 : index
    %c0_104 = arith.constant 0 : index
    %140 = vector.load %arg8[%c1_101, %c1_102, %c0_103, %c0_104] : memref<3x3x32x32xbf16, #tpu.memory_space<vmem>>, vector<1x1x32x32xbf16>
    %141 = vector.shape_cast %140 : vector<1x1x32x32xbf16> to vector<32x32xbf16>
    %cst_105 = arith.constant dense<0.000000e+00> : vector<64x32xf32>
    %142 = tpu.matmul %139, %141, %cst_105 {dimension_numbers = #tpu.dot_dimension_numbers<[1], [0], [0], [1], [0, 0, 1, 1], [], []>} : vector<64x32xbf16>, vector<32x32xbf16>, vector<64x32xf32> -> vector<64x32xf32>
    %143 = arith.addf %137, %142 : vector<64x32xf32>
    %c17_106 = arith.constant 17 : index
    %c0_107 = arith.constant 0 : index
    %144 = vector.load %arg17[%c17_106, %c0_107] : memref<89x32xf32, #tpu.memory_space<vmem>>, vector<64x32xf32>
    %145 = vector.broadcast %24 : vector<64x1xf32> to vector<64x32xf32>
    %146 = arith.mulf %144, %145 : vector<64x32xf32>
    %147 = arith.truncf %146 : vector<64x32xf32> to vector<64x32xbf16>
    %c1_108 = arith.constant 1 : index
    %c2_109 = arith.constant 2 : index
    %c0_110 = arith.constant 0 : index
    %c0_111 = arith.constant 0 : index
    %148 = vector.load %arg8[%c1_108, %c2_109, %c0_110, %c0_111] : memref<3x3x32x32xbf16, #tpu.memory_space<vmem>>, vector<1x1x32x32xbf16>
    %149 = vector.shape_cast %148 : vector<1x1x32x32xbf16> to vector<32x32xbf16>
    %cst_112 = arith.constant dense<0.000000e+00> : vector<64x32xf32>
    %150 = tpu.matmul %147, %149, %cst_112 {dimension_numbers = #tpu.dot_dimension_numbers<[1], [0], [0], [1], [0, 0, 1, 1], [], []>} : vector<64x32xbf16>, vector<32x32xbf16>, vector<64x32xf32> -> vector<64x32xf32>
    %151 = arith.addf %143, %150 : vector<64x32xf32>
    %c23_113 = arith.constant 23 : index
    %c0_114 = arith.constant 0 : index
    %152 = vector.load %arg17[%c23_113, %c0_114] : memref<89x32xf32, #tpu.memory_space<vmem>>, vector<64x32xf32>
    %153 = vector.broadcast %20 : vector<64x1xf32> to vector<64x32xf32>
    %154 = arith.mulf %152, %153 : vector<64x32xf32>
    %155 = arith.truncf %154 : vector<64x32xf32> to vector<64x32xbf16>
    %c2_115 = arith.constant 2 : index
    %c0_116 = arith.constant 0 : index
    %c0_117 = arith.constant 0 : index
    %c0_118 = arith.constant 0 : index
    %156 = vector.load %arg8[%c2_115, %c0_116, %c0_117, %c0_118] : memref<3x3x32x32xbf16, #tpu.memory_space<vmem>>, vector<1x1x32x32xbf16>
    %157 = vector.shape_cast %156 : vector<1x1x32x32xbf16> to vector<32x32xbf16>
    %cst_119 = arith.constant dense<0.000000e+00> : vector<64x32xf32>
    %158 = tpu.matmul %155, %157, %cst_119 {dimension_numbers = #tpu.dot_dimension_numbers<[1], [0], [0], [1], [0, 0, 1, 1], [], []>} : vector<64x32xbf16>, vector<32x32xbf16>, vector<64x32xf32> -> vector<64x32xf32>
    %159 = arith.addf %151, %158 : vector<64x32xf32>
    %c24_120 = arith.constant 24 : index
    %c0_121 = arith.constant 0 : index
    %160 = vector.load %arg17[%c24_120, %c0_121] : memref<89x32xf32, #tpu.memory_space<vmem>>, vector<64x32xf32>
    %161 = arith.truncf %160 : vector<64x32xf32> to vector<64x32xbf16>
    %c2_122 = arith.constant 2 : index
    %c1_123 = arith.constant 1 : index
    %c0_124 = arith.constant 0 : index
    %c0_125 = arith.constant 0 : index
    %162 = vector.load %arg8[%c2_122, %c1_123, %c0_124, %c0_125] : memref<3x3x32x32xbf16, #tpu.memory_space<vmem>>, vector<1x1x32x32xbf16>
    %163 = vector.shape_cast %162 : vector<1x1x32x32xbf16> to vector<32x32xbf16>
    %cst_126 = arith.constant dense<0.000000e+00> : vector<64x32xf32>
    %164 = tpu.matmul %161, %163, %cst_126 {dimension_numbers = #tpu.dot_dimension_numbers<[1], [0], [0], [1], [0, 0, 1, 1], [], []>} : vector<64x32xbf16>, vector<32x32xbf16>, vector<64x32xf32> -> vector<64x32xf32>
    %165 = arith.addf %159, %164 : vector<64x32xf32>
    %c25_127 = arith.constant 25 : index
    %c0_128 = arith.constant 0 : index
    %166 = vector.load %arg17[%c25_127, %c0_128] : memref<89x32xf32, #tpu.memory_space<vmem>>, vector<64x32xf32>
    %167 = vector.broadcast %24 : vector<64x1xf32> to vector<64x32xf32>
    %168 = arith.mulf %166, %167 : vector<64x32xf32>
    %169 = arith.truncf %168 : vector<64x32xf32> to vector<64x32xbf16>
    %c2_129 = arith.constant 2 : index
    %c2_130 = arith.constant 2 : index
    %c0_131 = arith.constant 0 : index
    %c0_132 = arith.constant 0 : index
    %170 = vector.load %arg8[%c2_129, %c2_130, %c0_131, %c0_132] : memref<3x3x32x32xbf16, #tpu.memory_space<vmem>>, vector<1x1x32x32xbf16>
    %171 = vector.shape_cast %170 : vector<1x1x32x32xbf16> to vector<32x32xbf16>
    %cst_133 = arith.constant dense<0.000000e+00> : vector<64x32xf32>
    %172 = tpu.matmul %169, %171, %cst_133 {dimension_numbers = #tpu.dot_dimension_numbers<[1], [0], [0], [1], [0, 0, 1, 1], [], []>} : vector<64x32xbf16>, vector<32x32xbf16>, vector<64x32xf32> -> vector<64x32xf32>
    %173 = arith.addf %165, %172 : vector<64x32xf32>
    %c0_134 = arith.constant 0 : index
    %c0_135 = arith.constant 0 : index
    %174 = vector.load %arg10[%c0_134, %c0_135] : memref<1x32xf32, #tpu.memory_space<vmem>>, vector<1x32xf32>
    %175 = vector.shape_cast %174 : vector<1x32xf32> to vector<32xf32>
    %176 = vector.shape_cast %175 : vector<32xf32> to vector<1x32xf32>
    %177 = vector.broadcast %176 : vector<1x32xf32> to vector<64x32xf32>
    %178 = arith.addf %173, %177 : vector<64x32xf32>
    %179 = arith.mulf %27, %178 : vector<64x32xf32>
    %c0_136 = arith.constant 0 : index
    %c0_137 = arith.constant 0 : index
    %180 = vector.load %arg16[%c0_136, %c0_137] : memref<64x32xf32, #tpu.memory_space<vmem>>, vector<64x32xf32>
    %181 = arith.truncf %179 : vector<64x32xf32> to vector<64x32xbf16>
    %c0_138 = arith.constant 0 : index
    %c0_139 = arith.constant 0 : index
    %c0_140 = arith.constant 0 : index
    %182 = vector.load %arg11[%c0_138, %c0_139, %c0_140] : memref<1x32x32xbf16, #tpu.memory_space<vmem>>, vector<1x32x32xbf16>
    %183 = vector.shape_cast %182 : vector<1x32x32xbf16> to vector<32x32xbf16>
    %cst_141 = arith.constant dense<0.000000e+00> : vector<64x32xf32>
    %184 = tpu.matmul %181, %183, %cst_141 {dimension_numbers = #tpu.dot_dimension_numbers<[1], [0], [0], [1], [0, 0, 1, 1], [], []>} : vector<64x32xbf16>, vector<32x32xbf16>, vector<64x32xf32> -> vector<64x32xf32>
    %185 = arith.addf %180, %184 : vector<64x32xf32>
    %c0_142 = arith.constant 0 : index
    %c0_143 = arith.constant 0 : index
    %186 = vector.load %arg16[%c0_142, %c0_143] : memref<64x32xf32, #tpu.memory_space<vmem>>, vector<64x32xf32>
    tpu.vector_store %arg16[%c0_142, %c0_143], %185 {strides = array<i32>} : memref<64x32xf32, #tpu.memory_space<vmem>>, vector<64x32xf32>,
    %c4_i32 = arith.constant 4 : i32
    %187 = arith.cmpi eq, %arg1, %c4_i32 : i32
    %188 = arith.extui %187 : i1 to i32
    %c0_i32_144 = arith.constant 0 : i32
    %189 = arith.cmpi ne, %188, %c0_i32_144 : i32
    scf.if %189 {
      %c0_145 = arith.constant 0 : index
      %c0_146 = arith.constant 0 : index
      %190 = vector.load %arg16[%c0_145, %c0_146] : memref<64x32xf32, #tpu.memory_space<vmem>>, vector<64x32xf32>
      %cst_147 = arith.constant 0.000000e+00 : f32
      %191 = vector.broadcast %cst_147 : f32 to vector<64x32xf32>
      %192 = arith.cmpf oge, %190, %191 : vector<64x32xf32>
      %cst_148 = arith.constant 1.000000e-01 : f32
      %193 = vector.broadcast %cst_148 : f32 to vector<64x32xf32>
      %194 = arith.mulf %193, %190 : vector<64x32xf32>
      %195 = arith.select %192, %190, %194 : vector<64x32xi1>, vector<64x32xf32>
      %c0_149 = arith.constant 0 : index
      %c0_150 = arith.constant 0 : index
      %c0_151 = arith.constant 0 : index
      %196 = vector.load %arg14[%c0_149, %c0_150, %c0_151] : memref<1x64x32xf32, #tpu.memory_space<vmem>>, vector<1x64x32xf32>
      %197 = vector.shape_cast %196 : vector<1x64x32xf32> to vector<64x32xf32>
      %198 = vector.shape_cast %195 : vector<64x32xf32> to vector<1x64x32xf32>
      tpu.vector_store %arg14[%c0_149, %c0_150, %c0_151], %198 {strides = array<i32>} : memref<1x64x32xf32, #tpu.memory_space<vmem>>, vector<1x64x32xf32>,
    } else {
    }
    return
  }
  func.func @transform_0(%arg0: i32, %arg1: i32) -> (i32, i32, i32, i32, i32) {
    %c0_i32 = arith.constant 0 : i32
    %c0_i32_0 = arith.constant 0 : i32
    %c0_i32_1 = arith.constant 0 : i32
    %c0_i32_2 = arith.constant 0 : i32
    return %arg0, %arg1, %c0_i32, %c0_i32_0, %c0_i32_1 : i32, i32, i32, i32, i32
  }
  func.func @transform_1(%arg0: i32, %arg1: i32) -> (i32, i32, i32, i32) {
    %c0_i32 = arith.constant 0 : i32
    %c0_i32_0 = arith.constant 0 : i32
    %c0_i32_1 = arith.constant 0 : i32
    %c0_i32_2 = arith.constant 0 : i32
    return %arg0, %c0_i32, %c0_i32_0, %c0_i32_1 : i32, i32, i32, i32
  }
  func.func @transform_2(%arg0: i32, %arg1: i32) -> (i32, i32, i32, i32) {
    %c0_i32 = arith.constant 0 : i32
    %c0_i32_0 = arith.constant 0 : i32
    %c0_i32_1 = arith.constant 0 : i32
    %c0_i32_2 = arith.constant 0 : i32
    return %arg0, %c0_i32, %c0_i32_0, %c0_i32_1 : i32, i32, i32, i32
  }
  func.func @transform_3(%arg0: i32, %arg1: i32) -> (i32, i32, i32, i32) {
    %c0_i32 = arith.constant 0 : i32
    %c0_i32_0 = arith.constant 0 : i32
    %c0_i32_1 = arith.constant 0 : i32
    %c0_i32_2 = arith.constant 0 : i32
    %c0_i32_3 = arith.constant 0 : i32
    return %c0_i32, %c0_i32_0, %c0_i32_1, %c0_i32_2 : i32, i32, i32, i32
  }
  func.func @transform_4(%arg0: i32, %arg1: i32) -> (i32, i32, i32, i32) {
    %c0_i32 = arith.constant 0 : i32
    %c0_i32_0 = arith.constant 0 : i32
    %c0_i32_1 = arith.constant 0 : i32
    %c0_i32_2 = arith.constant 0 : i32
    %c0_i32_3 = arith.constant 0 : i32
    return %c0_i32, %c0_i32_0, %c0_i32_1, %c0_i32_2 : i32, i32, i32, i32
  }
  func.func @transform_5(%arg0: i32, %arg1: i32) -> (i32, i32, i32, i32) {
    %c0_i32 = arith.constant 0 : i32
    %c0_i32_0 = arith.constant 0 : i32
    %c0_i32_1 = arith.constant 0 : i32
    %c0_i32_2 = arith.constant 0 : i32
    %c0_i32_3 = arith.constant 0 : i32
    return %c0_i32, %c0_i32_0, %c0_i32_1, %c0_i32_2 : i32, i32, i32, i32
  }
  func.func @transform_6(%arg0: i32, %arg1: i32) -> (i32, i32, i32, i32) {
    %c0_i32 = arith.constant 0 : i32
    %c0_i32_0 = arith.constant 0 : i32
    %c0_i32_1 = arith.constant 0 : i32
    %c0_i32_2 = arith.constant 0 : i32
    %c0_i32_3 = arith.constant 0 : i32
    return %c0_i32, %c0_i32_0, %c0_i32_1, %c0_i32_2 : i32, i32, i32, i32
  }
  func.func @transform_7(%arg0: i32, %arg1: i32) -> (i32, i32) {
    %c0_i32 = arith.constant 0 : i32
    %c0_i32_0 = arith.constant 0 : i32
    %c0_i32_1 = arith.constant 0 : i32
    return %c0_i32, %c0_i32_0 : i32, i32
  }
  func.func @transform_8(%arg0: i32, %arg1: i32) -> (i32, i32) {
    %c0_i32 = arith.constant 0 : i32
    %c0_i32_0 = arith.constant 0 : i32
    %c0_i32_1 = arith.constant 0 : i32
    return %c0_i32, %c0_i32_0 : i32, i32
  }
  func.func @transform_9(%arg0: i32, %arg1: i32) -> (i32, i32, i32) {
    %c0_i32 = arith.constant 0 : i32
    %c0_i32_0 = arith.constant 0 : i32
    %c0_i32_1 = arith.constant 0 : i32
    return %arg1, %c0_i32, %c0_i32_0 : i32, i32, i32
  }
  func.func @transform_10(%arg0: i32, %arg1: i32) -> (i32, i32) {
    %c0_i32 = arith.constant 0 : i32
    %c0_i32_0 = arith.constant 0 : i32
    %c0_i32_1 = arith.constant 0 : i32
    return %c0_i32, %c0_i32_0 : i32, i32
  }
  func.func @transform_11(%arg0: i32, %arg1: i32) -> (i32, i32) {
    %c0_i32 = arith.constant 0 : i32
    %c0_i32_0 = arith.constant 0 : i32
    %c0_i32_1 = arith.constant 0 : i32
    return %c0_i32, %c0_i32_0 : i32, i32
  }
  func.func @transform_12(%arg0: i32, %arg1: i32) -> (i32, i32, i32) {
    %c0_i32 = arith.constant 0 : i32
    %c0_i32_0 = arith.constant 0 : i32
    %c0_i32_1 = arith.constant 0 : i32
    return %arg0, %c0_i32, %c0_i32_0 : i32, i32, i32
  }
}

</mosaic_0001>

<llo_original>
// kernel: tpu_custom_call.1
$region0: #{tpu_custom_call.1}
  #allocation0 [shape = 'u32[]', space=smem, size = 0x4, offset = 0x4, fixed_abs, tag = 'smem constant byte address 0x4 - core index']
  #allocation1 [shape = 'u32[144,128]{1,0:T(1,128)}', space=vmem, size = 0x12000, scoped, tag = 'internal scratch']
  #allocation2 [shape = 'f32[64,32]{1,0:T(8,128)}', space=vmem, size = 0x8000, scoped, tag = 'scratch operand']
  #allocation3 [shape = 'f32[64,32]{1,0:T(8,128)}', space=vmem, size = 0x8000, scoped, tag = 'scratch operand']
  #allocation4 [shape = 'f32[89,32]{1,0:T(8,128)}', space=vmem, size = 0xc000, scoped, tag = 'scratch operand']
  #allocation5 [shape = 'f32[89,3]{1,0:T(8,128)}', space=vmem, size = 0xc000, scoped, tag = 'scratch operand']
  %s0 = inlined_call_operand.hbm [shape: f32[2,5,8,8,32], index: 0, kind: input, shape index: {}]
  %s1 = inlined_call_operand.hbm [shape: f32[2,8,8,32], index: 1, kind: input, shape index: {}]
  %s2 = inlined_call_operand.vmem [shape: f32[2,8,8,3], index: 2, kind: input, shape index: {}]
  %s3 = inlined_call_operand.vmem [shape: bf16[3,3,32,32], index: 3, kind: input, shape index: {}]
  %s4 = inlined_call_operand.hbm [shape: bf16[3,3,32,32], index: 4, kind: input, shape index: {}]
  %s5 = inlined_call_operand.vmem [shape: bf16[3,3,3,32], index: 5, kind: input, shape index: {}]
  %s6 = inlined_call_operand.hbm [shape: bf16[3,3,32,32], index: 6, kind: input, shape index: {}]
  %s7 = inlined_call_operand.vmem [shape: f32[1,32], index: 7, kind: input, shape index: {}]
  %s8 = inlined_call_operand.vmem [shape: f32[1,32], index: 8, kind: input, shape index: {}]
  %s9 = inlined_call_operand.hbm [shape: bf16[5,32,32], index: 9, kind: input, shape index: {}]
  %s10 = inlined_call_operand.vmem [shape: bf16[3,32], index: 10, kind: input, shape index: {}]
  %s11 = inlined_call_operand.vmem [shape: f32[1,32], index: 11, kind: input, shape index: {}]
  %s12 = inlined_call_operand.vmem [shape: f32[2,64,32], index: 12, kind: output, shape index: {}]
  %s13 = sld [smem:[#allocation0]]
  $region109: #{tpu_custom_call.1} parent=0
    _
  %s15 = ssub.s32 1, %s13
  %s16 = scalar_select 0, %s15, %s13
  $region1: #{tpu_custom_call.1} parent=0
    #allocation6 [shape = 'u8[65536]{0}', space=vmem, size = 0x10000, scoped, tag = 'input window, operand 0']
    #allocation7 [shape = 's32[2]{0}', space=sflag, size = 0x8, scoped, tag = 'scoped memory for tpu_custom_call.1']
    #allocation8 [shape = 'u8[65536]{0}', space=vmem, size = 0x10000, scoped, tag = 'input window, operand 1']
    #allocation9 [shape = 's32[2]{0}', space=sflag, size = 0x8, scoped, tag = 'scoped memory for tpu_custom_call.1']
    #allocation10 [shape = 'u8[73728]{0}', space=vmem, size = 0x12000, scoped, tag = 'input window, operand 4, single buffered']
    #allocation11 [shape = 'u8[73728]{0}', space=vmem, size = 0x12000, scoped, tag = 'input window, operand 6, single buffered']
    #allocation12 [shape = 's32[1]{0}', space=sflag, size = 0x4, scoped, tag = 'scoped memory for tpu_custom_call.1']
    #allocation13 [shape = 'u8[16384]{0}', space=vmem, size = 0x4000, scoped, tag = 'input window, operand 9']
    %17 = vsyncpa [#allocation7], 0
    %s18 = scalar_lea.sflag [#allocation7], 1
    %19 = vsyncpa %s18, 0
    %20 = vsyncpa [#allocation9], 0
    %s21 = scalar_lea.sflag [#allocation9], 1
    %22 = vsyncpa %s21, 0
    %23 = vsyncpa [#allocation12], 0
    loop: start=0, step=1, limit=12
    $region2: #{tpu_custom_call.1} parent=1 // loop_pre_header
      _
    $region3: #{tpu_custom_call.1} parent=1 // loop_header
      %s25 = sphi 0, %s29
      %p26 = scmp.ge.s32.totalorder %s25, 12
      %s32 = sphi 0, %s44
      %s33 = sphi 0, %s40
      %s34 = sphi 0, %s32
      %s35 = sphi 0, %s33
      %s36 = sphi 0, %s34
      %s37 = sphi 0, %s35
      %s49 = sphi 0, %s51
      %s52 = sphi 0, %s49
      %s53 = sphi 0, %s52
      %s69 = sphi 0, %s53
      %s75 = sphi 0, %s77
      %s78 = sphi 0, %s75
      %s79 = sphi 0, %s78
      %s95 = sphi 0, %s79
      %s101 = sphi 0, %s103
      %s104 = sphi 0, %s101
      %s105 = sphi 0, %s104
      %s121 = sphi 0, %s105
      %s125 = sphi 0, %s125
      %s127 = sphi 0, %s125
      %s128 = sphi 0, %s127
      %s142 = sphi 0, %s128
      %s146 = sphi 0, %s146
      %s148 = sphi 0, %s146
      %s149 = sphi 0, %s148
      %s163 = sphi 0, %s149
      %s167 = sphi 0, %s167
      %s169 = sphi 0, %s167
      %s170 = sphi 0, %s169
      %s184 = sphi 0, %s170
      %s188 = sphi 0, %s188
      %s190 = sphi 0, %s188
      %s191 = sphi 0, %s190
      %s205 = sphi 0, %s191
      %s209 = sphi 0, %s209
      %s211 = sphi 0, %s209
      %s212 = sphi 0, %s211
      %s226 = sphi 0, %s212
      %s230 = sphi 0, %s230
      %s232 = sphi 0, %s230
      %s233 = sphi 0, %s232
      %s247 = sphi 0, %s233
      %s253 = sphi 0, %s255
      %s256 = sphi 0, %s253
      %s257 = sphi 0, %s256
      %s273 = sphi 0, %s257
      %s277 = sphi 0, %s277
      %s279 = sphi 0, %s277
      %s280 = sphi 0, %s279
      %s294 = sphi 0, %s280
      %s298 = sphi 0, %s298
      %s300 = sphi 0, %s298
      %s301 = sphi 0, %s300
      %s315 = sphi 0, %s301
      %s321 = sphi 0, %s323
      %s324 = sphi 0, %s321
      %s325 = sphi 0, %s324
      %s341 = sphi 0, %s325
    $region4: #{tpu_custom_call.1} parent=1 // loop_header_branch
      %28 = sbr.rel (%p26) target = $region8
    $region5: #{tpu_custom_call.1} parent=1 // loop_body
      %s30 = ssub.s32 %s25, 1
      %s31 = ssub.s32 %s25, 2
      %s38 = sadd.s32 1, %s33
      %p39 = scmp.ge.s32.totalorder %s38, 5
      %s40 = scalar_select %p39, 0, %s38
      %s41 = sadd.s32 1, %s32
      %s42 = scalar_select %p39, %s41, %s32
      %p43 = scmp.ge.s32.totalorder %s42, 2
      %s44 = scalar_select %p43, 0, %s42
      %s45 = ssub.s32 %s32, %s44
      %s46 = ssub.s32 %s33, %s40
      %s47 = sor.u32 %s45, %s46
      %p48 = scmp.eq.s32.totalorder %s47, 0
      %s50 = sadd.s32 %s49, 1
      %s51 = scalar_select %p48, %s49, %s50
      %p54 = pneg %p48
      %p55 = scmp.eq.s32.totalorder %s25, 9
      %p56 = por %p54, %p55
      %p57 = scmp.ne.s32.totalorder %s49, %s52
      %p58 = scmp.eq.s32.totalorder %s25, 0
      %p59 = por %p57, %p58
      %p60 = scmp.ne.s32.totalorder %s49, %s52
      %p61 = scmp.eq.s32.totalorder %s30, 9
      %p62 = por %p60, %p61
      %p63 = scmp.ne.s32.totalorder %s52, %s53
      %p64 = scmp.eq.s32.totalorder %s30, 0
      %p65 = por %p63, %p64
      %p66 = scmp.ne.s32.totalorder %s52, %s53
      %p67 = scmp.eq.s32.totalorder %s31, 9
      %p68 = por %p66, %p67
      %p70 = scmp.ne.s32.totalorder %s53, %s69
      %p71 = scmp.eq.s32.totalorder %s31, 0
      %p72 = por %p70, %p71
      %s73 = ssub.s32 %s32, %s44
      %p74 = scmp.eq.s32.totalorder %s73, 0
      %s76 = sadd.s32 %s75, 1
      %s77 = scalar_select %p74, %s75, %s76
      %p80 = pneg %p74
      %p81 = scmp.eq.s32.totalorder %s25, 9
      %p82 = por %p80, %p81
      %p83 = scmp.ne.s32.totalorder %s75, %s78
      %p84 = scmp.eq.s32.totalorder %s25, 0
      %p85 = por %p83, %p84
      %p86 = scmp.ne.s32.totalorder %s75, %s78
      %p87 = scmp.eq.s32.totalorder %s30, 9
      %p88 = por %p86, %p87
      %p89 = scmp.ne.s32.totalorder %s78, %s79
      %p90 = scmp.eq.s32.totalorder %s30, 0
      %p91 = por %p89, %p90
      %p92 = scmp.ne.s32.totalorder %s78, %s79
      %p93 = scmp.eq.s32.totalorder %s31, 9
      %p94 = por %p92, %p93
      %p96 = scmp.ne.s32.totalorder %s79, %s95
      %p97 = scmp.eq.s32.totalorder %s31, 0
      %p98 = por %p96, %p97
      %s99 = ssub.s32 %s32, %s44
      %p100 = scmp.eq.s32.totalorder %s99, 0
      %s102 = sadd.s32 %s101, 1
      %s103 = scalar_select %p100, %s101, %s102
      %p106 = pneg %p100
      %p107 = scmp.eq.s32.totalorder %s25, 9
      %p108 = por %p106, %p107
      %p109 = scmp.ne.s32.totalorder %s101, %s104
      %p110 = scmp.eq.s32.totalorder %s25, 0
      %p111 = por %p109, %p110
      %p112 = scmp.ne.s32.totalorder %s101, %s104
      %p113 = scmp.eq.s32.totalorder %s30, 9
      %p114 = por %p112, %p113
      %p115 = scmp.ne.s32.totalorder %s104, %s105
      %p116 = scmp.eq.s32.totalorder %s30, 0
      %p117 = por %p115, %p116
      %p118 = scmp.ne.s32.totalorder %s104, %s105
      %p119 = scmp.eq.s32.totalorder %s31, 9
      %p120 = por %p118, %p119
      %p122 = scmp.ne.s32.totalorder %s105, %s121
      %p123 = scmp.eq.s32.totalorder %s31, 0
      %p124 = por %p122, %p123
      %s126 = sadd.s32 %s125, 1
      %p129 = scmp.eq.s32.totalorder %s25, 9
      %p130 = scmp.ne.s32.totalorder %s125, %s127
      %p131 = scmp.eq.s32.totalorder %s25, 0
      %p132 = por %p130, %p131
      %p133 = scmp.ne.s32.totalorder %s125, %s127
      %p134 = scmp.eq.s32.totalorder %s30, 9
      %p135 = por %p133, %p134
      %p136 = scmp.ne.s32.totalorder %s127, %s128
      %p137 = scmp.eq.s32.totalorder %s30, 0
      %p138 = por %p136, %p137
      %p139 = scmp.ne.s32.totalorder %s127, %s128
      %p140 = scmp.eq.s32.totalorder %s31, 9
      %p141 = por %p139, %p140
      %p143 = scmp.ne.s32.totalorder %s128, %s142
      %p144 = scmp.eq.s32.totalorder %s31, 0
      %p145 = por %p143, %p144
      %s147 = sadd.s32 %s146, 1
      %p150 = scmp.eq.s32.totalorder %s25, 9
      %p151 = scmp.ne.s32.totalorder %s146, %s148
      %p152 = scmp.eq.s32.totalorder %s25, 0
      %p153 = por %p151, %p152
      %p154 = scmp.ne.s32.totalorder %s146, %s148
      %p155 = scmp.eq.s32.totalorder %s30, 9
      %p156 = por %p154, %p155
      %p157 = scmp.ne.s32.totalorder %s148, %s149
      %p158 = scmp.eq.s32.totalorder %s30, 0
      %p159 = por %p157, %p158
      %p160 = scmp.ne.s32.totalorder %s148, %s149
      %p161 = scmp.eq.s32.totalorder %s31, 9
      %p162 = por %p160, %p161
      %p164 = scmp.ne.s32.totalorder %s149, %s163
      %p165 = scmp.eq.s32.totalorder %s31, 0
      %p166 = por %p164, %p165
      %s168 = sadd.s32 %s167, 1
      %p171 = scmp.eq.s32.totalorder %s25, 9
      %p172 = scmp.ne.s32.totalorder %s167, %s169
      %p173 = scmp.eq.s32.totalorder %s25, 0
      %p174 = por %p172, %p173
      %p175 = scmp.ne.s32.totalorder %s167, %s169
      %p176 = scmp.eq.s32.totalorder %s30, 9
      %p177 = por %p175, %p176
      %p178 = scmp.ne.s32.totalorder %s169, %s170
      %p179 = scmp.eq.s32.totalorder %s30, 0
      %p180 = por %p178, %p179
      %p181 = scmp.ne.s32.totalorder %s169, %s170
      %p182 = scmp.eq.s32.totalorder %s31, 9
      %p183 = por %p181, %p182
      %p185 = scmp.ne.s32.totalorder %s170, %s184
      %p186 = scmp.eq.s32.totalorder %s31, 0
      %p187 = por %p185, %p186
      %s189 = sadd.s32 %s188, 1
      %p192 = scmp.eq.s32.totalorder %s25, 9
      %p193 = scmp.ne.s32.totalorder %s188, %s190
      %p194 = scmp.eq.s32.totalorder %s25, 0
      %p195 = por %p193, %p194
      %p196 = scmp.ne.s32.totalorder %s188, %s190
      %p197 = scmp.eq.s32.totalorder %s30, 9
      %p198 = por %p196, %p197
      %p199 = scmp.ne.s32.totalorder %s190, %s191
      %p200 = scmp.eq.s32.totalorder %s30, 0
      %p201 = por %p199, %p200
      %p202 = scmp.ne.s32.totalorder %s190, %s191
      %p203 = scmp.eq.s32.totalorder %s31, 9
      %p204 = por %p202, %p203
      %p206 = scmp.ne.s32.totalorder %s191, %s205
      %p207 = scmp.eq.s32.totalorder %s31, 0
      %p208 = por %p206, %p207
      %s210 = sadd.s32 %s209, 1
      %p213 = scmp.eq.s32.totalorder %s25, 9
      %p214 = scmp.ne.s32.totalorder %s209, %s211
      %p215 = scmp.eq.s32.totalorder %s25, 0
      %p216 = por %p214, %p215
      %p217 = scmp.ne.s32.totalorder %s209, %s211
      %p218 = scmp.eq.s32.totalorder %s30, 9
      %p219 = por %p217, %p218
      %p220 = scmp.ne.s32.totalorder %s211, %s212
      %p221 = scmp.eq.s32.totalorder %s30, 0
      %p222 = por %p220, %p221
      %p223 = scmp.ne.s32.totalorder %s211, %s212
      %p224 = scmp.eq.s32.totalorder %s31, 9
      %p225 = por %p223, %p224
      %p227 = scmp.ne.s32.totalorder %s212, %s226
      %p228 = scmp.eq.s32.totalorder %s31, 0
      %p229 = por %p227, %p228
      %s231 = sadd.s32 %s230, 1
      %p234 = scmp.eq.s32.totalorder %s25, 9
      %p235 = scmp.ne.s32.totalorder %s230, %s232
      %p236 = scmp.eq.s32.totalorder %s25, 0
      %p237 = por %p235, %p236
      %p238 = scmp.ne.s32.totalorder %s230, %s232
      %p239 = scmp.eq.s32.totalorder %s30, 9
      %p240 = por %p238, %p239
      %p241 = scmp.ne.s32.totalorder %s232, %s233
      %p242 = scmp.eq.s32.totalorder %s30, 0
      %p243 = por %p241, %p242
      %p244 = scmp.ne.s32.totalorder %s232, %s233
      %p245 = scmp.eq.s32.totalorder %s31, 9
      %p246 = por %p244, %p245
      %p248 = scmp.ne.s32.totalorder %s233, %s247
      %p249 = scmp.eq.s32.totalorder %s31, 0
      %p250 = por %p248, %p249
      %s251 = ssub.s32 %s33, %s40
      %p252 = scmp.eq.s32.totalorder %s251, 0
      %s254 = sadd.s32 %s253, 1
      %s255 = scalar_select %p252, %s253, %s254
      %p258 = pneg %p252
      %p259 = scmp.eq.s32.totalorder %s25, 9
      %p260 = por %p258, %p259
      %p261 = scmp.ne.s32.totalorder %s253, %s256
      %p262 = scmp.eq.s32.totalorder %s25, 0
      %p263 = por %p261, %p262
      %p264 = scmp.ne.s32.totalorder %s253, %s256
      %p265 = scmp.eq.s32.totalorder %s30, 9
      %p266 = por %p264, %p265
      %p267 = scmp.ne.s32.totalorder %s256, %s257
      %p268 = scmp.eq.s32.totalorder %s30, 0
      %p269 = por %p267, %p268
      %p270 = scmp.ne.s32.totalorder %s256, %s257
      %p271 = scmp.eq.s32.totalorder %s31, 9
      %p272 = por %p270, %p271
      %p274 = scmp.ne.s32.totalorder %s257, %s273
      %p275 = scmp.eq.s32.totalorder %s31, 0
      %p276 = por %p274, %p275
      %s278 = sadd.s32 %s277, 1
      %p281 = scmp.eq.s32.totalorder %s25, 9
      %p282 = scmp.ne.s32.totalorder %s277, %s279
      %p283 = scmp.eq.s32.totalorder %s25, 0
      %p284 = por %p282, %p283
      %p285 = scmp.ne.s32.totalorder %s277, %s279
      %p286 = scmp.eq.s32.totalorder %s30, 9
      %p287 = por %p285, %p286
      %p288 = scmp.ne.s32.totalorder %s279, %s280
      %p289 = scmp.eq.s32.totalorder %s30, 0
      %p290 = por %p288, %p289
      %p291 = scmp.ne.s32.totalorder %s279, %s280
      %p292 = scmp.eq.s32.totalorder %s31, 9
      %p293 = por %p291, %p292
      %p295 = scmp.ne.s32.totalorder %s280, %s294
      %p296 = scmp.eq.s32.totalorder %s31, 0
      %p297 = por %p295, %p296
      %s299 = sadd.s32 %s298, 1
      %p302 = scmp.eq.s32.totalorder %s25, 9
      %p303 = scmp.ne.s32.totalorder %s298, %s300
      %p304 = scmp.eq.s32.totalorder %s25, 0
      %p305 = por %p303, %p304
      %p306 = scmp.ne.s32.totalorder %s298, %s300
      %p307 = scmp.eq.s32.totalorder %s30, 9
      %p308 = por %p306, %p307
      %p309 = scmp.ne.s32.totalorder %s300, %s301
      %p310 = scmp.eq.s32.totalorder %s30, 0
      %p311 = por %p309, %p310
      %p312 = scmp.ne.s32.totalorder %s300, %s301
      %p313 = scmp.eq.s32.totalorder %s31, 9
      %p314 = por %p312, %p313
      %p316 = scmp.ne.s32.totalorder %s301, %s315
      %p317 = scmp.eq.s32.totalorder %s31, 0
      %p318 = por %p316, %p317
      %s319 = ssub.s32 %s32, %s44
      %p320 = scmp.eq.s32.totalorder %s319, 0
      %s322 = sadd.s32 %s321, 1
      %s323 = scalar_select %p320, %s321, %s322
      %p326 = pneg %p320
      %p327 = scmp.eq.s32.totalorder %s25, 9
      %p328 = por %p326, %p327
      %p329 = scmp.ne.s32.totalorder %s321, %s324
      %p330 = scmp.eq.s32.totalorder %s25, 0
      %p331 = por %p329, %p330
      %p332 = scmp.ne.s32.totalorder %s321, %s324
      %p333 = scmp.eq.s32.totalorder %s30, 9
      %p334 = por %p332, %p333
      %p335 = scmp.ne.s32.totalorder %s324, %s325
      %p336 = scmp.eq.s32.totalorder %s30, 0
      %p337 = por %p335, %p336
      %p338 = scmp.ne.s32.totalorder %s324, %s325
      %p339 = scmp.eq.s32.totalorder %s31, 9
      %p340 = por %p338, %p339
      %p342 = scmp.ne.s32.totalorder %s325, %s341
      %p343 = scmp.eq.s32.totalorder %s31, 0
      %p344 = por %p342, %p343
      %p345 = scmp.le.s32.totalorder 1, %s25
      %p346 = scmp.lt.s32.totalorder %s25, 11
      %p347 = pnand %p345, %p346
      %p348 = pneg %p347
      // Predicated region
      $region9: #{tpu_custom_call.1} parent=5 // pred_check
        _
      $region10: #{tpu_custom_call.1} parent=5 // pred_check_branch
        %350 = sbr.rel (%p347) target = $region12
      $region11: #{tpu_custom_call.1} parent=5 // pred_region
        %s351 = ssub.s32 %s25, 1
        // Predicated region
        $region13: #{tpu_custom_call.1} parent=11 // pred_check
          %p352 = pneg %p138
        $region14: #{tpu_custom_call.1} parent=11 // pred_check_branch
          %354 = sbr.rel (%p352) target = $region16
        $region15: #{tpu_custom_call.1} parent=11 // pred_region
          _
        $region16: #{tpu_custom_call.1} parent=11 // pred_fallthru
          _
        // Predicated region
        $region17: #{tpu_custom_call.1} parent=11 // pred_check
          %p355 = pneg %p159
        $region18: #{tpu_custom_call.1} parent=11 // pred_check_branch
          %357 = sbr.rel (%p355) target = $region20
        $region19: #{tpu_custom_call.1} parent=11 // pred_region
          %s359 = ssub.s32 2304, 2304
          %360 = vsyncadd [#allocation9], %s359
          %s361 = sshll.u32 [#allocation10], 4
          %s362 = int_to_ptr.vmem [resolvable:$true] %s361
          %367 = dma.hbm_to_vmem [thread:$0]  %s4, 2304, %s362, [#allocation9], 64, 64, 4
        $region20: #{tpu_custom_call.1} parent=11 // pred_fallthru
          _
        // Predicated region
        $region21: #{tpu_custom_call.1} parent=11 // pred_check
          %p368 = pneg %p180
        $region22: #{tpu_custom_call.1} parent=11 // pred_check_branch
          %370 = sbr.rel (%p368) target = $region24
        $region23: #{tpu_custom_call.1} parent=11 // pred_region
          _
        $region24: #{tpu_custom_call.1} parent=11 // pred_fallthru
          _
        // Predicated region
        $region25: #{tpu_custom_call.1} parent=11 // pred_check
          %p371 = pneg %p201
        $region26: #{tpu_custom_call.1} parent=11 // pred_check_branch
          %373 = sbr.rel (%p371) target = $region28
        $region27: #{tpu_custom_call.1} parent=11 // pred_region
          %s375 = ssub.s32 2304, 2304
          %376 = vsyncadd [#allocation12], %s375
          %s377 = sshll.u32 [#allocation11], 4
          %s378 = int_to_ptr.vmem [resolvable:$true] %s377
          %383 = dma.hbm_to_vmem [thread:$0]  %s6, 2304, %s378, [#allocation12], 64, 64, 4
        $region28: #{tpu_custom_call.1} parent=11 // pred_fallthru
          _
        // Predicated region
        $region29: #{tpu_custom_call.1} parent=11 // pred_check
          %p384 = pneg %p222
        $region30: #{tpu_custom_call.1} parent=11 // pred_check_branch
          %386 = sbr.rel (%p384) target = $region32
        $region31: #{tpu_custom_call.1} parent=11 // pred_region
          _
        $region32: #{tpu_custom_call.1} parent=11 // pred_fallthru
          _
        // Predicated region
        $region33: #{tpu_custom_call.1} parent=11 // pred_check
          %p387 = pneg %p243
        $region34: #{tpu_custom_call.1} parent=11 // pred_check_branch
          %389 = sbr.rel (%p387) target = $region36
        $region35: #{tpu_custom_call.1} parent=11 // pred_region
          _
        $region36: #{tpu_custom_call.1} parent=11 // pred_fallthru
          _
        // Predicated region
        $region37: #{tpu_custom_call.1} parent=11 // pred_check
          %p390 = pneg %p290
        $region38: #{tpu_custom_call.1} parent=11 // pred_check_branch
          %392 = sbr.rel (%p390) target = $region40
        $region39: #{tpu_custom_call.1} parent=11 // pred_region
          _
        $region40: #{tpu_custom_call.1} parent=11 // pred_fallthru
          _
        // Predicated region
        $region41: #{tpu_custom_call.1} parent=11 // pred_check
          %p393 = pneg %p311
        $region42: #{tpu_custom_call.1} parent=11 // pred_check_branch
          %395 = sbr.rel (%p393) target = $region44
        $region43: #{tpu_custom_call.1} parent=11 // pred_region
          _
        $region44: #{tpu_custom_call.1} parent=11 // pred_fallthru
          _
      $region12: #{tpu_custom_call.1} parent=5 // pred_fallthru
        _
      %p396 = scmp.lt.s32.totalorder %s25, 10
      // Predicated region
      $region45: #{tpu_custom_call.1} parent=5 // pred_check
        %p397 = pneg %p396
      $region46: #{tpu_custom_call.1} parent=5 // pred_check_branch
        %399 = sbr.rel (%p397) target = $region48
      $region47: #{tpu_custom_call.1} parent=5 // pred_region
        // Predicated region
        $region49: #{tpu_custom_call.1} parent=47 // pred_check
          %p400 = pneg %p59
        $region50: #{tpu_custom_call.1} parent=47 // pred_check_branch
          %402 = sbr.rel (%p400) target = $region52
        $region51: #{tpu_custom_call.1} parent=47 // pred_region
          %s403 = sand.u32 %s25, 1
          %s404 = scalar_lea.sflag [#allocation7], %s403
          %s405 = sand.u32 %s49, 1
          %s406 = smul.addr %s405, 64
          %s407 = scalar_lea.vmem [#allocation6], %s406
          %s409 = ssub.s32 1024, 1024
          %410 = vsyncadd %s404, %s409
          %s411 = smul.addr %s33, 8
          %s412 = smul.addr %s32, 40
          %s413 = sadd.s32 %s411, %s412
          %s414 = smul.addr %s413, 128
          %s415 = scalar_lea.hbm %s0, %s414
          %s416 = sshll.u32 %s407, 4
          %s417 = int_to_ptr.vmem [resolvable:$true] %s416
          %422 = dma.hbm_to_vmem [thread:$0]  %s415, 1024, %s417, %s404, 128, 128, 8
        $region52: #{tpu_custom_call.1} parent=47 // pred_fallthru
          _
        // Predicated region
        $region53: #{tpu_custom_call.1} parent=47 // pred_check
          %p423 = pneg %p85
        $region54: #{tpu_custom_call.1} parent=47 // pred_check_branch
          %425 = sbr.rel (%p423) target = $region56
        $region55: #{tpu_custom_call.1} parent=47 // pred_region
          %s426 = sand.u32 %s25, 1
          %s427 = scalar_lea.sflag [#allocation9], %s426
          %s428 = sand.u32 %s75, 1
          %s429 = smul.addr %s428, 64
          %s430 = scalar_lea.vmem [#allocation8], %s429
          %s432 = ssub.s32 1024, 1024
          %433 = vsyncadd %s427, %s432
          %s434 = smul.addr %s32, 8
          %s435 = smul.addr %s434, 128
          %s436 = scalar_lea.hbm %s1, %s435
          %s437 = sshll.u32 %s430, 4
          %s438 = int_to_ptr.vmem [resolvable:$true] %s437
          %443 = dma.hbm_to_vmem [thread:$0]  %s436, 1024, %s438, %s427, 128, 128, 8
        $region56: #{tpu_custom_call.1} parent=47 // pred_fallthru
          _
        // Predicated region
        $region57: #{tpu_custom_call.1} parent=47 // pred_check
          %p444 = pneg %p111
        $region58: #{tpu_custom_call.1} parent=47 // pred_check_branch
          %446 = sbr.rel (%p444) target = $region60
        $region59: #{tpu_custom_call.1} parent=47 // pred_region
          %p447 = scmp.lt.s32.totalorder %s32, 1
          %s448 = scalar_select %p447, %s32, 1
          %s449 = smul.addr %s448, 8
          %s450 = smul.addr %s449, 8
          %s451 = scalar_lea.vmem %s2, %s450
        $region60: #{tpu_custom_call.1} parent=47 // pred_fallthru
          _
        // Predicated region
        $region61: #{tpu_custom_call.1} parent=47 // pred_check
          %p452 = pneg %p263
        $region62: #{tpu_custom_call.1} parent=47 // pred_check_branch
          %454 = sbr.rel (%p452) target = $region64
        $region63: #{tpu_custom_call.1} parent=47 // pred_region
          %s455 = sand.u32 %s25, 1
          %s456 = scalar_lea.sflag [#allocation7], %s455
          %s457 = sand.u32 %s253, 1
          %s458 = smul.addr %s457, 16
          %s459 = scalar_lea.vmem [#allocation13], %s458
          %s461 = ssub.s32 256, 256
          %462 = vsyncadd %s456, %s461
          %s463 = smul.addr %s33, 4
          %s464 = smul.addr %s463, 64
          %s465 = scalar_lea.hbm %s9, %s464
          %s466 = sshll.u32 %s459, 4
          %s467 = int_to_ptr.vmem [resolvable:$true] %s466
          %472 = dma.hbm_to_vmem [thread:$0]  %s465, 256, %s467, %s456, 64, 64, 4
        $region64: #{tpu_custom_call.1} parent=47 // pred_fallthru
          _
      $region48: #{tpu_custom_call.1} parent=5 // pred_fallthru
        _
      %p473 = scmp.le.s32.totalorder 1, %s25
      %p474 = scmp.lt.s32.totalorder %s25, 11
      %p475 = pnand %p473, %p474
      %p476 = pneg %p475
      // Predicated region
      $region65: #{tpu_custom_call.1} parent=5 // pred_check
        _
      $region66: #{tpu_custom_call.1} parent=5 // pred_check_branch
        %478 = sbr.rel (%p475) target = $region68
      $region67: #{tpu_custom_call.1} parent=5 // pred_region
        %s479 = ssub.s32 %s25, 1
        %s480 = sand.u32 %s30, 1
        %s481 = scalar_lea.sflag [#allocation7], %s480
        %s482 = sand.u32 %s52, 1
        %s483 = smul.addr %s482, 64
        %s484 = scalar_lea.vmem [#allocation6], %s483
        // Predicated region
        $region69: #{tpu_custom_call.1} parent=67 // pred_check
          %p485 = pneg %p65
        $region70: #{tpu_custom_call.1} parent=67 // pred_check_branch
          %487 = sbr.rel (%p485) target = $region72
        $region71: #{tpu_custom_call.1} parent=67 // pred_region
          %488 = dma.done %s481, 1024
        $region72: #{tpu_custom_call.1} parent=67 // pred_fallthru
          _
        %s489 = sand.u32 %s30, 1
        %s490 = scalar_lea.sflag [#allocation9], %s489
        %s491 = sand.u32 %s78, 1
        %s492 = smul.addr %s491, 64
        %s493 = scalar_lea.vmem [#allocation8], %s492
        // Predicated region
        $region73: #{tpu_custom_call.1} parent=67 // pred_check
          %p494 = pneg %p91
        $region74: #{tpu_custom_call.1} parent=67 // pred_check_branch
          %496 = sbr.rel (%p494) target = $region76
        $region75: #{tpu_custom_call.1} parent=67 // pred_region
          %497 = dma.done %s490, 1024
        $region76: #{tpu_custom_call.1} parent=67 // pred_fallthru
          _
        // Predicated region
        $region77: #{tpu_custom_call.1} parent=67 // pred_check
          %p498 = pneg %p159
        $region78: #{tpu_custom_call.1} parent=67 // pred_check_branch
          %500 = sbr.rel (%p498) target = $region80
        $region79: #{tpu_custom_call.1} parent=67 // pred_region
          %501 = dma.done [#allocation9], 2304
        $region80: #{tpu_custom_call.1} parent=67 // pred_fallthru
          _
        // Predicated region
        $region81: #{tpu_custom_call.1} parent=67 // pred_check
          %p502 = pneg %p201
        $region82: #{tpu_custom_call.1} parent=67 // pred_check_branch
          %504 = sbr.rel (%p502) target = $region84
        $region83: #{tpu_custom_call.1} parent=67 // pred_region
          %505 = dma.done [#allocation12], 2304
        $region84: #{tpu_custom_call.1} parent=67 // pred_fallthru
          _
        %s506 = sand.u32 %s30, 1
        %s507 = scalar_lea.sflag [#allocation7], %s506
        %s508 = sand.u32 %s256, 1
        %s509 = smul.addr %s508, 16
        %s510 = scalar_lea.vmem [#allocation13], %s509
        // Predicated region
        $region85: #{tpu_custom_call.1} parent=67 // pred_check
          %p511 = pneg %p269
        $region86: #{tpu_custom_call.1} parent=67 // pred_check_branch
          %513 = sbr.rel (%p511) target = $region88
        $region87: #{tpu_custom_call.1} parent=67 // pred_region
          %514 = dma.done %s507, 256
        $region88: #{tpu_custom_call.1} parent=67 // pred_fallthru
          _
        %s515 = sand.u32 %s30, 1
        %s516 = scalar_lea.sflag [#allocation7], %s515
        %s517 = sand.u32 %s52, 1
        %s518 = smul.addr %s517, 64
        %s519 = scalar_lea.vmem [#allocation6], %s518
        %p520 = pneg %p65
        %p521 = pneg %p62
        %s522 = sand.u32 %s30, 1
        %s523 = scalar_lea.sflag [#allocation9], %s522
        %s524 = sand.u32 %s78, 1
        %s525 = smul.addr %s524, 64
        %s526 = scalar_lea.vmem [#allocation8], %s525
        %p527 = pneg %p91
        %p528 = pneg %p88
        %p529 = scmp.lt.s32.totalorder %s34, 1
        %s530 = scalar_select %p529, %s34, 1
        %s531 = smul.addr %s530, 8
        %s532 = smul.addr %s531, 8
        %s533 = scalar_lea.vmem %s2, %s532
        %p534 = pneg %p117
        %p535 = pneg %p114
        %p536 = pneg %p138
        %p537 = pneg %p135
        %p538 = pneg %p159
        %p539 = pneg %p156
        %p540 = pneg %p180
        %p541 = pneg %p177
        %p542 = pneg %p201
        %p543 = pneg %p198
        %p544 = pneg %p222
        %p545 = pneg %p219
        %p546 = pneg %p243
        %p547 = pneg %p240
        %s548 = sand.u32 %s30, 1
        %s549 = scalar_lea.sflag [#allocation7], %s548
        %s550 = sand.u32 %s256, 1
        %s551 = smul.addr %s550, 16
        %s552 = scalar_lea.vmem [#allocation13], %s551
        %p553 = pneg %p269
        %p554 = pneg %p266
        %p555 = pneg %p290
        %p556 = pneg %p287
        %p557 = pneg %p311
        %p558 = pneg %p308
        %p559 = pneg %p337
        %p560 = pneg %p334
        %p561 = scmp.lt.s32.totalorder %s34, 1
        %s562 = scalar_select %p561, %s34, 1
        %s563 = smul.addr %s562, 8
        %s564 = smul.addr %s563, 8
        %s565 = scalar_lea.vmem %s12, %s564
        %p566 = scmp.lt.s32.totalorder %s34, 1
        %s567 = scalar_select %p566, %s34, 1
        %s568 = smul.addr %s567, 8
        %s569 = smul.addr %s568, 8
        %s570 = scalar_lea.vmem %s2, %s569
        %p571 = scmp.lt.s32.totalorder %s34, 1
        %s572 = scalar_select %p571, %s34, 1
        %s573 = smul.addr %s572, 8
        %s574 = smul.addr %s573, 8
        %s575 = scalar_lea.vmem %s12, %s574
        %v577 = vlaneseq
        %v578 = vshrl.u32 %v577, 7
        %v579 = vadd.s32 %v578, 8
        %v580 = vadd.s32 %v578, 16
        %v581 = vadd.s32 %v578, 24
        %v582 = vadd.s32 %v578, 32
        %v583 = vadd.s32 %v578, 40
        %v584 = vadd.s32 %v578, 48
        %v585 = vadd.s32 %v578, 56
        %vm586 = vcmp.lt.s32.totalorder %v578, 0
        %v587 = vsub.s32 0, %v578
        %v588 = vsel %vm586, %v587, %v578
        %v589 = vshrl.u32 %v588, 3
        %v590 = vand.u32 %v588, 7
        %v591 = vsub.s32 0, %v590
        %v592 = vsel %vm586, %v591, %v590
        %vm593 = vcmp.lt.s32.totalorder %v579, 0
        %v594 = vsub.s32 0, %v579
        %v595 = vsel %vm593, %v594, %v579
        %v596 = vshrl.u32 %v595, 3
        %v597 = vand.u32 %v595, 7
        %v598 = vsub.s32 0, %v597
        %v599 = vsel %vm593, %v598, %v597
        %vm600 = vcmp.lt.s32.totalorder %v580, 0
        %v601 = vsub.s32 0, %v580
        %v602 = vsel %vm600, %v601, %v580
        %v603 = vshrl.u32 %v602, 3
        %v604 = vand.u32 %v602, 7
        %v605 = vsub.s32 0, %v604
        %v606 = vsel %vm600, %v605, %v604
        %vm607 = vcmp.lt.s32.totalorder %v581, 0
        %v608 = vsub.s32 0, %v581
        %v609 = vsel %vm607, %v608, %v581
        %v610 = vshrl.u32 %v609, 3
        %v611 = vand.u32 %v609, 7
        %v612 = vsub.s32 0, %v611
        %v613 = vsel %vm607, %v612, %v611
        %vm614 = vcmp.lt.s32.totalorder %v582, 0
        %v615 = vsub.s32 0, %v582
        %v616 = vsel %vm614, %v615, %v582
        %v617 = vshrl.u32 %v616, 3
        %v618 = vand.u32 %v616, 7
        %v619 = vsub.s32 0, %v618
        %v620 = vsel %vm614, %v619, %v618
        %vm621 = vcmp.lt.s32.totalorder %v583, 0
        %v622 = vsub.s32 0, %v583
        %v623 = vsel %vm621, %v622, %v583
        %v624 = vshrl.u32 %v623, 3
        %v625 = vand.u32 %v623, 7
        %v626 = vsub.s32 0, %v625
        %v627 = vsel %vm621, %v626, %v625
        %vm628 = vcmp.lt.s32.totalorder %v584, 0
        %v629 = vsub.s32 0, %v584
        %v630 = vsel %vm628, %v629, %v584
        %v631 = vshrl.u32 %v630, 3
        %v632 = vand.u32 %v630, 7
        %v633 = vsub.s32 0, %v632
        %v634 = vsel %vm628, %v633, %v632
        %vm635 = vcmp.lt.s32.totalorder %v585, 0
        %v636 = vsub.s32 0, %v585
        %v637 = vsel %vm635, %v636, %v585
        %v638 = vshrl.u32 %v637, 3
        %v639 = vand.u32 %v637, 7
        %v640 = vsub.s32 0, %v639
        %v641 = vsel %vm635, %v640, %v639
        %vm642 = vcmp.ne.s32.totalorder %v592, 0
        %vm643 = vcmp.ne.s32.totalorder %v599, 0
        %vm644 = vcmp.ne.s32.totalorder %v606, 0
        %vm645 = vcmp.ne.s32.totalorder %v613, 0
        %vm646 = vcmp.ne.s32.totalorder %v620, 0
        %vm647 = vcmp.ne.s32.totalorder %v627, 0
        %vm648 = vcmp.ne.s32.totalorder %v634, 0
        %vm649 = vcmp.ne.s32.totalorder %v641, 0
        %vm650 = vcmp.lt.s32.totalorder %v592, 0
        %vm651 = vcmp.lt.s32.totalorder %v599, 0
        %vm652 = vcmp.lt.s32.totalorder %v606, 0
        %vm653 = vcmp.lt.s32.totalorder %v613, 0
        %vm654 = vcmp.lt.s32.totalorder %v620, 0
        %vm655 = vcmp.lt.s32.totalorder %v627, 0
        %vm656 = vcmp.lt.s32.totalorder %v634, 0
        %vm657 = vcmp.lt.s32.totalorder %v641, 0
        %vm658 = vmand %vm650, %vm642
        %vm659 = vmand %vm651, %vm643
        %vm660 = vmand %vm652, %vm644
        %vm661 = vmand %vm653, %vm645
        %vm662 = vmand %vm654, %vm646
        %vm663 = vmand %vm655, %vm647
        %vm664 = vmand %vm656, %vm648
        %vm665 = vmand %vm657, %vm649
        %v666 = vadd.s32 %v592, 8
        %v667 = vadd.s32 %v599, 8
        %v668 = vadd.s32 %v606, 8
        %v669 = vadd.s32 %v613, 8
        %v670 = vadd.s32 %v620, 8
        %v671 = vadd.s32 %v627, 8
        %v672 = vadd.s32 %v634, 8
        %v673 = vadd.s32 %v641, 8
        %v674 = vsel %vm658, %v666, %v592
        %v675 = vsel %vm659, %v667, %v599
        %v676 = vsel %vm660, %v668, %v606
        %v677 = vsel %vm661, %v669, %v613
        %v678 = vsel %vm662, %v670, %v620
        %v679 = vsel %vm663, %v671, %v627
        %v680 = vsel %vm664, %v672, %v634
        %v681 = vsel %vm665, %v673, %v641
        %vm682 = vcmp.ge.s32.totalorder %v674, 1
        %vm683 = vcmp.ge.s32.totalorder %v675, 1
        %vm684 = vcmp.ge.s32.totalorder %v676, 1
        %vm685 = vcmp.ge.s32.totalorder %v677, 1
        %vm686 = vcmp.ge.s32.totalorder %v678, 1
        %vm687 = vcmp.ge.s32.totalorder %v679, 1
        %vm688 = vcmp.ge.s32.totalorder %v680, 1
        %vm689 = vcmp.ge.s32.totalorder %v681, 1
        %v690 = vsel %vm682, 1, 0
        %v691 = vsel %vm683, 1, 0
        %v692 = vsel %vm684, 1, 0
        %v693 = vsel %vm685, 1, 0
        %v694 = vsel %vm686, 1, 0
        %v695 = vsel %vm687, 1, 0
        %v696 = vsel %vm688, 1, 0
        %v697 = vsel %vm689, 1, 0
        %v698 = vcvt.s32.f32 %v690
        %v699 = vcvt.s32.f32 %v691
        %v700 = vcvt.s32.f32 %v692
        %v701 = vcvt.s32.f32 %v693
        %v702 = vcvt.s32.f32 %v694
        %v703 = vcvt.s32.f32 %v695
        %v704 = vcvt.s32.f32 %v696
        %v705 = vcvt.s32.f32 %v697
        %vm706 = vcmp.le.s32.totalorder %v674, 6
        %vm707 = vcmp.le.s32.totalorder %v675, 6
        %vm708 = vcmp.le.s32.totalorder %v676, 6
        %vm709 = vcmp.le.s32.totalorder %v677, 6
        %vm710 = vcmp.le.s32.totalorder %v678, 6
        %vm711 = vcmp.le.s32.totalorder %v679, 6
        %vm712 = vcmp.le.s32.totalorder %v680, 6
        %vm713 = vcmp.le.s32.totalorder %v681, 6
        %v714 = vsel %vm706, 1, 0
        %v715 = vsel %vm707, 1, 0
        %v716 = vsel %vm708, 1, 0
        %v717 = vsel %vm709, 1, 0
        %v718 = vsel %vm710, 1, 0
        %v719 = vsel %vm711, 1, 0
        %v720 = vsel %vm712, 1, 0
        %v721 = vsel %vm713, 1, 0
        %v722 = vcvt.s32.f32 %v714
        %v723 = vcvt.s32.f32 %v715
        %v724 = vcvt.s32.f32 %v716
        %v725 = vcvt.s32.f32 %v717
        %v726 = vcvt.s32.f32 %v718
        %v727 = vcvt.s32.f32 %v719
        %v728 = vcvt.s32.f32 %v720
        %v729 = vcvt.s32.f32 %v721
        %v730 = vld [vmem:[%s484] sm:$0xff]
        %v731 = vld [vmem:[%s484 + $0x8] sm:$0xff]
        %v732 = vld [vmem:[%s484 + $0x10] sm:$0xff]
        %v733 = vld [vmem:[%s484 + $0x18] sm:$0xff]
        %v734 = vld [vmem:[%s484 + $0x20] sm:$0xff]
        %v735 = vld [vmem:[%s484 + $0x28] sm:$0xff]
        %v736 = vld [vmem:[%s484 + $0x30] sm:$0xff]
        %v737 = vld [vmem:[%s484 + $0x38] sm:$0xff]
        %p738 = scmp.eq.s32.totalorder %s35, 0
        // Predicated region
        $region89: #{tpu_custom_call.1} parent=67 // pred_check
          %p739 = pneg %p738
        $region90: #{tpu_custom_call.1} parent=67 // pred_check_branch
          %741 = sbr.rel (%p739) target = $region92
        $region91: #{tpu_custom_call.1} parent=67 // pred_region
          %vm742 = vcmask 261120
          %743 = vst.msk [vmem:[#allocation4] sm:$0xff] %vm742, 0.0
          %744 = vst.msk [vmem:[#allocation4 + $0x8] sm:$0xff] %vm742, 0.0
          %745 = vst.msk [vmem:[#allocation4 + $0x10] sm:$0xff] %vm742, 0.0
          %746 = vst.msk [vmem:[#allocation4 + $0x18] sm:$0xff] %vm742, 0.0
          %747 = vst.msk [vmem:[#allocation4 + $0x20] sm:$0xff] %vm742, 0.0
          %748 = vst.msk [vmem:[#allocation4 + $0x28] sm:$0xff] %vm742, 0.0
          %749 = vst.msk [vmem:[#allocation4 + $0x30] sm:$0xff] %vm742, 0.0
          %750 = vst.msk [vmem:[#allocation4 + $0x38] sm:$0xff] %vm742, 0.0
          %751 = vst.msk [vmem:[#allocation4 + $0x40] sm:$0xff] %vm742, 0.0
          %752 = vst.msk [vmem:[#allocation4 + $0x48] sm:$0xff] %vm742, 0.0
          %753 = vst.msk [vmem:[#allocation4 + $0x50] sm:$0xff] %vm742, 0.0
          %vm754 = vcmask 253952
          %755 = vst.msk [vmem:[#allocation4 + $0x58] sm:$0x1] %vm754, 0.0
          %vm756 = vcmask 23552
          %757 = vst.msk [vmem:[#allocation5] sm:$0xff] %vm756, 0.0
          %758 = vst.msk [vmem:[#allocation5 + $0x8] sm:$0xff] %vm756, 0.0
          %759 = vst.msk [vmem:[#allocation5 + $0x10] sm:$0xff] %vm756, 0.0
          %760 = vst.msk [vmem:[#allocation5 + $0x18] sm:$0xff] %vm756, 0.0
          %761 = vst.msk [vmem:[#allocation5 + $0x20] sm:$0xff] %vm756, 0.0
          %762 = vst.msk [vmem:[#allocation5 + $0x28] sm:$0xff] %vm756, 0.0
          %763 = vst.msk [vmem:[#allocation5 + $0x30] sm:$0xff] %vm756, 0.0
          %764 = vst.msk [vmem:[#allocation5 + $0x38] sm:$0xff] %vm756, 0.0
          %765 = vst.msk [vmem:[#allocation5 + $0x40] sm:$0xff] %vm756, 0.0
          %766 = vst.msk [vmem:[#allocation5 + $0x48] sm:$0xff] %vm756, 0.0
          %767 = vst.msk [vmem:[#allocation5 + $0x50] sm:$0xff] %vm756, 0.0
          %vm768 = vcmask 16384
          %769 = vst.msk [vmem:[#allocation5 + $0x58] sm:$0x1] %vm768, 0.0
          %v770 = vld [vmem:[%s493] sm:$0xff]
          %v771 = vld [vmem:[%s493 + $0x8] sm:$0xff]
          %v772 = vld [vmem:[%s493 + $0x10] sm:$0xff]
          %v773 = vld [vmem:[%s493 + $0x18] sm:$0xff]
          %v774 = vld [vmem:[%s493 + $0x20] sm:$0xff]
          %v775 = vld [vmem:[%s493 + $0x28] sm:$0xff]
          %v776 = vld [vmem:[%s493 + $0x30] sm:$0xff]
          %v777 = vld [vmem:[%s493 + $0x38] sm:$0xff]
          %778 = vst.msk [vmem:[#allocation4 + $0x10] sm:$0xff] %vm742, %v770
          %779 = vst.msk [vmem:[#allocation4 + $0x18] sm:$0xff] %vm742, %v771
          %780 = vst.msk [vmem:[#allocation4 + $0x20] sm:$0xff] %vm742, %v772
          %781 = vst.msk [vmem:[#allocation4 + $0x28] sm:$0xff] %vm742, %v773
          %782 = vst.msk [vmem:[#allocation4 + $0x30] sm:$0xff] %vm742, %v774
          %783 = vst.msk [vmem:[#allocation4 + $0x38] sm:$0xff] %vm742, %v775
          %784 = vst.msk [vmem:[#allocation4 + $0x40] sm:$0xff] %vm742, %v776
          %785 = vst.msk [vmem:[#allocation4 + $0x48] sm:$0xff] %vm742, %v777
          %v786 = vld [vmem:[%s570] sm:$0xff]
          %v787 = vld [vmem:[%s570 + $0x8] sm:$0xff]
          %v788 = vld [vmem:[%s570 + $0x10] sm:$0xff]
          %v789 = vld [vmem:[%s570 + $0x18] sm:$0xff]
          %v790 = vld [vmem:[%s570 + $0x20] sm:$0xff]
          %v791 = vld [vmem:[%s570 + $0x28] sm:$0xff]
          %v792 = vld [vmem:[%s570 + $0x30] sm:$0xff]
          %v793 = vld [vmem:[%s570 + $0x38] sm:$0xff]
          %794 = vst.msk [vmem:[#allocation5 + $0x10] sm:$0xff] %vm756, %v786
          %795 = vst.msk [vmem:[#allocation5 + $0x18] sm:$0xff] %vm756, %v787
          %796 = vst.msk [vmem:[#allocation5 + $0x20] sm:$0xff] %vm756, %v788
          %797 = vst.msk [vmem:[#allocation5 + $0x28] sm:$0xff] %vm756, %v789
          %798 = vst.msk [vmem:[#allocation5 + $0x30] sm:$0xff] %vm756, %v790
          %799 = vst.msk [vmem:[#allocation5 + $0x38] sm:$0xff] %vm756, %v791
          %800 = vst.msk [vmem:[#allocation5 + $0x40] sm:$0xff] %vm756, %v792
          %801 = vst.msk [vmem:[#allocation5 + $0x48] sm:$0xff] %vm756, %v793
          %v802 = vld [vmem:[#allocation4 + $0x7] sm:$0xff]
          %v803 = vld [vmem:[#allocation4 + $0xf] sm:$0xff]
          %v804 = vld [vmem:[#allocation4 + $0x17] sm:$0xff]
          %v805 = vld [vmem:[#allocation4 + $0x1f] sm:$0xff]
          %v806 = vld [vmem:[#allocation4 + $0x27] sm:$0xff]
          %v807 = vld [vmem:[#allocation4 + $0x2f] sm:$0xff]
          %v808 = vld [vmem:[#allocation4 + $0x37] sm:$0xff]
          %v809 = vld [vmem:[#allocation4 + $0x3f] sm:$0xff]
          %v810 = vmul.f32 %v802, %v698
          %v811 = vmul.f32 %v803, %v699
          %v812 = vmul.f32 %v804, %v700
          %v813 = vmul.f32 %v805, %v701
          %v814 = vmul.f32 %v806, %v702
          %v815 = vmul.f32 %v807, %v703
          %v816 = vmul.f32 %v808, %v704
          %v817 = vmul.f32 %v809, %v705
          %v818 = vpack.c.bf16 %v811, %v810
          %v819 = vpack.c.bf16 %v813, %v812
          %v820 = vpack.c.bf16 %v815, %v814
          %v821 = vpack.c.bf16 %v817, %v816
          %v822 = vld [vmem:[#allocation10] sm:$0xf]
          %v823 = vld [vmem:[#allocation10 + $0x4] sm:$0xf]
          %v824 = vld [vmem:[#allocation10 + $0x8] sm:$0xf]
          %v825 = vld [vmem:[#allocation10 + $0xc] sm:$0xf]
          %v826 = vld [vmem:[#allocation4 + $0x8] sm:$0xff]
          %v827 = vld [vmem:[#allocation4 + $0x10] sm:$0xff]
          %v828 = vld [vmem:[#allocation4 + $0x18] sm:$0xff]
          %v829 = vld [vmem:[#allocation4 + $0x20] sm:$0xff]
          %v830 = vld [vmem:[#allocation4 + $0x28] sm:$0xff]
          %v831 = vld [vmem:[#allocation4 + $0x30] sm:$0xff]
          %v832 = vld [vmem:[#allocation4 + $0x38] sm:$0xff]
          %v833 = vld [vmem:[#allocation4 + $0x40] sm:$0xff]
          %v834 = vpack.c.bf16 %v827, %v826
          %v835 = vpack.c.bf16 %v829, %v828
          %v836 = vpack.c.bf16 %v831, %v830
          %v837 = vpack.c.bf16 %v833, %v832
          %s838 = scalar_lea.vmem [#allocation10], 16
          %v839 = vld [vmem:[%s838] sm:$0xf]
          %v840 = vld [vmem:[%s838 + $0x4] sm:$0xf]
          %v841 = vld [vmem:[%s838 + $0x8] sm:$0xf]
          %v842 = vld [vmem:[%s838 + $0xc] sm:$0xf]
          %v847 = vunpack.c.l.b16 %v839
          %v848 = vunpack.c.l.b16 %v840
          %v849 = vunpack.c.l.b16 %v841
          %v850 = vunpack.c.l.b16 %v842
          %v851 = vpack.c.b16 %v848, %v847
          %v852 = vpack.c.b16 %v850, %v849
          %v856 = vsel %vm742, %v834, 0
          %v859 = vsel %vm742, %v835, 0
          %v862 = vsel %vm742, %v836, 0
          %v865 = vsel %vm742, %v837, 0
          %867 = vmatprep.subr.bf16.mxu0 0
          %868 = vmatpush1.bf16.msra.mxu0 %v851
          %869 = vmatprep.subr.bf16.mxu0 0
          %870 = vmatpush1.bf16.msra.mxu0 %v852
          %871 = vmatprep.subr.bf16.mxu0 0
          %872 = vmatpush1.bf16.msra.mxu0 0
          %873 = vmatprep.subr.bf16.mxu0 0
          %874 = vmatpush1.bf16.msra.mxu0 0
          %875 = vmatprep.subr.bf16.mxu0 0
          %876 = vmatpush1.bf16.msra.mxu0 0
          %877 = vmatprep.subr.bf16.mxu0 0
          %878 = vmatpush1.bf16.msra.mxu0 0
          %879 = vmatprep.subr.bf16.mxu0 0
          %880 = vmatpush1.bf16.msra.mxu0 0
          %881 = vmatprep.subr.bf16.mxu0 0
          %882 = vmatpush1.bf16.msra.mxu0 0
          %883 = vmatprep.subr.bf16.mxu0 0
          %884 = vmatpush1.bf16.msra.mxu0 0
          %885 = vmatprep.subr.bf16.mxu0 0
          %886 = vmatpush1.bf16.msra.mxu0 0
          %887 = vmatprep.subr.bf16.mxu0 0
          %888 = vmatpush1.bf16.msra.mxu0 0
          %889 = vmatprep.subr.bf16.mxu0 0
          %890 = vmatpush1.bf16.msra.mxu0 0
          %891 = vmatprep.subr.bf16.mxu0 0
          %892 = vmatpush1.bf16.msra.mxu0 0
          %893 = vmatprep.subr.bf16.mxu0 0
          %894 = vmatpush1.bf16.msra.mxu0 0
          %895 = vmatprep.subr.bf16.mxu0 0
          %896 = vmatpush1.bf16.msra.mxu0 0
          %897 = vmatprep.subr.bf16.mxu0 0
          %898 = vmatpush1.bf16.msra.mxu0 0
          %899 = vmatprep.mubr.bf16.mxu0 0
          %900 = vmatmul.mubr.bf16.gmra.mrb[0].mxu0 %v856
          %v901 = vpop.f32.mrb[0].mxu0
          %v902 = vadd.f32 0.0, %v901
          %v903 = vpop.f32.mrb[0].mxu0
          %v904 = vpop.f32.mrb[0].mxu0
          %v905 = vadd.f32 0.0, %v904
          %v906 = vpop.f32.mrb[0].mxu0
          %907 = vmatprep.mubr.bf16.mxu0 0
          %908 = vmatmul.mubr.bf16.gmra.mrb[0].mxu0 %v859
          %v909 = vpop.f32.mrb[0].mxu0
          %v910 = vadd.f32 0.0, %v909
          %v911 = vpop.f32.mrb[0].mxu0
          %v912 = vpop.f32.mrb[0].mxu0
          %v913 = vadd.f32 0.0, %v912
          %v914 = vpop.f32.mrb[0].mxu0
          %915 = vmatprep.mubr.bf16.mxu0 0
          %916 = vmatmul.mubr.bf16.gmra.mrb[0].mxu0 %v862
          %v917 = vpop.f32.mrb[0].mxu0
          %v918 = vadd.f32 0.0, %v917
          %v919 = vpop.f32.mrb[0].mxu0
          %v920 = vpop.f32.mrb[0].mxu0
          %v921 = vadd.f32 0.0, %v920
          %v922 = vpop.f32.mrb[0].mxu0
          %923 = vmatprep.mubr.bf16.mxu0 0
          %924 = vmatmul.mubr.bf16.gmra.mrb[0].mxu0 %v865
          %v925 = vpop.f32.mrb[0].mxu0
          %v926 = vadd.f32 0.0, %v925
          %v927 = vpop.f32.mrb[0].mxu0
          %v928 = vpop.f32.mrb[0].mxu0
          %v929 = vadd.f32 0.0, %v928
          %v930 = vpop.f32.mrb[0].mxu0
          %931 = vdwg.mxu0
          %v936 = vunpack.c.l.b16 %v822
          %v937 = vunpack.c.l.b16 %v823
          %v938 = vunpack.c.l.b16 %v824
          %v939 = vunpack.c.l.b16 %v825
          %v940 = vpack.c.b16 %v937, %v936
          %v941 = vpack.c.b16 %v939, %v938
          %v945 = vsel %vm742, %v818, 0
          %v948 = vsel %vm742, %v819, 0
          %v951 = vsel %vm742, %v820, 0
          %v954 = vsel %vm742, %v821, 0
          %956 = vmatprep.subr.bf16.mxu0 0
          %957 = vmatpush1.bf16.msra.mxu0 %v940
          %958 = vmatprep.subr.bf16.mxu0 0
          %959 = vmatpush1.bf16.msra.mxu0 %v941
          %960 = vmatprep.subr.bf16.mxu0 0
          %961 = vmatpush1.bf16.msra.mxu0 0
          %962 = vmatprep.subr.bf16.mxu0 0
          %963 = vmatpush1.bf16.msra.mxu0 0
          %964 = vmatprep.subr.bf16.mxu0 0
          %965 = vmatpush1.bf16.msra.mxu0 0
          %966 = vmatprep.subr.bf16.mxu0 0
          %967 = vmatpush1.bf16.msra.mxu0 0
          %968 = vmatprep.subr.bf16.mxu0 0
          %969 = vmatpush1.bf16.msra.mxu0 0
          %970 = vmatprep.subr.bf16.mxu0 0
          %971 = vmatpush1.bf16.msra.mxu0 0
          %972 = vmatprep.subr.bf16.mxu0 0
          %973 = vmatpush1.bf16.msra.mxu0 0
          %974 = vmatprep.subr.bf16.mxu0 0
          %975 = vmatpush1.bf16.msra.mxu0 0
          %976 = vmatprep.subr.bf16.mxu0 0
          %977 = vmatpush1.bf16.msra.mxu0 0
          %978 = vmatprep.subr.bf16.mxu0 0
          %979 = vmatpush1.bf16.msra.mxu0 0
          %980 = vmatprep.subr.bf16.mxu0 0
          %981 = vmatpush1.bf16.msra.mxu0 0
          %982 = vmatprep.subr.bf16.mxu0 0
          %983 = vmatpush1.bf16.msra.mxu0 0
          %984 = vmatprep.subr.bf16.mxu0 0
          %985 = vmatpush1.bf16.msra.mxu0 0
          %986 = vmatprep.subr.bf16.mxu0 0
          %987 = vmatpush1.bf16.msra.mxu0 0
          %988 = vmatprep.mubr.bf16.mxu0 0
          %989 = vmatmul.mubr.bf16.gmra.mrb[0].mxu0 %v945
          %v990 = vpop.f32.mrb[0].mxu0
          %v991 = vadd.f32 %v902, %v990
          %v992 = vpop.f32.mrb[0].mxu0
          %v993 = vpop.f32.mrb[0].mxu0
          %v994 = vadd.f32 %v905, %v993
          %v995 = vpop.f32.mrb[0].mxu0
          %996 = vmatprep.mubr.bf16.mxu0 0
          %997 = vmatmul.mubr.bf16.gmra.mrb[0].mxu0 %v948
          %v998 = vpop.f32.mrb[0].mxu0
          %v999 = vadd.f32 %v910, %v998
          %v1000 = vpop.f32.mrb[0].mxu0
          %v1001 = vpop.f32.mrb[0].mxu0
          %v1002 = vadd.f32 %v913, %v1001
          %v1003 = vpop.f32.mrb[0].mxu0
          %1004 = vmatprep.mubr.bf16.mxu0 0
          %1005 = vmatmul.mubr.bf16.gmra.mrb[0].mxu0 %v951
          %v1006 = vpop.f32.mrb[0].mxu0
          %v1007 = vadd.f32 %v918, %v1006
          %v1008 = vpop.f32.mrb[0].mxu0
          %v1009 = vpop.f32.mrb[0].mxu0
          %v1010 = vadd.f32 %v921, %v1009
          %v1011 = vpop.f32.mrb[0].mxu0
          %1012 = vmatprep.mubr.bf16.mxu0 0
          %1013 = vmatmul.mubr.bf16.gmra.mrb[0].mxu0 %v954
          %v1014 = vpop.f32.mrb[0].mxu0
          %v1015 = vadd.f32 %v926, %v1014
          %v1016 = vpop.f32.mrb[0].mxu0
          %v1017 = vpop.f32.mrb[0].mxu0
          %v1018 = vadd.f32 %v929, %v1017
          %v1019 = vpop.f32.mrb[0].mxu0
          %1020 = vdwg.mxu0
          %v1021 = vld [vmem:[#allocation4 + $0x9] sm:$0xff]
          %v1022 = vld [vmem:[#allocation4 + $0x11] sm:$0xff]
          %v1023 = vld [vmem:[#allocation4 + $0x19] sm:$0xff]
          %v1024 = vld [vmem:[#allocation4 + $0x21] sm:$0xff]
          %v1025 = vld [vmem:[#allocation4 + $0x29] sm:$0xff]
          %v1026 = vld [vmem:[#allocation4 + $0x31] sm:$0xff]
          %v1027 = vld [vmem:[#allocation4 + $0x39] sm:$0xff]
          %v1028 = vld [vmem:[#allocation4 + $0x41] sm:$0xff]
          %v1029 = vmul.f32 %v1021, %v722
          %v1030 = vmul.f32 %v1022, %v723
          %v1031 = vmul.f32 %v1023, %v724
          %v1032 = vmul.f32 %v1024, %v725
          %v1033 = vmul.f32 %v1025, %v726
          %v1034 = vmul.f32 %v1026, %v727
          %v1035 = vmul.f32 %v1027, %v728
          %v1036 = vmul.f32 %v1028, %v729
          %v1037 = vpack.c.bf16 %v1030, %v1029
          %v1038 = vpack.c.bf16 %v1032, %v1031
          %v1039 = vpack.c.bf16 %v1034, %v1033
          %v1040 = vpack.c.bf16 %v1036, %v1035
          %s1041 = scalar_lea.vmem [#allocation10], 32
          %v1042 = vld [vmem:[%s1041] sm:$0xf]
          %v1043 = vld [vmem:[%s1041 + $0x4] sm:$0xf]
          %v1044 = vld [vmem:[%s1041 + $0x8] sm:$0xf]
          %v1045 = vld [vmem:[%s1041 + $0xc] sm:$0xf]
          %v1050 = vunpack.c.l.b16 %v1042
          %v1051 = vunpack.c.l.b16 %v1043
          %v1052 = vunpack.c.l.b16 %v1044
          %v1053 = vunpack.c.l.b16 %v1045
          %v1054 = vpack.c.b16 %v1051, %v1050
          %v1055 = vpack.c.b16 %v1053, %v1052
          %v1059 = vsel %vm742, %v1037, 0
          %v1062 = vsel %vm742, %v1038, 0
          %v1065 = vsel %vm742, %v1039, 0
          %v1068 = vsel %vm742, %v1040, 0
          %1070 = vmatprep.subr.bf16.mxu0 0
          %1071 = vmatpush1.bf16.msra.mxu0 %v1054
          %1072 = vmatprep.subr.bf16.mxu0 0
          %1073 = vmatpush1.bf16.msra.mxu0 %v1055
          %1074 = vmatprep.subr.bf16.mxu0 0
          %1075 = vmatpush1.bf16.msra.mxu0 0
          %1076 = vmatprep.subr.bf16.mxu0 0
          %1077 = vmatpush1.bf16.msra.mxu0 0
          %1078 = vmatprep.subr.bf16.mxu0 0
          %1079 = vmatpush1.bf16.msra.mxu0 0
          %1080 = vmatprep.subr.bf16.mxu0 0
          %1081 = vmatpush1.bf16.msra.mxu0 0
          %1082 = vmatprep.subr.bf16.mxu0 0
          %1083 = vmatpush1.bf16.msra.mxu0 0
          %1084 = vmatprep.subr.bf16.mxu0 0
          %1085 = vmatpush1.bf16.msra.mxu0 0
          %1086 = vmatprep.subr.bf16.mxu0 0
          %1087 = vmatpush1.bf16.msra.mxu0 0
          %1088 = vmatprep.subr.bf16.mxu0 0
          %1089 = vmatpush1.bf16.msra.mxu0 0
          %1090 = vmatprep.subr.bf16.mxu0 0
          %1091 = vmatpush1.bf16.msra.mxu0 0
          %1092 = vmatprep.subr.bf16.mxu0 0
          %1093 = vmatpush1.bf16.msra.mxu0 0
          %1094 = vmatprep.subr.bf16.mxu0 0
          %1095 = vmatpush1.bf16.msra.mxu0 0
          %1096 = vmatprep.subr.bf16.mxu0 0
          %1097 = vmatpush1.bf16.msra.mxu0 0
          %1098 = vmatprep.subr.bf16.mxu0 0
          %1099 = vmatpush1.bf16.msra.mxu0 0
          %1100 = vmatprep.subr.bf16.mxu0 0
          %1101 = vmatpush1.bf16.msra.mxu0 0
          %1102 = vmatprep.mubr.bf16.mxu0 0
          %1103 = vmatmul.mubr.bf16.gmra.mrb[0].mxu0 %v1059
          %v1104 = vpop.f32.mrb[0].mxu0
          %v1105 = vadd.f32 0.0, %v1104
          %v1106 = vpop.f32.mrb[0].mxu0
          %v1107 = vpop.f32.mrb[0].mxu0
          %v1108 = vadd.f32 0.0, %v1107
          %v1109 = vpop.f32.mrb[0].mxu0
          %1110 = vmatprep.mubr.bf16.mxu0 0
          %1111 = vmatmul.mubr.bf16.gmra.mrb[0].mxu0 %v1062
          %v1112 = vpop.f32.mrb[0].mxu0
          %v1113 = vadd.f32 0.0, %v1112
          %v1114 = vpop.f32.mrb[0].mxu0
          %v1115 = vpop.f32.mrb[0].mxu0
          %v1116 = vadd.f32 0.0, %v1115
          %v1117 = vpop.f32.mrb[0].mxu0
          %1118 = vmatprep.mubr.bf16.mxu0 0
          %1119 = vmatmul.mubr.bf16.gmra.mrb[0].mxu0 %v1065
          %v1120 = vpop.f32.mrb[0].mxu0
          %v1121 = vadd.f32 0.0, %v1120
          %v1122 = vpop.f32.mrb[0].mxu0
          %v1123 = vpop.f32.mrb[0].mxu0
          %v1124 = vadd.f32 0.0, %v1123
          %v1125 = vpop.f32.mrb[0].mxu0
          %1126 = vmatprep.mubr.bf16.mxu0 0
          %1127 = vmatmul.mubr.bf16.gmra.mrb[0].mxu0 %v1068
          %v1128 = vpop.f32.mrb[0].mxu0
          %v1129 = vadd.f32 0.0, %v1128
          %v1130 = vpop.f32.mrb[0].mxu0
          %v1131 = vpop.f32.mrb[0].mxu0
          %v1132 = vadd.f32 0.0, %v1131
          %v1133 = vpop.f32.mrb[0].mxu0
          %1134 = vdwg.mxu0
          %v1135 = vadd.f32 %v991, %v1105
          %v1136 = vadd.f32 %v994, %v1108
          %v1137 = vadd.f32 %v999, %v1113
          %v1138 = vadd.f32 %v1002, %v1116
          %v1139 = vadd.f32 %v1007, %v1121
          %v1140 = vadd.f32 %v1010, %v1124
          %v1141 = vadd.f32 %v1015, %v1129
          %v1142 = vadd.f32 %v1018, %v1132
          %v1143 = vld [vmem:[#allocation4 + $0xf] sm:$0xff]
          %v1144 = vld [vmem:[#allocation4 + $0x17] sm:$0xff]
          %v1145 = vld [vmem:[#allocation4 + $0x1f] sm:$0xff]
          %v1146 = vld [vmem:[#allocation4 + $0x27] sm:$0xff]
          %v1147 = vld [vmem:[#allocation4 + $0x2f] sm:$0xff]
          %v1148 = vld [vmem:[#allocation4 + $0x37] sm:$0xff]
          %v1149 = vld [vmem:[#allocation4 + $0x3f] sm:$0xff]
          %v1150 = vld [vmem:[#allocation4 + $0x47] sm:$0xff]
          %v1151 = vmul.f32 %v1143, %v698
          %v1152 = vmul.f32 %v1144, %v699
          %v1153 = vmul.f32 %v1145, %v700
          %v1154 = vmul.f32 %v1146, %v701
          %v1155 = vmul.f32 %v1147, %v702
          %v1156 = vmul.f32 %v1148, %v703
          %v1157 = vmul.f32 %v1149, %v704
          %v1158 = vmul.f32 %v1150, %v705
          %v1159 = vpack.c.bf16 %v1152, %v1151
          %v1160 = vpack.c.bf16 %v1154, %v1153
          %v1161 = vpack.c.bf16 %v1156, %v1155
          %v1162 = vpack.c.bf16 %v1158, %v1157
          %s1163 = scalar_lea.vmem [#allocation10], 48
          %v1164 = vld [vmem:[%s1163] sm:$0xf]
          %v1165 = vld [vmem:[%s1163 + $0x4] sm:$0xf]
          %v1166 = vld [vmem:[%s1163 + $0x8] sm:$0xf]
          %v1167 = vld [vmem:[%s1163 + $0xc] sm:$0xf]
          %v1172 = vunpack.c.l.b16 %v1164
          %v1173 = vunpack.c.l.b16 %v1165
          %v1174 = vunpack.c.l.b16 %v1166
          %v1175 = vunpack.c.l.b16 %v1167
          %v1176 = vpack.c.b16 %v1173, %v1172
          %v1177 = vpack.c.b16 %v1175, %v1174
          %v1181 = vsel %vm742, %v1159, 0
          %v1184 = vsel %vm742, %v1160, 0
          %v1187 = vsel %vm742, %v1161, 0
          %v1190 = vsel %vm742, %v1162, 0
          %1192 = vmatprep.subr.bf16.mxu0 0
          %1193 = vmatpush1.bf16.msra.mxu0 %v1176
          %1194 = vmatprep.subr.bf16.mxu0 0
          %1195 = vmatpush1.bf16.msra.mxu0 %v1177
          %1196 = vmatprep.subr.bf16.mxu0 0
          %1197 = vmatpush1.bf16.msra.mxu0 0
          %1198 = vmatprep.subr.bf16.mxu0 0
          %1199 = vmatpush1.bf16.msra.mxu0 0
          %1200 = vmatprep.subr.bf16.mxu0 0
          %1201 = vmatpush1.bf16.msra.mxu0 0
          %1202 = vmatprep.subr.bf16.mxu0 0
          %1203 = vmatpush1.bf16.msra.mxu0 0
          %1204 = vmatprep.subr.bf16.mxu0 0
          %1205 = vmatpush1.bf16.msra.mxu0 0
          %1206 = vmatprep.subr.bf16.mxu0 0
          %1207 = vmatpush1.bf16.msra.mxu0 0
          %1208 = vmatprep.subr.bf16.mxu0 0
          %1209 = vmatpush1.bf16.msra.mxu0 0
          %1210 = vmatprep.subr.bf16.mxu0 0
          %1211 = vmatpush1.bf16.msra.mxu0 0
          %1212 = vmatprep.subr.bf16.mxu0 0
          %1213 = vmatpush1.bf16.msra.mxu0 0
          %1214 = vmatprep.subr.bf16.mxu0 0
          %1215 = vmatpush1.bf16.msra.mxu0 0
          %1216 = vmatprep.subr.bf16.mxu0 0
          %1217 = vmatpush1.bf16.msra.mxu0 0
          %1218 = vmatprep.subr.bf16.mxu0 0
          %1219 = vmatpush1.bf16.msra.mxu0 0
          %1220 = vmatprep.subr.bf16.mxu0 0
          %1221 = vmatpush1.bf16.msra.mxu0 0
          %1222 = vmatprep.subr.bf16.mxu0 0
          %1223 = vmatpush1.bf16.msra.mxu0 0
          %1224 = vmatprep.mubr.bf16.mxu0 0
          %1225 = vmatmul.mubr.bf16.gmra.mrb[0].mxu0 %v1181
          %v1226 = vpop.f32.mrb[0].mxu0
          %v1227 = vadd.f32 0.0, %v1226
          %v1228 = vpop.f32.mrb[0].mxu0
          %v1229 = vpop.f32.mrb[0].mxu0
          %v1230 = vadd.f32 0.0, %v1229
          %v1231 = vpop.f32.mrb[0].mxu0
          %1232 = vmatprep.mubr.bf16.mxu0 0
          %1233 = vmatmul.mubr.bf16.gmra.mrb[0].mxu0 %v1184
          %v1234 = vpop.f32.mrb[0].mxu0
          %v1235 = vadd.f32 0.0, %v1234
          %v1236 = vpop.f32.mrb[0].mxu0
          %v1237 = vpop.f32.mrb[0].mxu0
          %v1238 = vadd.f32 0.0, %v1237
          %v1239 = vpop.f32.mrb[0].mxu0
          %1240 = vmatprep.mubr.bf16.mxu0 0
          %1241 = vmatmul.mubr.bf16.gmra.mrb[0].mxu0 %v1187
          %v1242 = vpop.f32.mrb[0].mxu0
          %v1243 = vadd.f32 0.0, %v1242
          %v1244 = vpop.f32.mrb[0].mxu0
          %v1245 = vpop.f32.mrb[0].mxu0
          %v1246 = vadd.f32 0.0, %v1245
          %v1247 = vpop.f32.mrb[0].mxu0
          %1248 = vmatprep.mubr.bf16.mxu0 0
          %1249 = vmatmul.mubr.bf16.gmra.mrb[0].mxu0 %v1190
          %v1250 = vpop.f32.mrb[0].mxu0
          %v1251 = vadd.f32 0.0, %v1250
          %v1252 = vpop.f32.mrb[0].mxu0
          %v1253 = vpop.f32.mrb[0].mxu0
          %v1254 = vadd.f32 0.0, %v1253
          %v1255 = vpop.f32.mrb[0].mxu0
          %1256 = vdwg.mxu0
          %v1257 = vadd.f32 %v1135, %v1227
          %v1258 = vadd.f32 %v1136, %v1230
          %v1259 = vadd.f32 %v1137, %v1235
          %v1260 = vadd.f32 %v1138, %v1238
          %v1261 = vadd.f32 %v1139, %v1243
          %v1262 = vadd.f32 %v1140, %v1246
          %v1263 = vadd.f32 %v1141, %v1251
          %v1264 = vadd.f32 %v1142, %v1254
          %v1265 = vld [vmem:[#allocation4 + $0x10] sm:$0xff]
          %v1266 = vld [vmem:[#allocation4 + $0x18] sm:$0xff]
          %v1267 = vld [vmem:[#allocation4 + $0x20] sm:$0xff]
          %v1268 = vld [vmem:[#allocation4 + $0x28] sm:$0xff]
          %v1269 = vld [vmem:[#allocation4 + $0x30] sm:$0xff]
          %v1270 = vld [vmem:[#allocation4 + $0x38] sm:$0xff]
          %v1271 = vld [vmem:[#allocation4 + $0x40] sm:$0xff]
          %v1272 = vld [vmem:[#allocation4 + $0x48] sm:$0xff]
          %v1273 = vpack.c.bf16 %v1266, %v1265
          %v1274 = vpack.c.bf16 %v1268, %v1267
          %v1275 = vpack.c.bf16 %v1270, %v1269
          %v1276 = vpack.c.bf16 %v1272, %v1271
          %s1277 = scalar_lea.vmem [#allocation10], 64
          %v1278 = vld [vmem:[%s1277] sm:$0xf]
          %v1279 = vld [vmem:[%s1277 + $0x4] sm:$0xf]
          %v1280 = vld [vmem:[%s1277 + $0x8] sm:$0xf]
          %v1281 = vld [vmem:[%s1277 + $0xc] sm:$0xf]
          %v1286 = vunpack.c.l.b16 %v1278
          %v1287 = vunpack.c.l.b16 %v1279
          %v1288 = vunpack.c.l.b16 %v1280
          %v1289 = vunpack.c.l.b16 %v1281
          %v1290 = vpack.c.b16 %v1287, %v1286
          %v1291 = vpack.c.b16 %v1289, %v1288
          %v1295 = vsel %vm742, %v1273, 0
          %v1298 = vsel %vm742, %v1274, 0
          %v1301 = vsel %vm742, %v1275, 0
          %v1304 = vsel %vm742, %v1276, 0
          %1306 = vmatprep.subr.bf16.mxu0 0
          %1307 = vmatpush1.bf16.msra.mxu0 %v1290
          %1308 = vmatprep.subr.bf16.mxu0 0
          %1309 = vmatpush1.bf16.msra.mxu0 %v1291
          %1310 = vmatprep.subr.bf16.mxu0 0
          %1311 = vmatpush1.bf16.msra.mxu0 0
          %1312 = vmatprep.subr.bf16.mxu0 0
          %1313 = vmatpush1.bf16.msra.mxu0 0
          %1314 = vmatprep.subr.bf16.mxu0 0
          %1315 = vmatpush1.bf16.msra.mxu0 0
          %1316 = vmatprep.subr.bf16.mxu0 0
          %1317 = vmatpush1.bf16.msra.mxu0 0
          %1318 = vmatprep.subr.bf16.mxu0 0
          %1319 = vmatpush1.bf16.msra.mxu0 0
          %1320 = vmatprep.subr.bf16.mxu0 0
          %1321 = vmatpush1.bf16.msra.mxu0 0
          %1322 = vmatprep.subr.bf16.mxu0 0
          %1323 = vmatpush1.bf16.msra.mxu0 0
          %1324 = vmatprep.subr.bf16.mxu0 0
          %1325 = vmatpush1.bf16.msra.mxu0 0
          %1326 = vmatprep.subr.bf16.mxu0 0
          %1327 = vmatpush1.bf16.msra.mxu0 0
          %1328 = vmatprep.subr.bf16.mxu0 0
          %1329 = vmatpush1.bf16.msra.mxu0 0
          %1330 = vmatprep.subr.bf16.mxu0 0
          %1331 = vmatpush1.bf16.msra.mxu0 0
          %1332 = vmatprep.subr.bf16.mxu0 0
          %1333 = vmatpush1.bf16.msra.mxu0 0
          %1334 = vmatprep.subr.bf16.mxu0 0
          %1335 = vmatpush1.bf16.msra.mxu0 0
          %1336 = vmatprep.subr.bf16.mxu0 0
          %1337 = vmatpush1.bf16.msra.mxu0 0
          %1338 = vmatprep.mubr.bf16.mxu0 0
          %1339 = vmatmul.mubr.bf16.gmra.mrb[0].mxu0 %v1295
          %v1340 = vpop.f32.mrb[0].mxu0
          %v1341 = vadd.f32 0.0, %v1340
          %v1342 = vpop.f32.mrb[0].mxu0
          %v1343 = vpop.f32.mrb[0].mxu0
          %v1344 = vadd.f32 0.0, %v1343
          %v1345 = vpop.f32.mrb[0].mxu0
          %1346 = vmatprep.mubr.bf16.mxu0 0
          %1347 = vmatmul.mubr.bf16.gmra.mrb[0].mxu0 %v1298
          %v1348 = vpop.f32.mrb[0].mxu0
          %v1349 = vadd.f32 0.0, %v1348
          %v1350 = vpop.f32.mrb[0].mxu0
          %v1351 = vpop.f32.mrb[0].mxu0
          %v1352 = vadd.f32 0.0, %v1351
          %v1353 = vpop.f32.mrb[0].mxu0
          %1354 = vmatprep.mubr.bf16.mxu0 0
          %1355 = vmatmul.mubr.bf16.gmra.mrb[0].mxu0 %v1301
          %v1356 = vpop.f32.mrb[0].mxu0
          %v1357 = vadd.f32 0.0, %v1356
          %v1358 = vpop.f32.mrb[0].mxu0
          %v1359 = vpop.f32.mrb[0].mxu0
          %v1360 = vadd.f32 0.0, %v1359
          %v1361 = vpop.f32.mrb[0].mxu0
          %1362 = vmatprep.mubr.bf16.mxu0 0
          %1363 = vmatmul.mubr.bf16.gmra.mrb[0].mxu0 %v1304
          %v1364 = vpop.f32.mrb[0].mxu0
          %v1365 = vadd.f32 0.0, %v1364
          %v1366 = vpop.f32.mrb[0].mxu0
          %v1367 = vpop.f32.mrb[0].mxu0
          %v1368 = vadd.f32 0.0, %v1367
          %v1369 = vpop.f32.mrb[0].mxu0
          %1370 = vdwg.mxu0
          %v1371 = vadd.f32 %v1257, %v1341
          %v1372 = vadd.f32 %v1258, %v1344
          %v1373 = vadd.f32 %v1259, %v1349
          %v1374 = vadd.f32 %v1260, %v1352
          %v1375 = vadd.f32 %v1261, %v1357
          %v1376 = vadd.f32 %v1262, %v1360
          %v1377 = vadd.f32 %v1263, %v1365
          %v1378 = vadd.f32 %v1264, %v1368
          %v1379 = vld [vmem:[#allocation4 + $0x11] sm:$0xff]
          %v1380 = vld [vmem:[#allocation4 + $0x19] sm:$0xff]
          %v1381 = vld [vmem:[#allocation4 + $0x21] sm:$0xff]
          %v1382 = vld [vmem:[#allocation4 + $0x29] sm:$0xff]
          %v1383 = vld [vmem:[#allocation4 + $0x31] sm:$0xff]
          %v1384 = vld [vmem:[#allocation4 + $0x39] sm:$0xff]
          %v1385 = vld [vmem:[#allocation4 + $0x41] sm:$0xff]
          %v1386 = vld [vmem:[#allocation4 + $0x49] sm:$0xff]
          %v1387 = vmul.f32 %v1379, %v722
          %v1388 = vmul.f32 %v1380, %v723
          %v1389 = vmul.f32 %v1381, %v724
          %v1390 = vmul.f32 %v1382, %v725
          %v1391 = vmul.f32 %v1383, %v726
          %v1392 = vmul.f32 %v1384, %v727
          %v1393 = vmul.f32 %v1385, %v728
          %v1394 = vmul.f32 %v1386, %v729
          %v1395 = vpack.c.bf16 %v1388, %v1387
          %v1396 = vpack.c.bf16 %v1390, %v1389
          %v1397 = vpack.c.bf16 %v1392, %v1391
          %v1398 = vpack.c.bf16 %v1394, %v1393
          %s1399 = scalar_lea.vmem [#allocation10], 80
          %v1400 = vld [vmem:[%s1399] sm:$0xf]
          %v1401 = vld [vmem:[%s1399 + $0x4] sm:$0xf]
          %v1402 = vld [vmem:[%s1399 + $0x8] sm:$0xf]
          %v1403 = vld [vmem:[%s1399 + $0xc] sm:$0xf]
          %v1408 = vunpack.c.l.b16 %v1400
          %v1409 = vunpack.c.l.b16 %v1401
          %v1410 = vunpack.c.l.b16 %v1402
          %v1411 = vunpack.c.l.b16 %v1403
          %v1412 = vpack.c.b16 %v1409, %v1408
          %v1413 = vpack.c.b16 %v1411, %v1410
          %v1417 = vsel %vm742, %v1395, 0
          %v1420 = vsel %vm742, %v1396, 0
          %v1423 = vsel %vm742, %v1397, 0
          %v1426 = vsel %vm742, %v1398, 0
          %1428 = vmatprep.subr.bf16.mxu0 0
          %1429 = vmatpush1.bf16.msra.mxu0 %v1412
          %1430 = vmatprep.subr.bf16.mxu0 0
          %1431 = vmatpush1.bf16.msra.mxu0 %v1413
          %1432 = vmatprep.subr.bf16.mxu0 0
          %1433 = vmatpush1.bf16.msra.mxu0 0
          %1434 = vmatprep.subr.bf16.mxu0 0
          %1435 = vmatpush1.bf16.msra.mxu0 0
          %1436 = vmatprep.subr.bf16.mxu0 0
          %1437 = vmatpush1.bf16.msra.mxu0 0
          %1438 = vmatprep.subr.bf16.mxu0 0
          %1439 = vmatpush1.bf16.msra.mxu0 0
          %1440 = vmatprep.subr.bf16.mxu0 0
          %1441 = vmatpush1.bf16.msra.mxu0 0
          %1442 = vmatprep.subr.bf16.mxu0 0
          %1443 = vmatpush1.bf16.msra.mxu0 0
          %1444 = vmatprep.subr.bf16.mxu0 0
          %1445 = vmatpush1.bf16.msra.mxu0 0
          %1446 = vmatprep.subr.bf16.mxu0 0
          %1447 = vmatpush1.bf16.msra.mxu0 0
          %1448 = vmatprep.subr.bf16.mxu0 0
          %1449 = vmatpush1.bf16.msra.mxu0 0
          %1450 = vmatprep.subr.bf16.mxu0 0
          %1451 = vmatpush1.bf16.msra.mxu0 0
          %1452 = vmatprep.subr.bf16.mxu0 0
          %1453 = vmatpush1.bf16.msra.mxu0 0
          %1454 = vmatprep.subr.bf16.mxu0 0
          %1455 = vmatpush1.bf16.msra.mxu0 0
          %1456 = vmatprep.subr.bf16.mxu0 0
          %1457 = vmatpush1.bf16.msra.mxu0 0
          %1458 = vmatprep.subr.bf16.mxu0 0
          %1459 = vmatpush1.bf16.msra.mxu0 0
          %1460 = vmatprep.mubr.bf16.mxu0 0
          %1461 = vmatmul.mubr.bf16.gmra.mrb[0].mxu0 %v1417
          %v1462 = vpop.f32.mrb[0].mxu0
          %v1463 = vadd.f32 0.0, %v1462
          %v1464 = vpop.f32.mrb[0].mxu0
          %v1465 = vpop.f32.mrb[0].mxu0
          %v1466 = vadd.f32 0.0, %v1465
          %v1467 = vpop.f32.mrb[0].mxu0
          %1468 = vmatprep.mubr.bf16.mxu0 0
          %1469 = vmatmul.mubr.bf16.gmra.mrb[0].mxu0 %v1420
          %v1470 = vpop.f32.mrb[0].mxu0
          %v1471 = vadd.f32 0.0, %v1470
          %v1472 = vpop.f32.mrb[0].mxu0
          %v1473 = vpop.f32.mrb[0].mxu0
          %v1474 = vadd.f32 0.0, %v1473
          %v1475 = vpop.f32.mrb[0].mxu0
          %1476 = vmatprep.mubr.bf16.mxu0 0
          %1477 = vmatmul.mubr.bf16.gmra.mrb[0].mxu0 %v1423
          %v1478 = vpop.f32.mrb[0].mxu0
          %v1479 = vadd.f32 0.0, %v1478
          %v1480 = vpop.f32.mrb[0].mxu0
          %v1481 = vpop.f32.mrb[0].mxu0
          %v1482 = vadd.f32 0.0, %v1481
          %v1483 = vpop.f32.mrb[0].mxu0
          %1484 = vmatprep.mubr.bf16.mxu0 0
          %1485 = vmatmul.mubr.bf16.gmra.mrb[0].mxu0 %v1426
          %v1486 = vpop.f32.mrb[0].mxu0
          %v1487 = vadd.f32 0.0, %v1486
          %v1488 = vpop.f32.mrb[0].mxu0
          %v1489 = vpop.f32.mrb[0].mxu0
          %v1490 = vadd.f32 0.0, %v1489
          %v1491 = vpop.f32.mrb[0].mxu0
          %1492 = vdwg.mxu0
          %v1493 = vadd.f32 %v1371, %v1463
          %v1494 = vadd.f32 %v1372, %v1466
          %v1495 = vadd.f32 %v1373, %v1471
          %v1496 = vadd.f32 %v1374, %v1474
          %v1497 = vadd.f32 %v1375, %v1479
          %v1498 = vadd.f32 %v1376, %v1482
          %v1499 = vadd.f32 %v1377, %v1487
          %v1500 = vadd.f32 %v1378, %v1490
          %v1501 = vld [vmem:[#allocation4 + $0x17] sm:$0xff]
          %v1502 = vld [vmem:[#allocation4 + $0x1f] sm:$0xff]
          %v1503 = vld [vmem:[#allocation4 + $0x27] sm:$0xff]
          %v1504 = vld [vmem:[#allocation4 + $0x2f] sm:$0xff]
          %v1505 = vld [vmem:[#allocation4 + $0x37] sm:$0xff]
          %v1506 = vld [vmem:[#allocation4 + $0x3f] sm:$0xff]
          %v1507 = vld [vmem:[#allocation4 + $0x47] sm:$0xff]
          %v1508 = vld [vmem:[#allocation4 + $0x4f] sm:$0xff]
          %v1509 = vmul.f32 %v1501, %v698
          %v1510 = vmul.f32 %v1502, %v699
          %v1511 = vmul.f32 %v1503, %v700
          %v1512 = vmul.f32 %v1504, %v701
          %v1513 = vmul.f32 %v1505, %v702
          %v1514 = vmul.f32 %v1506, %v703
          %v1515 = vmul.f32 %v1507, %v704
          %v1516 = vmul.f32 %v1508, %v705
          %v1517 = vpack.c.bf16 %v1510, %v1509
          %v1518 = vpack.c.bf16 %v1512, %v1511
          %v1519 = vpack.c.bf16 %v1514, %v1513
          %v1520 = vpack.c.bf16 %v1516, %v1515
          %s1521 = scalar_lea.vmem [#allocation10], 96
          %v1522 = vld [vmem:[%s1521] sm:$0xf]
          %v1523 = vld [vmem:[%s1521 + $0x4] sm:$0xf]
          %v1524 = vld [vmem:[%s1521 + $0x8] sm:$0xf]
          %v1525 = vld [vmem:[%s1521 + $0xc] sm:$0xf]
          %v1530 = vunpack.c.l.b16 %v1522
          %v1531 = vunpack.c.l.b16 %v1523
          %v1532 = vunpack.c.l.b16 %v1524
          %v1533 = vunpack.c.l.b16 %v1525
          %v1534 = vpack.c.b16 %v1531, %v1530
          %v1535 = vpack.c.b16 %v1533, %v1532
          %v1539 = vsel %vm742, %v1517, 0
          %v1542 = vsel %vm742, %v1518, 0
          %v1545 = vsel %vm742, %v1519, 0
          %v1548 = vsel %vm742, %v1520, 0
          %1550 = vmatprep.subr.bf16.mxu0 0
          %1551 = vmatpush1.bf16.msra.mxu0 %v1534
          %1552 = vmatprep.subr.bf16.mxu0 0
          %1553 = vmatpush1.bf16.msra.mxu0 %v1535
          %1554 = vmatprep.subr.bf16.mxu0 0
          %1555 = vmatpush1.bf16.msra.mxu0 0
          %1556 = vmatprep.subr.bf16.mxu0 0
          %1557 = vmatpush1.bf16.msra.mxu0 0
          %1558 = vmatprep.subr.bf16.mxu0 0
          %1559 = vmatpush1.bf16.msra.mxu0 0
          %1560 = vmatprep.subr.bf16.mxu0 0
          %1561 = vmatpush1.bf16.msra.mxu0 0
          %1562 = vmatprep.subr.bf16.mxu0 0
          %1563 = vmatpush1.bf16.msra.mxu0 0
          %1564 = vmatprep.subr.bf16.mxu0 0
          %1565 = vmatpush1.bf16.msra.mxu0 0
          %1566 = vmatprep.subr.bf16.mxu0 0
          %1567 = vmatpush1.bf16.msra.mxu0 0
          %1568 = vmatprep.subr.bf16.mxu0 0
          %1569 = vmatpush1.bf16.msra.mxu0 0
          %1570 = vmatprep.subr.bf16.mxu0 0
          %1571 = vmatpush1.bf16.msra.mxu0 0
          %1572 = vmatprep.subr.bf16.mxu0 0
          %1573 = vmatpush1.bf16.msra.mxu0 0
          %1574 = vmatprep.subr.bf16.mxu0 0
          %1575 = vmatpush1.bf16.msra.mxu0 0
          %1576 = vmatprep.subr.bf16.mxu0 0
          %1577 = vmatpush1.bf16.msra.mxu0 0
          %1578 = vmatprep.subr.bf16.mxu0 0
          %1579 = vmatpush1.bf16.msra.mxu0 0
          %1580 = vmatprep.subr.bf16.mxu0 0
          %1581 = vmatpush1.bf16.msra.mxu0 0
          %1582 = vmatprep.mubr.bf16.mxu0 0
          %1583 = vmatmul.mubr.bf16.gmra.mrb[0].mxu0 %v1539
          %v1584 = vpop.f32.mrb[0].mxu0
          %v1585 = vadd.f32 0.0, %v1584
          %v1586 = vpop.f32.mrb[0].mxu0
          %v1587 = vpop.f32.mrb[0].mxu0
          %v1588 = vadd.f32 0.0, %v1587
          %v1589 = vpop.f32.mrb[0].mxu0
          %1590 = vmatprep.mubr.bf16.mxu0 0
          %1591 = vmatmul.mubr.bf16.gmra.mrb[0].mxu0 %v1542
          %v1592 = vpop.f32.mrb[0].mxu0
          %v1593 = vadd.f32 0.0, %v1592
          %v1594 = vpop.f32.mrb[0].mxu0
          %v1595 = vpop.f32.mrb[0].mxu0
          %v1596 = vadd.f32 0.0, %v1595
          %v1597 = vpop.f32.mrb[0].mxu0
          %1598 = vmatprep.mubr.bf16.mxu0 0
          %1599 = vmatmul.mubr.bf16.gmra.mrb[0].mxu0 %v1545
          %v1600 = vpop.f32.mrb[0].mxu0
          %v1601 = vadd.f32 0.0, %v1600
          %v1602 = vpop.f32.mrb[0].mxu0
          %v1603 = vpop.f32.mrb[0].mxu0
          %v1604 = vadd.f32 0.0, %v1603
          %v1605 = vpop.f32.mrb[0].mxu0
          %1606 = vmatprep.mubr.bf16.mxu0 0
          %1607 = vmatmul.mubr.bf16.gmra.mrb[0].mxu0 %v1548
          %v1608 = vpop.f32.mrb[0].mxu0
          %v1609 = vadd.f32 0.0, %v1608
          %v1610 = vpop.f32.mrb[0].mxu0
          %v1611 = vpop.f32.mrb[0].mxu0
          %v1612 = vadd.f32 0.0, %v1611
          %v1613 = vpop.f32.mrb[0].mxu0
          %1614 = vdwg.mxu0
          %v1615 = vadd.f32 %v1493, %v1585
          %v1616 = vadd.f32 %v1494, %v1588
          %v1617 = vadd.f32 %v1495, %v1593
          %v1618 = vadd.f32 %v1496, %v1596
          %v1619 = vadd.f32 %v1497, %v1601
          %v1620 = vadd.f32 %v1498, %v1604
          %v1621 = vadd.f32 %v1499, %v1609
          %v1622 = vadd.f32 %v1500, %v1612
          %v1623 = vld [vmem:[#allocation4 + $0x18] sm:$0xff]
          %v1624 = vld [vmem:[#allocation4 + $0x20] sm:$0xff]
          %v1625 = vld [vmem:[#allocation4 + $0x28] sm:$0xff]
          %v1626 = vld [vmem:[#allocation4 + $0x30] sm:$0xff]
          %v1627 = vld [vmem:[#allocation4 + $0x38] sm:$0xff]
          %v1628 = vld [vmem:[#allocation4 + $0x40] sm:$0xff]
          %v1629 = vld [vmem:[#allocation4 + $0x48] sm:$0xff]
          %v1630 = vld [vmem:[#allocation4 + $0x50] sm:$0xff]
          %v1631 = vpack.c.bf16 %v1624, %v1623
          %v1632 = vpack.c.bf16 %v1626, %v1625
          %v1633 = vpack.c.bf16 %v1628, %v1627
          %v1634 = vpack.c.bf16 %v1630, %v1629
          %s1635 = scalar_lea.vmem [#allocation10], 112
          %v1636 = vld [vmem:[%s1635] sm:$0xf]
          %v1637 = vld [vmem:[%s1635 + $0x4] sm:$0xf]
          %v1638 = vld [vmem:[%s1635 + $0x8] sm:$0xf]
          %v1639 = vld [vmem:[%s1635 + $0xc] sm:$0xf]
          %v1644 = vunpack.c.l.b16 %v1636
          %v1645 = vunpack.c.l.b16 %v1637
          %v1646 = vunpack.c.l.b16 %v1638
          %v1647 = vunpack.c.l.b16 %v1639
          %v1648 = vpack.c.b16 %v1645, %v1644
          %v1649 = vpack.c.b16 %v1647, %v1646
          %v1653 = vsel %vm742, %v1631, 0
          %v1656 = vsel %vm742, %v1632, 0
          %v1659 = vsel %vm742, %v1633, 0
          %v1662 = vsel %vm742, %v1634, 0
          %1664 = vmatprep.subr.bf16.mxu0 0
          %1665 = vmatpush1.bf16.msra.mxu0 %v1648
          %1666 = vmatprep.subr.bf16.mxu0 0
          %1667 = vmatpush1.bf16.msra.mxu0 %v1649
          %1668 = vmatprep.subr.bf16.mxu0 0
          %1669 = vmatpush1.bf16.msra.mxu0 0
          %1670 = vmatprep.subr.bf16.mxu0 0
          %1671 = vmatpush1.bf16.msra.mxu0 0
          %1672 = vmatprep.subr.bf16.mxu0 0
          %1673 = vmatpush1.bf16.msra.mxu0 0
          %1674 = vmatprep.subr.bf16.mxu0 0
          %1675 = vmatpush1.bf16.msra.mxu0 0
          %1676 = vmatprep.subr.bf16.mxu0 0
          %1677 = vmatpush1.bf16.msra.mxu0 0
          %1678 = vmatprep.subr.bf16.mxu0 0
          %1679 = vmatpush1.bf16.msra.mxu0 0
          %1680 = vmatprep.subr.bf16.mxu0 0
          %1681 = vmatpush1.bf16.msra.mxu0 0
          %1682 = vmatprep.subr.bf16.mxu0 0
          %1683 = vmatpush1.bf16.msra.mxu0 0
          %1684 = vmatprep.subr.bf16.mxu0 0
          %1685 = vmatpush1.bf16.msra.mxu0 0
          %1686 = vmatprep.subr.bf16.mxu0 0
          %1687 = vmatpush1.bf16.msra.mxu0 0
          %1688 = vmatprep.subr.bf16.mxu0 0
          %1689 = vmatpush1.bf16.msra.mxu0 0
          %1690 = vmatprep.subr.bf16.mxu0 0
          %1691 = vmatpush1.bf16.msra.mxu0 0
          %1692 = vmatprep.subr.bf16.mxu0 0
          %1693 = vmatpush1.bf16.msra.mxu0 0
          %1694 = vmatprep.subr.bf16.mxu0 0
          %1695 = vmatpush1.bf16.msra.mxu0 0
          %1696 = vmatprep.mubr.bf16.mxu0 0
          %1697 = vmatmul.mubr.bf16.gmra.mrb[0].mxu0 %v1653
          %v1698 = vpop.f32.mrb[0].mxu0
          %v1699 = vadd.f32 0.0, %v1698
          %v1700 = vpop.f32.mrb[0].mxu0
          %v1701 = vpop.f32.mrb[0].mxu0
          %v1702 = vadd.f32 0.0, %v1701
          %v1703 = vpop.f32.mrb[0].mxu0
          %1704 = vmatprep.mubr.bf16.mxu0 0
          %1705 = vmatmul.mubr.bf16.gmra.mrb[0].mxu0 %v1656
          %v1706 = vpop.f32.mrb[0].mxu0
          %v1707 = vadd.f32 0.0, %v1706
          %v1708 = vpop.f32.mrb[0].mxu0
          %v1709 = vpop.f32.mrb[0].mxu0
          %v1710 = vadd.f32 0.0, %v1709
          %v1711 = vpop.f32.mrb[0].mxu0
          %1712 = vmatprep.mubr.bf16.mxu0 0
          %1713 = vmatmul.mubr.bf16.gmra.mrb[0].mxu0 %v1659
          %v1714 = vpop.f32.mrb[0].mxu0
          %v1715 = vadd.f32 0.0, %v1714
          %v1716 = vpop.f32.mrb[0].mxu0
          %v1717 = vpop.f32.mrb[0].mxu0
          %v1718 = vadd.f32 0.0, %v1717
          %v1719 = vpop.f32.mrb[0].mxu0
          %1720 = vmatprep.mubr.bf16.mxu0 0
          %1721 = vmatmul.mubr.bf16.gmra.mrb[0].mxu0 %v1662
          %v1722 = vpop.f32.mrb[0].mxu0
          %v1723 = vadd.f32 0.0, %v1722
          %v1724 = vpop.f32.mrb[0].mxu0
          %v1725 = vpop.f32.mrb[0].mxu0
          %v1726 = vadd.f32 0.0, %v1725
          %v1727 = vpop.f32.mrb[0].mxu0
          %1728 = vdwg.mxu0
          %v1729 = vadd.f32 %v1615, %v1699
          %v1730 = vadd.f32 %v1616, %v1702
          %v1731 = vadd.f32 %v1617, %v1707
          %v1732 = vadd.f32 %v1618, %v1710
          %v1733 = vadd.f32 %v1619, %v1715
          %v1734 = vadd.f32 %v1620, %v1718
          %v1735 = vadd.f32 %v1621, %v1723
          %v1736 = vadd.f32 %v1622, %v1726
          %v1737 = vld [vmem:[#allocation4 + $0x19] sm:$0xff]
          %v1738 = vld [vmem:[#allocation4 + $0x21] sm:$0xff]
          %v1739 = vld [vmem:[#allocation4 + $0x29] sm:$0xff]
          %v1740 = vld [vmem:[#allocation4 + $0x31] sm:$0xff]
          %v1741 = vld [vmem:[#allocation4 + $0x39] sm:$0xff]
          %v1742 = vld [vmem:[#allocation4 + $0x41] sm:$0xff]
          %v1743 = vld [vmem:[#allocation4 + $0x49] sm:$0xff]
          %v1744 = vld [vmem:[#allocation4 + $0x51] sm:$0xff]
          %v1745 = vmul.f32 %v1737, %v722
          %v1746 = vmul.f32 %v1738, %v723
          %v1747 = vmul.f32 %v1739, %v724
          %v1748 = vmul.f32 %v1740, %v725
          %v1749 = vmul.f32 %v1741, %v726
          %v1750 = vmul.f32 %v1742, %v727
          %v1751 = vmul.f32 %v1743, %v728
          %v1752 = vmul.f32 %v1744, %v729
          %v1753 = vpack.c.bf16 %v1746, %v1745
          %v1754 = vpack.c.bf16 %v1748, %v1747
          %v1755 = vpack.c.bf16 %v1750, %v1749
          %v1756 = vpack.c.bf16 %v1752, %v1751
          %s1757 = scalar_lea.vmem [#allocation10], 128
          %v1758 = vld [vmem:[%s1757] sm:$0xf]
          %v1759 = vld [vmem:[%s1757 + $0x4] sm:$0xf]
          %v1760 = vld [vmem:[%s1757 + $0x8] sm:$0xf]
          %v1761 = vld [vmem:[%s1757 + $0xc] sm:$0xf]
          %v1766 = vunpack.c.l.b16 %v1758
          %v1767 = vunpack.c.l.b16 %v1759
          %v1768 = vunpack.c.l.b16 %v1760
          %v1769 = vunpack.c.l.b16 %v1761
          %v1770 = vpack.c.b16 %v1767, %v1766
          %v1771 = vpack.c.b16 %v1769, %v1768
          %v1775 = vsel %vm742, %v1753, 0
          %v1778 = vsel %vm742, %v1754, 0
          %v1781 = vsel %vm742, %v1755, 0
          %v1784 = vsel %vm742, %v1756, 0
          %1786 = vmatprep.subr.bf16.mxu0 0
          %1787 = vmatpush1.bf16.msra.mxu0 %v1770
          %1788 = vmatprep.subr.bf16.mxu0 0
          %1789 = vmatpush1.bf16.msra.mxu0 %v1771
          %1790 = vmatprep.subr.bf16.mxu0 0
          %1791 = vmatpush1.bf16.msra.mxu0 0
          %1792 = vmatprep.subr.bf16.mxu0 0
          %1793 = vmatpush1.bf16.msra.mxu0 0
          %1794 = vmatprep.subr.bf16.mxu0 0
          %1795 = vmatpush1.bf16.msra.mxu0 0
          %1796 = vmatprep.subr.bf16.mxu0 0
          %1797 = vmatpush1.bf16.msra.mxu0 0
          %1798 = vmatprep.subr.bf16.mxu0 0
          %1799 = vmatpush1.bf16.msra.mxu0 0
          %1800 = vmatprep.subr.bf16.mxu0 0
          %1801 = vmatpush1.bf16.msra.mxu0 0
          %1802 = vmatprep.subr.bf16.mxu0 0
          %1803 = vmatpush1.bf16.msra.mxu0 0
          %1804 = vmatprep.subr.bf16.mxu0 0
          %1805 = vmatpush1.bf16.msra.mxu0 0
          %1806 = vmatprep.subr.bf16.mxu0 0
          %1807 = vmatpush1.bf16.msra.mxu0 0
          %1808 = vmatprep.subr.bf16.mxu0 0
          %1809 = vmatpush1.bf16.msra.mxu0 0
          %1810 = vmatprep.subr.bf16.mxu0 0
          %1811 = vmatpush1.bf16.msra.mxu0 0
          %1812 = vmatprep.subr.bf16.mxu0 0
          %1813 = vmatpush1.bf16.msra.mxu0 0
          %1814 = vmatprep.subr.bf16.mxu0 0
          %1815 = vmatpush1.bf16.msra.mxu0 0
          %1816 = vmatprep.subr.bf16.mxu0 0
          %1817 = vmatpush1.bf16.msra.mxu0 0
          %1818 = vmatprep.mubr.bf16.mxu0 0
          %1819 = vmatmul.mubr.bf16.gmra.mrb[0].mxu0 %v1775
          %v1820 = vpop.f32.mrb[0].mxu0
          %v1821 = vadd.f32 0.0, %v1820
          %v1822 = vpop.f32.mrb[0].mxu0
          %v1823 = vpop.f32.mrb[0].mxu0
          %v1824 = vadd.f32 0.0, %v1823
          %v1825 = vpop.f32.mrb[0].mxu0
          %1826 = vmatprep.mubr.bf16.mxu0 0
          %1827 = vmatmul.mubr.bf16.gmra.mrb[0].mxu0 %v1778
          %v1828 = vpop.f32.mrb[0].mxu0
          %v1829 = vadd.f32 0.0, %v1828
          %v1830 = vpop.f32.mrb[0].mxu0
          %v1831 = vpop.f32.mrb[0].mxu0
          %v1832 = vadd.f32 0.0, %v1831
          %v1833 = vpop.f32.mrb[0].mxu0
          %1834 = vmatprep.mubr.bf16.mxu0 0
          %1835 = vmatmul.mubr.bf16.gmra.mrb[0].mxu0 %v1781
          %v1836 = vpop.f32.mrb[0].mxu0
          %v1837 = vadd.f32 0.0, %v1836
          %v1838 = vpop.f32.mrb[0].mxu0
          %v1839 = vpop.f32.mrb[0].mxu0
          %v1840 = vadd.f32 0.0, %v1839
          %v1841 = vpop.f32.mrb[0].mxu0
          %1842 = vmatprep.mubr.bf16.mxu0 0
          %1843 = vmatmul.mubr.bf16.gmra.mrb[0].mxu0 %v1784
          %v1844 = vpop.f32.mrb[0].mxu0
          %v1845 = vadd.f32 0.0, %v1844
          %v1846 = vpop.f32.mrb[0].mxu0
          %v1847 = vpop.f32.mrb[0].mxu0
          %v1848 = vadd.f32 0.0, %v1847
          %v1849 = vpop.f32.mrb[0].mxu0
          %1850 = vdwg.mxu0
          %v1851 = vadd.f32 %v1729, %v1821
          %v1852 = vadd.f32 %v1730, %v1824
          %v1853 = vadd.f32 %v1731, %v1829
          %v1854 = vadd.f32 %v1732, %v1832
          %v1855 = vadd.f32 %v1733, %v1837
          %v1856 = vadd.f32 %v1734, %v1840
          %v1857 = vadd.f32 %v1735, %v1845
          %v1858 = vadd.f32 %v1736, %v1848
          %v1859 = vld [vmem:[#allocation5 + $0x7] sm:$0xff]
          %v1860 = vld [vmem:[#allocation5 + $0xf] sm:$0xff]
          %v1861 = vld [vmem:[#allocation5 + $0x17] sm:$0xff]
          %v1862 = vld [vmem:[#allocation5 + $0x1f] sm:$0xff]
          %v1863 = vld [vmem:[#allocation5 + $0x27] sm:$0xff]
          %v1864 = vld [vmem:[#allocation5 + $0x2f] sm:$0xff]
          %v1865 = vld [vmem:[#allocation5 + $0x37] sm:$0xff]
          %v1866 = vld [vmem:[#allocation5 + $0x3f] sm:$0xff]
          %v1867 = vmul.f32 %v1859, %v698
          %v1868 = vmul.f32 %v1860, %v699
          %v1869 = vmul.f32 %v1861, %v700
          %v1870 = vmul.f32 %v1862, %v701
          %v1871 = vmul.f32 %v1863, %v702
          %v1872 = vmul.f32 %v1864, %v703
          %v1873 = vmul.f32 %v1865, %v704
          %v1874 = vmul.f32 %v1866, %v705
          %v1875 = vpack.c.bf16 %v1868, %v1867
          %v1876 = vpack.c.bf16 %v1870, %v1869
          %v1877 = vpack.c.bf16 %v1872, %v1871
          %v1878 = vpack.c.bf16 %v1874, %v1873
          %v1879 = vld [vmem:[%s5] sm:$0x3]
          %v1880 = vld [vmem:[#allocation5 + $0x8] sm:$0xff]
          %v1881 = vld [vmem:[#allocation5 + $0x10] sm:$0xff]
          %v1882 = vld [vmem:[#allocation5 + $0x18] sm:$0xff]
          %v1883 = vld [vmem:[#allocation5 + $0x20] sm:$0xff]
          %v1884 = vld [vmem:[#allocation5 + $0x28] sm:$0xff]
          %v1885 = vld [vmem:[#allocation5 + $0x30] sm:$0xff]
          %v1886 = vld [vmem:[#allocation5 + $0x38] sm:$0xff]
          %v1887 = vld [vmem:[#allocation5 + $0x40] sm:$0xff]
          %v1888 = vpack.c.bf16 %v1881, %v1880
          %v1889 = vpack.c.bf16 %v1883, %v1882
          %v1890 = vpack.c.bf16 %v1885, %v1884
          %v1891 = vpack.c.bf16 %v1887, %v1886
          %s1892 = scalar_lea.vmem %s5, 2
          %v1893 = vld [vmem:[%s1892] sm:$0x3]
          %v1895 = vsel %vm756, %v1888, 0
          %v1898 = vsel %vm756, %v1889, 0
          %v1901 = vsel %vm756, %v1890, 0
          %v1904 = vsel %vm756, %v1891, 0
          %vm1906 = vcmask 1040384
          %vm1907 = vcmask 1041408
          %v1908 = vsel %vm1906, 4294967295, 65535
          %v1909 = vsel %vm1907, %v1908, 0
          %v1911 = vand.u32 %v1893, %v1909
          %1913 = vmatprep.subr.bf16.mxu0 0
          %1914 = vmatpush1.bf16.msra.mxu0 %v1911
          %1915 = vmatprep.subr.bf16.mxu0 0
          %1916 = vmatpush1.bf16.msra.mxu0 0
          %1917 = vmatprep.subr.bf16.mxu0 0
          %1918 = vmatpush1.bf16.msra.mxu0 0
          %1919 = vmatprep.subr.bf16.mxu0 0
          %1920 = vmatpush1.bf16.msra.mxu0 0
          %1921 = vmatprep.subr.bf16.mxu0 0
          %1922 = vmatpush1.bf16.msra.mxu0 0
          %1923 = vmatprep.subr.bf16.mxu0 0
          %1924 = vmatpush1.bf16.msra.mxu0 0
          %1925 = vmatprep.subr.bf16.mxu0 0
          %1926 = vmatpush1.bf16.msra.mxu0 0
          %1927 = vmatprep.subr.bf16.mxu0 0
          %1928 = vmatpush1.bf16.msra.mxu0 0
          %1929 = vmatprep.subr.bf16.mxu0 0
          %1930 = vmatpush1.bf16.msra.mxu0 0
          %1931 = vmatprep.subr.bf16.mxu0 0
          %1932 = vmatpush1.bf16.msra.mxu0 0
          %1933 = vmatprep.subr.bf16.mxu0 0
          %1934 = vmatpush1.bf16.msra.mxu0 0
          %1935 = vmatprep.subr.bf16.mxu0 0
          %1936 = vmatpush1.bf16.msra.mxu0 0
          %1937 = vmatprep.subr.bf16.mxu0 0
          %1938 = vmatpush1.bf16.msra.mxu0 0
          %1939 = vmatprep.subr.bf16.mxu0 0
          %1940 = vmatpush1.bf16.msra.mxu0 0
          %1941 = vmatprep.subr.bf16.mxu0 0
          %1942 = vmatpush1.bf16.msra.mxu0 0
          %1943 = vmatprep.subr.bf16.mxu0 0
          %1944 = vmatpush1.bf16.msra.mxu0 0
          %1945 = vmatprep.mubr.bf16.mxu0 0
          %1946 = vmatmul.mubr.bf16.gmra.mrb[0].mxu0 %v1895
          %v1947 = vpop.f32.mrb[0].mxu0
          %v1948 = vadd.f32 0.0, %v1947
          %v1949 = vpop.f32.mrb[0].mxu0
          %v1950 = vpop.f32.mrb[0].mxu0
          %v1951 = vadd.f32 0.0, %v1950
          %v1952 = vpop.f32.mrb[0].mxu0
          %1953 = vmatprep.mubr.bf16.mxu0 0
          %1954 = vmatmul.mubr.bf16.gmra.mrb[0].mxu0 %v1898
          %v1955 = vpop.f32.mrb[0].mxu0
          %v1956 = vadd.f32 0.0, %v1955
          %v1957 = vpop.f32.mrb[0].mxu0
          %v1958 = vpop.f32.mrb[0].mxu0
          %v1959 = vadd.f32 0.0, %v1958
          %v1960 = vpop.f32.mrb[0].mxu0
          %1961 = vmatprep.mubr.bf16.mxu0 0
          %1962 = vmatmul.mubr.bf16.gmra.mrb[0].mxu0 %v1901
          %v1963 = vpop.f32.mrb[0].mxu0
          %v1964 = vadd.f32 0.0, %v1963
          %v1965 = vpop.f32.mrb[0].mxu0
          %v1966 = vpop.f32.mrb[0].mxu0
          %v1967 = vadd.f32 0.0, %v1966
          %v1968 = vpop.f32.mrb[0].mxu0
          %1969 = vmatprep.mubr.bf16.mxu0 0
          %1970 = vmatmul.mubr.bf16.gmra.mrb[0].mxu0 %v1904
          %v1971 = vpop.f32.mrb[0].mxu0
          %v1972 = vadd.f32 0.0, %v1971
          %v1973 = vpop.f32.mrb[0].mxu0
          %v1974 = vpop.f32.mrb[0].mxu0
          %v1975 = vadd.f32 0.0, %v1974
          %v1976 = vpop.f32.mrb[0].mxu0
          %1977 = vdwg.mxu0
          %v1979 = vsel %vm756, %v1875, 0
          %v1982 = vsel %vm756, %v1876, 0
          %v1985 = vsel %vm756, %v1877, 0
          %v1988 = vsel %vm756, %v1878, 0
          %v1991 = vand.u32 %v1879, %v1909
          %1993 = vmatprep.subr.bf16.mxu0 0
          %1994 = vmatpush1.bf16.msra.mxu0 %v1991
          %1995 = vmatprep.subr.bf16.mxu0 0
          %1996 = vmatpush1.bf16.msra.mxu0 0
          %1997 = vmatprep.subr.bf16.mxu0 0
          %1998 = vmatpush1.bf16.msra.mxu0 0
          %1999 = vmatprep.subr.bf16.mxu0 0
          %2000 = vmatpush1.bf16.msra.mxu0 0
          %2001 = vmatprep.subr.bf16.mxu0 0
          %2002 = vmatpush1.bf16.msra.mxu0 0
          %2003 = vmatprep.subr.bf16.mxu0 0
          %2004 = vmatpush1.bf16.msra.mxu0 0
          %2005 = vmatprep.subr.bf16.mxu0 0
          %2006 = vmatpush1.bf16.msra.mxu0 0
          %2007 = vmatprep.subr.bf16.mxu0 0
          %2008 = vmatpush1.bf16.msra.mxu0 0
          %2009 = vmatprep.subr.bf16.mxu0 0
          %2010 = vmatpush1.bf16.msra.mxu0 0
          %2011 = vmatprep.subr.bf16.mxu0 0
          %2012 = vmatpush1.bf16.msra.mxu0 0
          %2013 = vmatprep.subr.bf16.mxu0 0
          %2014 = vmatpush1.bf16.msra.mxu0 0
          %2015 = vmatprep.subr.bf16.mxu0 0
          %2016 = vmatpush1.bf16.msra.mxu0 0
          %2017 = vmatprep.subr.bf16.mxu0 0
          %2018 = vmatpush1.bf16.msra.mxu0 0
          %2019 = vmatprep.subr.bf16.mxu0 0
          %2020 = vmatpush1.bf16.msra.mxu0 0
          %2021 = vmatprep.subr.bf16.mxu0 0
          %2022 = vmatpush1.bf16.msra.mxu0 0
          %2023 = vmatprep.subr.bf16.mxu0 0
          %2024 = vmatpush1.bf16.msra.mxu0 0
          %2025 = vmatprep.mubr.bf16.mxu0 0
          %2026 = vmatmul.mubr.bf16.gmra.mrb[0].mxu0 %v1979
          %v2027 = vpop.f32.mrb[0].mxu0
          %v2028 = vadd.f32 %v1948, %v2027
          %v2029 = vpop.f32.mrb[0].mxu0
          %v2030 = vpop.f32.mrb[0].mxu0
          %v2031 = vadd.f32 %v1951, %v2030
          %v2032 = vpop.f32.mrb[0].mxu0
          %2033 = vmatprep.mubr.bf16.mxu0 0
          %2034 = vmatmul.mubr.bf16.gmra.mrb[0].mxu0 %v1982
          %v2035 = vpop.f32.mrb[0].mxu0
          %v2036 = vadd.f32 %v1956, %v2035
          %v2037 = vpop.f32.mrb[0].mxu0
          %v2038 = vpop.f32.mrb[0].mxu0
          %v2039 = vadd.f32 %v1959, %v2038
          %v2040 = vpop.f32.mrb[0].mxu0
          %2041 = vmatprep.mubr.bf16.mxu0 0
          %2042 = vmatmul.mubr.bf16.gmra.mrb[0].mxu0 %v1985
          %v2043 = vpop.f32.mrb[0].mxu0
          %v2044 = vadd.f32 %v1964, %v2043
          %v2045 = vpop.f32.mrb[0].mxu0
          %v2046 = vpop.f32.mrb[0].mxu0
          %v2047 = vadd.f32 %v1967, %v2046
          %v2048 = vpop.f32.mrb[0].mxu0
          %2049 = vmatprep.mubr.bf16.mxu0 0
          %2050 = vmatmul.mubr.bf16.gmra.mrb[0].mxu0 %v1988
          %v2051 = vpop.f32.mrb[0].mxu0
          %v2052 = vadd.f32 %v1972, %v2051
          %v2053 = vpop.f32.mrb[0].mxu0
          %v2054 = vpop.f32.mrb[0].mxu0
          %v2055 = vadd.f32 %v1975, %v2054
          %v2056 = vpop.f32.mrb[0].mxu0
          %2057 = vdwg.mxu0
          %v2058 = vld [vmem:[#allocation5 + $0x9] sm:$0xff]
          %v2059 = vld [vmem:[#allocation5 + $0x11] sm:$0xff]
          %v2060 = vld [vmem:[#allocation5 + $0x19] sm:$0xff]
          %v2061 = vld [vmem:[#allocation5 + $0x21] sm:$0xff]
          %v2062 = vld [vmem:[#allocation5 + $0x29] sm:$0xff]
          %v2063 = vld [vmem:[#allocation5 + $0x31] sm:$0xff]
          %v2064 = vld [vmem:[#allocation5 + $0x39] sm:$0xff]
          %v2065 = vld [vmem:[#allocation5 + $0x41] sm:$0xff]
          %v2066 = vmul.f32 %v2058, %v722
          %v2067 = vmul.f32 %v2059, %v723
          %v2068 = vmul.f32 %v2060, %v724
          %v2069 = vmul.f32 %v2061, %v725
          %v2070 = vmul.f32 %v2062, %v726
          %v2071 = vmul.f32 %v2063, %v727
          %v2072 = vmul.f32 %v2064, %v728
          %v2073 = vmul.f32 %v2065, %v729
          %v2074 = vpack.c.bf16 %v2067, %v2066
          %v2075 = vpack.c.bf16 %v2069, %v2068
          %v2076 = vpack.c.bf16 %v2071, %v2070
          %v2077 = vpack.c.bf16 %v2073, %v2072
          %s2078 = scalar_lea.vmem %s5, 4
          %v2079 = vld [vmem:[%s2078] sm:$0x3]
          %v2081 = vsel %vm756, %v2074, 0
          %v2084 = vsel %vm756, %v2075, 0
          %v2087 = vsel %vm756, %v2076, 0
          %v2090 = vsel %vm756, %v2077, 0
          %v2093 = vand.u32 %v2079, %v1909
          %2095 = vmatprep.subr.bf16.mxu0 0
          %2096 = vmatpush1.bf16.msra.mxu0 %v2093
          %2097 = vmatprep.subr.bf16.mxu0 0
          %2098 = vmatpush1.bf16.msra.mxu0 0
          %2099 = vmatprep.subr.bf16.mxu0 0
          %2100 = vmatpush1.bf16.msra.mxu0 0
          %2101 = vmatprep.subr.bf16.mxu0 0
          %2102 = vmatpush1.bf16.msra.mxu0 0
          %2103 = vmatprep.subr.bf16.mxu0 0
          %2104 = vmatpush1.bf16.msra.mxu0 0
          %2105 = vmatprep.subr.bf16.mxu0 0
          %2106 = vmatpush1.bf16.msra.mxu0 0
          %2107 = vmatprep.subr.bf16.mxu0 0
          %2108 = vmatpush1.bf16.msra.mxu0 0
          %2109 = vmatprep.subr.bf16.mxu0 0
          %2110 = vmatpush1.bf16.msra.mxu0 0
          %2111 = vmatprep.subr.bf16.mxu0 0
          %2112 = vmatpush1.bf16.msra.mxu0 0
          %2113 = vmatprep.subr.bf16.mxu0 0
          %2114 = vmatpush1.bf16.msra.mxu0 0
          %2115 = vmatprep.subr.bf16.mxu0 0
          %2116 = vmatpush1.bf16.msra.mxu0 0
          %2117 = vmatprep.subr.bf16.mxu0 0
          %2118 = vmatpush1.bf16.msra.mxu0 0
          %2119 = vmatprep.subr.bf16.mxu0 0
          %2120 = vmatpush1.bf16.msra.mxu0 0
          %2121 = vmatprep.subr.bf16.mxu0 0
          %2122 = vmatpush1.bf16.msra.mxu0 0
          %2123 = vmatprep.subr.bf16.mxu0 0
          %2124 = vmatpush1.bf16.msra.mxu0 0
          %2125 = vmatprep.subr.bf16.mxu0 0
          %2126 = vmatpush1.bf16.msra.mxu0 0
          %2127 = vmatprep.mubr.bf16.mxu0 0
          %2128 = vmatmul.mubr.bf16.gmra.mrb[0].mxu0 %v2081
          %v2129 = vpop.f32.mrb[0].mxu0
          %v2130 = vadd.f32 0.0, %v2129
          %v2131 = vpop.f32.mrb[0].mxu0
          %v2132 = vpop.f32.mrb[0].mxu0
          %v2133 = vadd.f32 0.0, %v2132
          %v2134 = vpop.f32.mrb[0].mxu0
          %2135 = vmatprep.mubr.bf16.mxu0 0
          %2136 = vmatmul.mubr.bf16.gmra.mrb[0].mxu0 %v2084
          %v2137 = vpop.f32.mrb[0].mxu0
          %v2138 = vadd.f32 0.0, %v2137
          %v2139 = vpop.f32.mrb[0].mxu0
          %v2140 = vpop.f32.mrb[0].mxu0
          %v2141 = vadd.f32 0.0, %v2140
          %v2142 = vpop.f32.mrb[0].mxu0
          %2143 = vmatprep.mubr.bf16.mxu0 0
          %2144 = vmatmul.mubr.bf16.gmra.mrb[0].mxu0 %v2087
          %v2145 = vpop.f32.mrb[0].mxu0
          %v2146 = vadd.f32 0.0, %v2145
          %v2147 = vpop.f32.mrb[0].mxu0
          %v2148 = vpop.f32.mrb[0].mxu0
          %v2149 = vadd.f32 0.0, %v2148
          %v2150 = vpop.f32.mrb[0].mxu0
          %2151 = vmatprep.mubr.bf16.mxu0 0
          %2152 = vmatmul.mubr.bf16.gmra.mrb[0].mxu0 %v2090
          %v2153 = vpop.f32.mrb[0].mxu0
          %v2154 = vadd.f32 0.0, %v2153
          %v2155 = vpop.f32.mrb[0].mxu0
          %v2156 = vpop.f32.mrb[0].mxu0
          %v2157 = vadd.f32 0.0, %v2156
          %v2158 = vpop.f32.mrb[0].mxu0
          %2159 = vdwg.mxu0
          %v2160 = vadd.f32 %v2028, %v2130
          %v2161 = vadd.f32 %v2031, %v2133
          %v2162 = vadd.f32 %v2036, %v2138
          %v2163 = vadd.f32 %v2039, %v2141
          %v2164 = vadd.f32 %v2044, %v2146
          %v2165 = vadd.f32 %v2047, %v2149
          %v2166 = vadd.f32 %v2052, %v2154
          %v2167 = vadd.f32 %v2055, %v2157
          %v2168 = vld [vmem:[#allocation5 + $0xf] sm:$0xff]
          %v2169 = vld [vmem:[#allocation5 + $0x17] sm:$0xff]
          %v2170 = vld [vmem:[#allocation5 + $0x1f] sm:$0xff]
          %v2171 = vld [vmem:[#allocation5 + $0x27] sm:$0xff]
          %v2172 = vld [vmem:[#allocation5 + $0x2f] sm:$0xff]
          %v2173 = vld [vmem:[#allocation5 + $0x37] sm:$0xff]
          %v2174 = vld [vmem:[#allocation5 + $0x3f] sm:$0xff]
          %v2175 = vld [vmem:[#allocation5 + $0x47] sm:$0xff]
          %v2176 = vmul.f32 %v2168, %v698
          %v2177 = vmul.f32 %v2169, %v699
          %v2178 = vmul.f32 %v2170, %v700
          %v2179 = vmul.f32 %v2171, %v701
          %v2180 = vmul.f32 %v2172, %v702
          %v2181 = vmul.f32 %v2173, %v703
          %v2182 = vmul.f32 %v2174, %v704
          %v2183 = vmul.f32 %v2175, %v705
          %v2184 = vpack.c.bf16 %v2177, %v2176
          %v2185 = vpack.c.bf16 %v2179, %v2178
          %v2186 = vpack.c.bf16 %v2181, %v2180
          %v2187 = vpack.c.bf16 %v2183, %v2182
          %s2188 = scalar_lea.vmem %s5, 6
          %v2189 = vld [vmem:[%s2188] sm:$0x3]
          %v2191 = vsel %vm756, %v2184, 0
          %v2194 = vsel %vm756, %v2185, 0
          %v2197 = vsel %vm756, %v2186, 0
          %v2200 = vsel %vm756, %v2187, 0
          %v2203 = vand.u32 %v2189, %v1909
          %2205 = vmatprep.subr.bf16.mxu0 0
          %2206 = vmatpush1.bf16.msra.mxu0 %v2203
          %2207 = vmatprep.subr.bf16.mxu0 0
          %2208 = vmatpush1.bf16.msra.mxu0 0
          %2209 = vmatprep.subr.bf16.mxu0 0
          %2210 = vmatpush1.bf16.msra.mxu0 0
          %2211 = vmatprep.subr.bf16.mxu0 0
          %2212 = vmatpush1.bf16.msra.mxu0 0
          %2213 = vmatprep.subr.bf16.mxu0 0
          %2214 = vmatpush1.bf16.msra.mxu0 0
          %2215 = vmatprep.subr.bf16.mxu0 0
          %2216 = vmatpush1.bf16.msra.mxu0 0
          %2217 = vmatprep.subr.bf16.mxu0 0
          %2218 = vmatpush1.bf16.msra.mxu0 0
          %2219 = vmatprep.subr.bf16.mxu0 0
          %2220 = vmatpush1.bf16.msra.mxu0 0
          %2221 = vmatprep.subr.bf16.mxu0 0
          %2222 = vmatpush1.bf16.msra.mxu0 0
          %2223 = vmatprep.subr.bf16.mxu0 0
          %2224 = vmatpush1.bf16.msra.mxu0 0
          %2225 = vmatprep.subr.bf16.mxu0 0
          %2226 = vmatpush1.bf16.msra.mxu0 0
          %2227 = vmatprep.subr.bf16.mxu0 0
          %2228 = vmatpush1.bf16.msra.mxu0 0
          %2229 = vmatprep.subr.bf16.mxu0 0
          %2230 = vmatpush1.bf16.msra.mxu0 0
          %2231 = vmatprep.subr.bf16.mxu0 0
          %2232 = vmatpush1.bf16.msra.mxu0 0
          %2233 = vmatprep.subr.bf16.mxu0 0
          %2234 = vmatpush1.bf16.msra.mxu0 0
          %2235 = vmatprep.subr.bf16.mxu0 0
          %2236 = vmatpush1.bf16.msra.mxu0 0
          %2237 = vmatprep.mubr.bf16.mxu0 0
          %2238 = vmatmul.mubr.bf16.gmra.mrb[0].mxu0 %v2191
          %v2239 = vpop.f32.mrb[0].mxu0
          %v2240 = vadd.f32 0.0, %v2239
          %v2241 = vpop.f32.mrb[0].mxu0
          %v2242 = vpop.f32.mrb[0].mxu0
          %v2243 = vadd.f32 0.0, %v2242
          %v2244 = vpop.f32.mrb[0].mxu0
          %2245 = vmatprep.mubr.bf16.mxu0 0
          %2246 = vmatmul.mubr.bf16.gmra.mrb[0].mxu0 %v2194
          %v2247 = vpop.f32.mrb[0].mxu0
          %v2248 = vadd.f32 0.0, %v2247
          %v2249 = vpop.f32.mrb[0].mxu0
          %v2250 = vpop.f32.mrb[0].mxu0
          %v2251 = vadd.f32 0.0, %v2250
          %v2252 = vpop.f32.mrb[0].mxu0
          %2253 = vmatprep.mubr.bf16.mxu0 0
          %2254 = vmatmul.mubr.bf16.gmra.mrb[0].mxu0 %v2197
          %v2255 = vpop.f32.mrb[0].mxu0
          %v2256 = vadd.f32 0.0, %v2255
          %v2257 = vpop.f32.mrb[0].mxu0
          %v2258 = vpop.f32.mrb[0].mxu0
          %v2259 = vadd.f32 0.0, %v2258
          %v2260 = vpop.f32.mrb[0].mxu0
          %2261 = vmatprep.mubr.bf16.mxu0 0
          %2262 = vmatmul.mubr.bf16.gmra.mrb[0].mxu0 %v2200
          %v2263 = vpop.f32.mrb[0].mxu0
          %v2264 = vadd.f32 0.0, %v2263
          %v2265 = vpop.f32.mrb[0].mxu0
          %v2266 = vpop.f32.mrb[0].mxu0
          %v2267 = vadd.f32 0.0, %v2266
          %v2268 = vpop.f32.mrb[0].mxu0
          %2269 = vdwg.mxu0
          %v2270 = vadd.f32 %v2160, %v2240
          %v2271 = vadd.f32 %v2161, %v2243
          %v2272 = vadd.f32 %v2162, %v2248
          %v2273 = vadd.f32 %v2163, %v2251
          %v2274 = vadd.f32 %v2164, %v2256
          %v2275 = vadd.f32 %v2165, %v2259
          %v2276 = vadd.f32 %v2166, %v2264
          %v2277 = vadd.f32 %v2167, %v2267
          %v2278 = vld [vmem:[#allocation5 + $0x10] sm:$0xff]
          %v2279 = vld [vmem:[#allocation5 + $0x18] sm:$0xff]
          %v2280 = vld [vmem:[#allocation5 + $0x20] sm:$0xff]
          %v2281 = vld [vmem:[#allocation5 + $0x28] sm:$0xff]
          %v2282 = vld [vmem:[#allocation5 + $0x30] sm:$0xff]
          %v2283 = vld [vmem:[#allocation5 + $0x38] sm:$0xff]
          %v2284 = vld [vmem:[#allocation5 + $0x40] sm:$0xff]
          %v2285 = vld [vmem:[#allocation5 + $0x48] sm:$0xff]
          %v2286 = vpack.c.bf16 %v2279, %v2278
          %v2287 = vpack.c.bf16 %v2281, %v2280
          %v2288 = vpack.c.bf16 %v2283, %v2282
          %v2289 = vpack.c.bf16 %v2285, %v2284
          %s2290 = scalar_lea.vmem %s5, 8
          %v2291 = vld [vmem:[%s2290] sm:$0x3]
          %v2293 = vsel %vm756, %v2286, 0
          %v2296 = vsel %vm756, %v2287, 0
          %v2299 = vsel %vm756, %v2288, 0
          %v2302 = vsel %vm756, %v2289, 0
          %v2305 = vand.u32 %v2291, %v1909
          %2307 = vmatprep.subr.bf16.mxu0 0
          %2308 = vmatpush1.bf16.msra.mxu0 %v2305
          %2309 = vmatprep.subr.bf16.mxu0 0
          %2310 = vmatpush1.bf16.msra.mxu0 0
          %2311 = vmatprep.subr.bf16.mxu0 0
          %2312 = vmatpush1.bf16.msra.mxu0 0
          %2313 = vmatprep.subr.bf16.mxu0 0
          %2314 = vmatpush1.bf16.msra.mxu0 0
          %2315 = vmatprep.subr.bf16.mxu0 0
          %2316 = vmatpush1.bf16.msra.mxu0 0
          %2317 = vmatprep.subr.bf16.mxu0 0
          %2318 = vmatpush1.bf16.msra.mxu0 0
          %2319 = vmatprep.subr.bf16.mxu0 0
          %2320 = vmatpush1.bf16.msra.mxu0 0
          %2321 = vmatprep.subr.bf16.mxu0 0
          %2322 = vmatpush1.bf16.msra.mxu0 0
          %2323 = vmatprep.subr.bf16.mxu0 0
          %2324 = vmatpush1.bf16.msra.mxu0 0
          %2325 = vmatprep.subr.bf16.mxu0 0
          %2326 = vmatpush1.bf16.msra.mxu0 0
          %2327 = vmatprep.subr.bf16.mxu0 0
          %2328 = vmatpush1.bf16.msra.mxu0 0
          %2329 = vmatprep.subr.bf16.mxu0 0
          %2330 = vmatpush1.bf16.msra.mxu0 0
          %2331 = vmatprep.subr.bf16.mxu0 0
          %2332 = vmatpush1.bf16.msra.mxu0 0
          %2333 = vmatprep.subr.bf16.mxu0 0
          %2334 = vmatpush1.bf16.msra.mxu0 0
          %2335 = vmatprep.subr.bf16.mxu0 0
          %2336 = vmatpush1.bf16.msra.mxu0 0
          %2337 = vmatprep.subr.bf16.mxu0 0
          %2338 = vmatpush1.bf16.msra.mxu0 0
          %2339 = vmatprep.mubr.bf16.mxu0 0
          %2340 = vmatmul.mubr.bf16.gmra.mrb[0].mxu0 %v2293
          %v2341 = vpop.f32.mrb[0].mxu0
          %v2342 = vadd.f32 0.0, %v2341
          %v2343 = vpop.f32.mrb[0].mxu0
          %v2344 = vpop.f32.mrb[0].mxu0
          %v2345 = vadd.f32 0.0, %v2344
          %v2346 = vpop.f32.mrb[0].mxu0
          %2347 = vmatprep.mubr.bf16.mxu0 0
          %2348 = vmatmul.mubr.bf16.gmra.mrb[0].mxu0 %v2296
          %v2349 = vpop.f32.mrb[0].mxu0
          %v2350 = vadd.f32 0.0, %v2349
          %v2351 = vpop.f32.mrb[0].mxu0
          %v2352 = vpop.f32.mrb[0].mxu0
          %v2353 = vadd.f32 0.0, %v2352
          %v2354 = vpop.f32.mrb[0].mxu0
          %2355 = vmatprep.mubr.bf16.mxu0 0
          %2356 = vmatmul.mubr.bf16.gmra.mrb[0].mxu0 %v2299
          %v2357 = vpop.f32.mrb[0].mxu0
          %v2358 = vadd.f32 0.0, %v2357
          %v2359 = vpop.f32.mrb[0].mxu0
          %v2360 = vpop.f32.mrb[0].mxu0
          %v2361 = vadd.f32 0.0, %v2360
          %v2362 = vpop.f32.mrb[0].mxu0
          %2363 = vmatprep.mubr.bf16.mxu0 0
          %2364 = vmatmul.mubr.bf16.gmra.mrb[0].mxu0 %v2302
          %v2365 = vpop.f32.mrb[0].mxu0
          %v2366 = vadd.f32 0.0, %v2365
          %v2367 = vpop.f32.mrb[0].mxu0
          %v2368 = vpop.f32.mrb[0].mxu0
          %v2369 = vadd.f32 0.0, %v2368
          %v2370 = vpop.f32.mrb[0].mxu0
          %2371 = vdwg.mxu0
          %v2372 = vadd.f32 %v2270, %v2342
          %v2373 = vadd.f32 %v2271, %v2345
          %v2374 = vadd.f32 %v2272, %v2350
          %v2375 = vadd.f32 %v2273, %v2353
          %v2376 = vadd.f32 %v2274, %v2358
          %v2377 = vadd.f32 %v2275, %v2361
          %v2378 = vadd.f32 %v2276, %v2366
          %v2379 = vadd.f32 %v2277, %v2369
          %v2380 = vld [vmem:[#allocation5 + $0x11] sm:$0xff]
          %v2381 = vld [vmem:[#allocation5 + $0x19] sm:$0xff]
          %v2382 = vld [vmem:[#allocation5 + $0x21] sm:$0xff]
          %v2383 = vld [vmem:[#allocation5 + $0x29] sm:$0xff]
          %v2384 = vld [vmem:[#allocation5 + $0x31] sm:$0xff]
          %v2385 = vld [vmem:[#allocation5 + $0x39] sm:$0xff]
          %v2386 = vld [vmem:[#allocation5 + $0x41] sm:$0xff]
          %v2387 = vld [vmem:[#allocation5 + $0x49] sm:$0xff]
          %v2388 = vmul.f32 %v2380, %v722
          %v2389 = vmul.f32 %v2381, %v723
          %v2390 = vmul.f32 %v2382, %v724
          %v2391 = vmul.f32 %v2383, %v725
          %v2392 = vmul.f32 %v2384, %v726
          %v2393 = vmul.f32 %v2385, %v727
          %v2394 = vmul.f32 %v2386, %v728
          %v2395 = vmul.f32 %v2387, %v729
          %v2396 = vpack.c.bf16 %v2389, %v2388
          %v2397 = vpack.c.bf16 %v2391, %v2390
          %v2398 = vpack.c.bf16 %v2393, %v2392
          %v2399 = vpack.c.bf16 %v2395, %v2394
          %s2400 = scalar_lea.vmem %s5, 10
          %v2401 = vld [vmem:[%s2400] sm:$0x3]
          %v2403 = vsel %vm756, %v2396, 0
          %v2406 = vsel %vm756, %v2397, 0
          %v2409 = vsel %vm756, %v2398, 0
          %v2412 = vsel %vm756, %v2399, 0
          %v2415 = vand.u32 %v2401, %v1909
          %2417 = vmatprep.subr.bf16.mxu0 0
          %2418 = vmatpush1.bf16.msra.mxu0 %v2415
          %2419 = vmatprep.subr.bf16.mxu0 0
          %2420 = vmatpush1.bf16.msra.mxu0 0
          %2421 = vmatprep.subr.bf16.mxu0 0
          %2422 = vmatpush1.bf16.msra.mxu0 0
          %2423 = vmatprep.subr.bf16.mxu0 0
          %2424 = vmatpush1.bf16.msra.mxu0 0
          %2425 = vmatprep.subr.bf16.mxu0 0
          %2426 = vmatpush1.bf16.msra.mxu0 0
          %2427 = vmatprep.subr.bf16.mxu0 0
          %2428 = vmatpush1.bf16.msra.mxu0 0
          %2429 = vmatprep.subr.bf16.mxu0 0
          %2430 = vmatpush1.bf16.msra.mxu0 0
          %2431 = vmatprep.subr.bf16.mxu0 0
          %2432 = vmatpush1.bf16.msra.mxu0 0
          %2433 = vmatprep.subr.bf16.mxu0 0
          %2434 = vmatpush1.bf16.msra.mxu0 0
          %2435 = vmatprep.subr.bf16.mxu0 0
          %2436 = vmatpush1.bf16.msra.mxu0 0
          %2437 = vmatprep.subr.bf16.mxu0 0
          %2438 = vmatpush1.bf16.msra.mxu0 0
          %2439 = vmatprep.subr.bf16.mxu0 0
          %2440 = vmatpush1.bf16.msra.mxu0 0
          %2441 = vmatprep.subr.bf16.mxu0 0
          %2442 = vmatpush1.bf16.msra.mxu0 0
          %2443 = vmatprep.subr.bf16.mxu0 0
          %2444 = vmatpush1.bf16.msra.mxu0 0
          %2445 = vmatprep.subr.bf16.mxu0 0
          %2446 = vmatpush1.bf16.msra.mxu0 0
          %2447 = vmatprep.subr.bf16.mxu0 0
          %2448 = vmatpush1.bf16.msra.mxu0 0
          %2449 = vmatprep.mubr.bf16.mxu0 0
          %2450 = vmatmul.mubr.bf16.gmra.mrb[0].mxu0 %v2403
          %v2451 = vpop.f32.mrb[0].mxu0
          %v2452 = vadd.f32 0.0, %v2451
          %v2453 = vpop.f32.mrb[0].mxu0
          %v2454 = vpop.f32.mrb[0].mxu0
          %v2455 = vadd.f32 0.0, %v2454
          %v2456 = vpop.f32.mrb[0].mxu0
          %2457 = vmatprep.mubr.bf16.mxu0 0
          %2458 = vmatmul.mubr.bf16.gmra.mrb[0].mxu0 %v2406
          %v2459 = vpop.f32.mrb[0].mxu0
          %v2460 = vadd.f32 0.0, %v2459
          %v2461 = vpop.f32.mrb[0].mxu0
          %v2462 = vpop.f32.mrb[0].mxu0
          %v2463 = vadd.f32 0.0, %v2462
          %v2464 = vpop.f32.mrb[0].mxu0
          %2465 = vmatprep.mubr.bf16.mxu0 0
          %2466 = vmatmul.mubr.bf16.gmra.mrb[0].mxu0 %v2409
          %v2467 = vpop.f32.mrb[0].mxu0
          %v2468 = vadd.f32 0.0, %v2467
          %v2469 = vpop.f32.mrb[0].mxu0
          %v2470 = vpop.f32.mrb[0].mxu0
          %v2471 = vadd.f32 0.0, %v2470
          %v2472 = vpop.f32.mrb[0].mxu0
          %2473 = vmatprep.mubr.bf16.mxu0 0
          %2474 = vmatmul.mubr.bf16.gmra.mrb[0].mxu0 %v2412
          %v2475 = vpop.f32.mrb[0].mxu0
          %v2476 = vadd.f32 0.0, %v2475
          %v2477 = vpop.f32.mrb[0].mxu0
          %v2478 = vpop.f32.mrb[0].mxu0
          %v2479 = vadd.f32 0.0, %v2478
          %v2480 = vpop.f32.mrb[0].mxu0
          %2481 = vdwg.mxu0
          %v2482 = vadd.f32 %v2372, %v2452
          %v2483 = vadd.f32 %v2373, %v2455
          %v2484 = vadd.f32 %v2374, %v2460
          %v2485 = vadd.f32 %v2375, %v2463
          %v2486 = vadd.f32 %v2376, %v2468
          %v2487 = vadd.f32 %v2377, %v2471
          %v2488 = vadd.f32 %v2378, %v2476
          %v2489 = vadd.f32 %v2379, %v2479
          %v2490 = vld [vmem:[#allocation5 + $0x17] sm:$0xff]
          %v2491 = vld [vmem:[#allocation5 + $0x1f] sm:$0xff]
          %v2492 = vld [vmem:[#allocation5 + $0x27] sm:$0xff]
          %v2493 = vld [vmem:[#allocation5 + $0x2f] sm:$0xff]
          %v2494 = vld [vmem:[#allocation5 + $0x37] sm:$0xff]
          %v2495 = vld [vmem:[#allocation5 + $0x3f] sm:$0xff]
          %v2496 = vld [vmem:[#allocation5 + $0x47] sm:$0xff]
          %v2497 = vld [vmem:[#allocation5 + $0x4f] sm:$0xff]
          %v2498 = vmul.f32 %v2490, %v698
          %v2499 = vmul.f32 %v2491, %v699
          %v2500 = vmul.f32 %v2492, %v700
          %v2501 = vmul.f32 %v2493, %v701
          %v2502 = vmul.f32 %v2494, %v702
          %v2503 = vmul.f32 %v2495, %v703
          %v2504 = vmul.f32 %v2496, %v704
          %v2505 = vmul.f32 %v2497, %v705
          %v2506 = vpack.c.bf16 %v2499, %v2498
          %v2507 = vpack.c.bf16 %v2501, %v2500
          %v2508 = vpack.c.bf16 %v2503, %v2502
          %v2509 = vpack.c.bf16 %v2505, %v2504
          %s2510 = scalar_lea.vmem %s5, 12
          %v2511 = vld [vmem:[%s2510] sm:$0x3]
          %v2513 = vsel %vm756, %v2506, 0
          %v2516 = vsel %vm756, %v2507, 0
          %v2519 = vsel %vm756, %v2508, 0
          %v2522 = vsel %vm756, %v2509, 0
          %v2525 = vand.u32 %v2511, %v1909
          %2527 = vmatprep.subr.bf16.mxu0 0
          %2528 = vmatpush1.bf16.msra.mxu0 %v2525
          %2529 = vmatprep.subr.bf16.mxu0 0
          %2530 = vmatpush1.bf16.msra.mxu0 0
          %2531 = vmatprep.subr.bf16.mxu0 0
          %2532 = vmatpush1.bf16.msra.mxu0 0
          %2533 = vmatprep.subr.bf16.mxu0 0
          %2534 = vmatpush1.bf16.msra.mxu0 0
          %2535 = vmatprep.subr.bf16.mxu0 0
          %2536 = vmatpush1.bf16.msra.mxu0 0
          %2537 = vmatprep.subr.bf16.mxu0 0
          %2538 = vmatpush1.bf16.msra.mxu0 0
          %2539 = vmatprep.subr.bf16.mxu0 0
          %2540 = vmatpush1.bf16.msra.mxu0 0
          %2541 = vmatprep.subr.bf16.mxu0 0
          %2542 = vmatpush1.bf16.msra.mxu0 0
          %2543 = vmatprep.subr.bf16.mxu0 0
          %2544 = vmatpush1.bf16.msra.mxu0 0
          %2545 = vmatprep.subr.bf16.mxu0 0
          %2546 = vmatpush1.bf16.msra.mxu0 0
          %2547 = vmatprep.subr.bf16.mxu0 0
          %2548 = vmatpush1.bf16.msra.mxu0 0
          %2549 = vmatprep.subr.bf16.mxu0 0
          %2550 = vmatpush1.bf16.msra.mxu0 0
          %2551 = vmatprep.subr.bf16.mxu0 0
          %2552 = vmatpush1.bf16.msra.mxu0 0
          %2553 = vmatprep.subr.bf16.mxu0 0
          %2554 = vmatpush1.bf16.msra.mxu0 0
          %2555 = vmatprep.subr.bf16.mxu0 0
          %2556 = vmatpush1.bf16.msra.mxu0 0
          %2557 = vmatprep.subr.bf16.mxu0 0
          %2558 = vmatpush1.bf16.msra.mxu0 0
          %2559 = vmatprep.mubr.bf16.mxu0 0
          %2560 = vmatmul.mubr.bf16.gmra.mrb[0].mxu0 %v2513
          %v2561 = vpop.f32.mrb[0].mxu0
          %v2562 = vadd.f32 0.0, %v2561
          %v2563 = vpop.f32.mrb[0].mxu0
          %v2564 = vpop.f32.mrb[0].mxu0
          %v2565 = vadd.f32 0.0, %v2564
          %v2566 = vpop.f32.mrb[0].mxu0
          %2567 = vmatprep.mubr.bf16.mxu0 0
          %2568 = vmatmul.mubr.bf16.gmra.mrb[0].mxu0 %v2516
          %v2569 = vpop.f32.mrb[0].mxu0
          %v2570 = vadd.f32 0.0, %v2569
          %v2571 = vpop.f32.mrb[0].mxu0
          %v2572 = vpop.f32.mrb[0].mxu0
          %v2573 = vadd.f32 0.0, %v2572
          %v2574 = vpop.f32.mrb[0].mxu0
          %2575 = vmatprep.mubr.bf16.mxu0 0
          %2576 = vmatmul.mubr.bf16.gmra.mrb[0].mxu0 %v2519
          %v2577 = vpop.f32.mrb[0].mxu0
          %v2578 = vadd.f32 0.0, %v2577
          %v2579 = vpop.f32.mrb[0].mxu0
          %v2580 = vpop.f32.mrb[0].mxu0
          %v2581 = vadd.f32 0.0, %v2580
          %v2582 = vpop.f32.mrb[0].mxu0
          %2583 = vmatprep.mubr.bf16.mxu0 0
          %2584 = vmatmul.mubr.bf16.gmra.mrb[0].mxu0 %v2522
          %v2585 = vpop.f32.mrb[0].mxu0
          %v2586 = vadd.f32 0.0, %v2585
          %v2587 = vpop.f32.mrb[0].mxu0
          %v2588 = vpop.f32.mrb[0].mxu0
          %v2589 = vadd.f32 0.0, %v2588
          %v2590 = vpop.f32.mrb[0].mxu0
          %2591 = vdwg.mxu0
          %v2592 = vadd.f32 %v2482, %v2562
          %v2593 = vadd.f32 %v2483, %v2565
          %v2594 = vadd.f32 %v2484, %v2570
          %v2595 = vadd.f32 %v2485, %v2573
          %v2596 = vadd.f32 %v2486, %v2578
          %v2597 = vadd.f32 %v2487, %v2581
          %v2598 = vadd.f32 %v2488, %v2586
          %v2599 = vadd.f32 %v2489, %v2589
          %v2600 = vld [vmem:[#allocation5 + $0x18] sm:$0xff]
          %v2601 = vld [vmem:[#allocation5 + $0x20] sm:$0xff]
          %v2602 = vld [vmem:[#allocation5 + $0x28] sm:$0xff]
          %v2603 = vld [vmem:[#allocation5 + $0x30] sm:$0xff]
          %v2604 = vld [vmem:[#allocation5 + $0x38] sm:$0xff]
          %v2605 = vld [vmem:[#allocation5 + $0x40] sm:$0xff]
          %v2606 = vld [vmem:[#allocation5 + $0x48] sm:$0xff]
          %v2607 = vld [vmem:[#allocation5 + $0x50] sm:$0xff]
          %v2608 = vpack.c.bf16 %v2601, %v2600
          %v2609 = vpack.c.bf16 %v2603, %v2602
          %v2610 = vpack.c.bf16 %v2605, %v2604
          %v2611 = vpack.c.bf16 %v2607, %v2606
          %s2612 = scalar_lea.vmem %s5, 14
          %v2613 = vld [vmem:[%s2612] sm:$0x3]
          %v2615 = vsel %vm756, %v2608, 0
          %v2618 = vsel %vm756, %v2609, 0
          %v2621 = vsel %vm756, %v2610, 0
          %v2624 = vsel %vm756, %v2611, 0
          %v2627 = vand.u32 %v2613, %v1909
          %2629 = vmatprep.subr.bf16.mxu0 0
          %2630 = vmatpush1.bf16.msra.mxu0 %v2627
          %2631 = vmatprep.subr.bf16.mxu0 0
          %2632 = vmatpush1.bf16.msra.mxu0 0
          %2633 = vmatprep.subr.bf16.mxu0 0
          %2634 = vmatpush1.bf16.msra.mxu0 0
          %2635 = vmatprep.subr.bf16.mxu0 0
          %2636 = vmatpush1.bf16.msra.mxu0 0
          %2637 = vmatprep.subr.bf16.mxu0 0
          %2638 = vmatpush1.bf16.msra.mxu0 0
          %2639 = vmatprep.subr.bf16.mxu0 0
          %2640 = vmatpush1.bf16.msra.mxu0 0
          %2641 = vmatprep.subr.bf16.mxu0 0
          %2642 = vmatpush1.bf16.msra.mxu0 0
          %2643 = vmatprep.subr.bf16.mxu0 0
          %2644 = vmatpush1.bf16.msra.mxu0 0
          %2645 = vmatprep.subr.bf16.mxu0 0
          %2646 = vmatpush1.bf16.msra.mxu0 0
          %2647 = vmatprep.subr.bf16.mxu0 0
          %2648 = vmatpush1.bf16.msra.mxu0 0
          %2649 = vmatprep.subr.bf16.mxu0 0
          %2650 = vmatpush1.bf16.msra.mxu0 0
          %2651 = vmatprep.subr.bf16.mxu0 0
          %2652 = vmatpush1.bf16.msra.mxu0 0
          %2653 = vmatprep.subr.bf16.mxu0 0
          %2654 = vmatpush1.bf16.msra.mxu0 0
          %2655 = vmatprep.subr.bf16.mxu0 0
          %2656 = vmatpush1.bf16.msra.mxu0 0
          %2657 = vmatprep.subr.bf16.mxu0 0
          %2658 = vmatpush1.bf16.msra.mxu0 0
          %2659 = vmatprep.subr.bf16.mxu0 0
          %2660 = vmatpush1.bf16.msra.mxu0 0
          %2661 = vmatprep.mubr.bf16.mxu0 0
          %2662 = vmatmul.mubr.bf16.gmra.mrb[0].mxu0 %v2615
          %v2663 = vpop.f32.mrb[0].mxu0
          %v2664 = vadd.f32 0.0, %v2663
          %v2665 = vpop.f32.mrb[0].mxu0
          %v2666 = vpop.f32.mrb[0].mxu0
          %v2667 = vadd.f32 0.0, %v2666
          %v2668 = vpop.f32.mrb[0].mxu0
          %2669 = vmatprep.mubr.bf16.mxu0 0
          %2670 = vmatmul.mubr.bf16.gmra.mrb[0].mxu0 %v2618
          %v2671 = vpop.f32.mrb[0].mxu0
          %v2672 = vadd.f32 0.0, %v2671
          %v2673 = vpop.f32.mrb[0].mxu0
          %v2674 = vpop.f32.mrb[0].mxu0
          %v2675 = vadd.f32 0.0, %v2674
          %v2676 = vpop.f32.mrb[0].mxu0
          %2677 = vmatprep.mubr.bf16.mxu0 0
          %2678 = vmatmul.mubr.bf16.gmra.mrb[0].mxu0 %v2621
          %v2679 = vpop.f32.mrb[0].mxu0
          %v2680 = vadd.f32 0.0, %v2679
          %v2681 = vpop.f32.mrb[0].mxu0
          %v2682 = vpop.f32.mrb[0].mxu0
          %v2683 = vadd.f32 0.0, %v2682
          %v2684 = vpop.f32.mrb[0].mxu0
          %2685 = vmatprep.mubr.bf16.mxu0 0
          %2686 = vmatmul.mubr.bf16.gmra.mrb[0].mxu0 %v2624
          %v2687 = vpop.f32.mrb[0].mxu0
          %v2688 = vadd.f32 0.0, %v2687
          %v2689 = vpop.f32.mrb[0].mxu0
          %v2690 = vpop.f32.mrb[0].mxu0
          %v2691 = vadd.f32 0.0, %v2690
          %v2692 = vpop.f32.mrb[0].mxu0
          %2693 = vdwg.mxu0
          %v2694 = vadd.f32 %v2592, %v2664
          %v2695 = vadd.f32 %v2593, %v2667
          %v2696 = vadd.f32 %v2594, %v2672
          %v2697 = vadd.f32 %v2595, %v2675
          %v2698 = vadd.f32 %v2596, %v2680
          %v2699 = vadd.f32 %v2597, %v2683
          %v2700 = vadd.f32 %v2598, %v2688
          %v2701 = vadd.f32 %v2599, %v2691
          %v2702 = vld [vmem:[#allocation5 + $0x19] sm:$0xff]
          %v2703 = vld [vmem:[#allocation5 + $0x21] sm:$0xff]
          %v2704 = vld [vmem:[#allocation5 + $0x29] sm:$0xff]
          %v2705 = vld [vmem:[#allocation5 + $0x31] sm:$0xff]
          %v2706 = vld [vmem:[#allocation5 + $0x39] sm:$0xff]
          %v2707 = vld [vmem:[#allocation5 + $0x41] sm:$0xff]
          %v2708 = vld [vmem:[#allocation5 + $0x49] sm:$0xff]
          %v2709 = vld [vmem:[#allocation5 + $0x51] sm:$0xff]
          %v2710 = vmul.f32 %v2702, %v722
          %v2711 = vmul.f32 %v2703, %v723
          %v2712 = vmul.f32 %v2704, %v724
          %v2713 = vmul.f32 %v2705, %v725
          %v2714 = vmul.f32 %v2706, %v726
          %v2715 = vmul.f32 %v2707, %v727
          %v2716 = vmul.f32 %v2708, %v728
          %v2717 = vmul.f32 %v2709, %v729
          %v2718 = vpack.c.bf16 %v2711, %v2710
          %v2719 = vpack.c.bf16 %v2713, %v2712
          %v2720 = vpack.c.bf16 %v2715, %v2714
          %v2721 = vpack.c.bf16 %v2717, %v2716
          %s2722 = scalar_lea.vmem %s5, 16
          %v2723 = vld [vmem:[%s2722] sm:$0x3]
          %v2725 = vsel %vm756, %v2718, 0
          %v2728 = vsel %vm756, %v2719, 0
          %v2731 = vsel %vm756, %v2720, 0
          %v2734 = vsel %vm756, %v2721, 0
          %v2737 = vand.u32 %v2723, %v1909
          %2739 = vmatprep.subr.bf16.mxu0 0
          %2740 = vmatpush1.bf16.msra.mxu0 %v2737
          %2741 = vmatprep.subr.bf16.mxu0 0
          %2742 = vmatpush1.bf16.msra.mxu0 0
          %2743 = vmatprep.subr.bf16.mxu0 0
          %2744 = vmatpush1.bf16.msra.mxu0 0
          %2745 = vmatprep.subr.bf16.mxu0 0
          %2746 = vmatpush1.bf16.msra.mxu0 0
          %2747 = vmatprep.subr.bf16.mxu0 0
          %2748 = vmatpush1.bf16.msra.mxu0 0
          %2749 = vmatprep.subr.bf16.mxu0 0
          %2750 = vmatpush1.bf16.msra.mxu0 0
          %2751 = vmatprep.subr.bf16.mxu0 0
          %2752 = vmatpush1.bf16.msra.mxu0 0
          %2753 = vmatprep.subr.bf16.mxu0 0
          %2754 = vmatpush1.bf16.msra.mxu0 0
          %2755 = vmatprep.subr.bf16.mxu0 0
          %2756 = vmatpush1.bf16.msra.mxu0 0
          %2757 = vmatprep.subr.bf16.mxu0 0
          %2758 = vmatpush1.bf16.msra.mxu0 0
          %2759 = vmatprep.subr.bf16.mxu0 0
          %2760 = vmatpush1.bf16.msra.mxu0 0
          %2761 = vmatprep.subr.bf16.mxu0 0
          %2762 = vmatpush1.bf16.msra.mxu0 0
          %2763 = vmatprep.subr.bf16.mxu0 0
          %2764 = vmatpush1.bf16.msra.mxu0 0
          %2765 = vmatprep.subr.bf16.mxu0 0
          %2766 = vmatpush1.bf16.msra.mxu0 0
          %2767 = vmatprep.subr.bf16.mxu0 0
          %2768 = vmatpush1.bf16.msra.mxu0 0
          %2769 = vmatprep.subr.bf16.mxu0 0
          %2770 = vmatpush1.bf16.msra.mxu0 0
          %2771 = vmatprep.mubr.bf16.mxu0 0
          %2772 = vmatmul.mubr.bf16.gmra.mrb[0].mxu0 %v2725
          %v2773 = vpop.f32.mrb[0].mxu0
          %v2774 = vadd.f32 0.0, %v2773
          %v2775 = vpop.f32.mrb[0].mxu0
          %v2776 = vpop.f32.mrb[0].mxu0
          %v2777 = vadd.f32 0.0, %v2776
          %v2778 = vpop.f32.mrb[0].mxu0
          %2779 = vmatprep.mubr.bf16.mxu0 0
          %2780 = vmatmul.mubr.bf16.gmra.mrb[0].mxu0 %v2728
          %v2781 = vpop.f32.mrb[0].mxu0
          %v2782 = vadd.f32 0.0, %v2781
          %v2783 = vpop.f32.mrb[0].mxu0
          %v2784 = vpop.f32.mrb[0].mxu0
          %v2785 = vadd.f32 0.0, %v2784
          %v2786 = vpop.f32.mrb[0].mxu0
          %2787 = vmatprep.mubr.bf16.mxu0 0
          %2788 = vmatmul.mubr.bf16.gmra.mrb[0].mxu0 %v2731
          %v2789 = vpop.f32.mrb[0].mxu0
          %v2790 = vadd.f32 0.0, %v2789
          %v2791 = vpop.f32.mrb[0].mxu0
          %v2792 = vpop.f32.mrb[0].mxu0
          %v2793 = vadd.f32 0.0, %v2792
          %v2794 = vpop.f32.mrb[0].mxu0
          %2795 = vmatprep.mubr.bf16.mxu0 0
          %2796 = vmatmul.mubr.bf16.gmra.mrb[0].mxu0 %v2734
          %v2797 = vpop.f32.mrb[0].mxu0
          %v2798 = vadd.f32 0.0, %v2797
          %v2799 = vpop.f32.mrb[0].mxu0
          %v2800 = vpop.f32.mrb[0].mxu0
          %v2801 = vadd.f32 0.0, %v2800
          %v2802 = vpop.f32.mrb[0].mxu0
          %2803 = vdwg.mxu0
          %v2804 = vadd.f32 %v2694, %v2774
          %v2805 = vadd.f32 %v2695, %v2777
          %v2806 = vadd.f32 %v2696, %v2782
          %v2807 = vadd.f32 %v2697, %v2785
          %v2808 = vadd.f32 %v2698, %v2790
          %v2809 = vadd.f32 %v2699, %v2793
          %v2810 = vadd.f32 %v2700, %v2798
          %v2811 = vadd.f32 %v2701, %v2801
          %v2812 = vadd.f32 %v1851, %v2804
          %v2813 = vadd.f32 %v1852, %v2805
          %v2814 = vadd.f32 %v1853, %v2806
          %v2815 = vadd.f32 %v1854, %v2807
          %v2816 = vadd.f32 %v1855, %v2808
          %v2817 = vadd.f32 %v1856, %v2809
          %v2818 = vadd.f32 %v1857, %v2810
          %v2819 = vadd.f32 %v1858, %v2811
          %v2820 = vld [vmem:[%s7] sm:$0x1]
          %v2822 = vlaneseq
          %v2823 = vshrl.u32 %v2822, 7
          %v2824 = vsub.s32 0, %v2823
          %v2825 = vrot.slane %v2820, %v2824
          %v2827 = vadd.f32 %v2812, %v2825
          %v2828 = vadd.f32 %v2813, %v2825
          %v2829 = vadd.f32 %v2814, %v2825
          %v2830 = vadd.f32 %v2815, %v2825
          %v2831 = vadd.f32 %v2816, %v2825
          %v2832 = vadd.f32 %v2817, %v2825
          %v2833 = vadd.f32 %v2818, %v2825
          %v2834 = vadd.f32 %v2819, %v2825
          %2835 = vst.msk [vmem:[#allocation2] sm:$0xff] %vm742, %v2827
          %2836 = vst.msk [vmem:[#allocation2 + $0x8] sm:$0xff] %vm742, %v2828
          %2837 = vst.msk [vmem:[#allocation2 + $0x10] sm:$0xff] %vm742, %v2829
          %2838 = vst.msk [vmem:[#allocation2 + $0x18] sm:$0xff] %vm742, %v2830
          %2839 = vst.msk [vmem:[#allocation2 + $0x20] sm:$0xff] %vm742, %v2831
          %2840 = vst.msk [vmem:[#allocation2 + $0x28] sm:$0xff] %vm742, %v2832
          %2841 = vst.msk [vmem:[#allocation2 + $0x30] sm:$0xff] %vm742, %v2833
          %2842 = vst.msk [vmem:[#allocation2 + $0x38] sm:$0xff] %vm742, %v2834
          %v2843 = vld [vmem:[%s570] sm:$0xff]
          %v2844 = vld [vmem:[%s570 + $0x8] sm:$0xff]
          %v2845 = vld [vmem:[%s570 + $0x10] sm:$0xff]
          %v2846 = vld [vmem:[%s570 + $0x18] sm:$0xff]
          %v2847 = vld [vmem:[%s570 + $0x20] sm:$0xff]
          %v2848 = vld [vmem:[%s570 + $0x28] sm:$0xff]
          %v2849 = vld [vmem:[%s570 + $0x30] sm:$0xff]
          %v2850 = vld [vmem:[%s570 + $0x38] sm:$0xff]
          %v2851 = vpack.c.bf16 %v2844, %v2843
          %v2852 = vpack.c.bf16 %v2846, %v2845
          %v2853 = vpack.c.bf16 %v2848, %v2847
          %v2854 = vpack.c.bf16 %v2850, %v2849
          %v2855 = vld [vmem:[%s10] sm:$0x3]
          %v2856 = vld [vmem:[%s11] sm:$0x1]
          %v2858 = vlaneseq
          %v2859 = vshrl.u32 %v2858, 7
          %v2860 = vsub.s32 0, %v2859
          %v2861 = vrot.slane %v2856, %v2860
          %v2864 = vsel %vm756, %v2851, 0
          %v2867 = vsel %vm756, %v2852, 0
          %v2870 = vsel %vm756, %v2853, 0
          %v2873 = vsel %vm756, %v2854, 0
          %v2876 = vand.u32 %v2855, %v1909
          %2878 = vmatprep.subr.bf16.mxu0 0
          %2879 = vmatpush1.bf16.msra.mxu0 %v2876
          %2880 = vmatprep.subr.bf16.mxu0 0
          %2881 = vmatpush1.bf16.msra.mxu0 0
          %2882 = vmatprep.subr.bf16.mxu0 0
          %2883 = vmatpush1.bf16.msra.mxu0 0
          %2884 = vmatprep.subr.bf16.mxu0 0
          %2885 = vmatpush1.bf16.msra.mxu0 0
          %2886 = vmatprep.subr.bf16.mxu0 0
          %2887 = vmatpush1.bf16.msra.mxu0 0
          %2888 = vmatprep.subr.bf16.mxu0 0
          %2889 = vmatpush1.bf16.msra.mxu0 0
          %2890 = vmatprep.subr.bf16.mxu0 0
          %2891 = vmatpush1.bf16.msra.mxu0 0
          %2892 = vmatprep.subr.bf16.mxu0 0
          %2893 = vmatpush1.bf16.msra.mxu0 0
          %2894 = vmatprep.subr.bf16.mxu0 0
          %2895 = vmatpush1.bf16.msra.mxu0 0
          %2896 = vmatprep.subr.bf16.mxu0 0
          %2897 = vmatpush1.bf16.msra.mxu0 0
          %2898 = vmatprep.subr.bf16.mxu0 0
          %2899 = vmatpush1.bf16.msra.mxu0 0
          %2900 = vmatprep.subr.bf16.mxu0 0
          %2901 = vmatpush1.bf16.msra.mxu0 0
          %2902 = vmatprep.subr.bf16.mxu0 0
          %2903 = vmatpush1.bf16.msra.mxu0 0
          %2904 = vmatprep.subr.bf16.mxu0 0
          %2905 = vmatpush1.bf16.msra.mxu0 0
          %2906 = vmatprep.subr.bf16.mxu0 0
          %2907 = vmatpush1.bf16.msra.mxu0 0
          %2908 = vmatprep.subr.bf16.mxu0 0
          %2909 = vmatpush1.bf16.msra.mxu0 0
          %2910 = vmatprep.mubr.bf16.mxu0 0
          %2911 = vmatmul.mubr.bf16.gmra.mrb[0].mxu0 %v2864
          %v2912 = vpop.f32.mrb[0].mxu0
          %v2913 = vadd.f32 %v2861, %v2912
          %v2914 = vpop.f32.mrb[0].mxu0
          %v2915 = vpop.f32.mrb[0].mxu0
          %v2916 = vadd.f32 %v2861, %v2915
          %v2917 = vpop.f32.mrb[0].mxu0
          %2918 = vmatprep.mubr.bf16.mxu0 0
          %2919 = vmatmul.mubr.bf16.gmra.mrb[0].mxu0 %v2867
          %v2920 = vpop.f32.mrb[0].mxu0
          %v2921 = vadd.f32 %v2861, %v2920
          %v2922 = vpop.f32.mrb[0].mxu0
          %v2923 = vpop.f32.mrb[0].mxu0
          %v2924 = vadd.f32 %v2861, %v2923
          %v2925 = vpop.f32.mrb[0].mxu0
          %2926 = vmatprep.mubr.bf16.mxu0 0
          %2927 = vmatmul.mubr.bf16.gmra.mrb[0].mxu0 %v2870
          %v2928 = vpop.f32.mrb[0].mxu0
          %v2929 = vadd.f32 %v2861, %v2928
          %v2930 = vpop.f32.mrb[0].mxu0
          %v2931 = vpop.f32.mrb[0].mxu0
          %v2932 = vadd.f32 %v2861, %v2931
          %v2933 = vpop.f32.mrb[0].mxu0
          %2934 = vmatprep.mubr.bf16.mxu0 0
          %2935 = vmatmul.mubr.bf16.gmra.mrb[0].mxu0 %v2873
          %v2936 = vpop.f32.mrb[0].mxu0
          %v2937 = vadd.f32 %v2861, %v2936
          %v2938 = vpop.f32.mrb[0].mxu0
          %v2939 = vpop.f32.mrb[0].mxu0
          %v2940 = vadd.f32 %v2861, %v2939
          %v2941 = vpop.f32.mrb[0].mxu0
          %2942 = vdwg.mxu0
          %2943 = vst.msk [vmem:[#allocation3] sm:$0xff] %vm742, %v2913
          %2944 = vst.msk [vmem:[#allocation3 + $0x8] sm:$0xff] %vm742, %v2916
          %2945 = vst.msk [vmem:[#allocation3 + $0x10] sm:$0xff] %vm742, %v2921
          %2946 = vst.msk [vmem:[#allocation3 + $0x18] sm:$0xff] %vm742, %v2924
          %2947 = vst.msk [vmem:[#allocation3 + $0x20] sm:$0xff] %vm742, %v2929
          %2948 = vst.msk [vmem:[#allocation3 + $0x28] sm:$0xff] %vm742, %v2932
          %2949 = vst.msk [vmem:[#allocation3 + $0x30] sm:$0xff] %vm742, %v2937
          %2950 = vst.msk [vmem:[#allocation3 + $0x38] sm:$0xff] %vm742, %v2940
        $region92: #{tpu_custom_call.1} parent=67 // pred_fallthru
          _
        %vm2951 = vcmask 261120
        %2952 = vst.msk [vmem:[#allocation4 + $0x10] sm:$0xff] %vm2951, %v730
        %2953 = vst.msk [vmem:[#allocation4 + $0x18] sm:$0xff] %vm2951, %v731
        %2954 = vst.msk [vmem:[#allocation4 + $0x20] sm:$0xff] %vm2951, %v732
        %2955 = vst.msk [vmem:[#allocation4 + $0x28] sm:$0xff] %vm2951, %v733
        %2956 = vst.msk [vmem:[#allocation4 + $0x30] sm:$0xff] %vm2951, %v734
        %2957 = vst.msk [vmem:[#allocation4 + $0x38] sm:$0xff] %vm2951, %v735
        %2958 = vst.msk [vmem:[#allocation4 + $0x40] sm:$0xff] %vm2951, %v736
        %2959 = vst.msk [vmem:[#allocation4 + $0x48] sm:$0xff] %vm2951, %v737
        %v2960 = vld [vmem:[#allocation2] sm:$0xff]
        %v2961 = vld [vmem:[#allocation2 + $0x8] sm:$0xff]
        %v2962 = vld [vmem:[#allocation2 + $0x10] sm:$0xff]
        %v2963 = vld [vmem:[#allocation2 + $0x18] sm:$0xff]
        %v2964 = vld [vmem:[#allocation2 + $0x20] sm:$0xff]
        %v2965 = vld [vmem:[#allocation2 + $0x28] sm:$0xff]
        %v2966 = vld [vmem:[#allocation2 + $0x30] sm:$0xff]
        %v2967 = vld [vmem:[#allocation2 + $0x38] sm:$0xff]
        %v2968 = vld [vmem:[#allocation4 + $0x7] sm:$0xff]
        %v2969 = vld [vmem:[#allocation4 + $0xf] sm:$0xff]
        %v2970 = vld [vmem:[#allocation4 + $0x17] sm:$0xff]
        %v2971 = vld [vmem:[#allocation4 + $0x1f] sm:$0xff]
        %v2972 = vld [vmem:[#allocation4 + $0x27] sm:$0xff]
        %v2973 = vld [vmem:[#allocation4 + $0x2f] sm:$0xff]
        %v2974 = vld [vmem:[#allocation4 + $0x37] sm:$0xff]
        %v2975 = vld [vmem:[#allocation4 + $0x3f] sm:$0xff]
        %v2976 = vmul.f32 %v2968, %v698
        %v2977 = vmul.f32 %v2969, %v699
        %v2978 = vmul.f32 %v2970, %v700
        %v2979 = vmul.f32 %v2971, %v701
        %v2980 = vmul.f32 %v2972, %v702
        %v2981 = vmul.f32 %v2973, %v703
        %v2982 = vmul.f32 %v2974, %v704
        %v2983 = vmul.f32 %v2975, %v705
        %v2984 = vpack.c.bf16 %v2977, %v2976
        %v2985 = vpack.c.bf16 %v2979, %v2978
        %v2986 = vpack.c.bf16 %v2981, %v2980
        %v2987 = vpack.c.bf16 %v2983, %v2982
        %v2988 = vld [vmem:[%s3] sm:$0xf]
        %v2989 = vld [vmem:[%s3 + $0x4] sm:$0xf]
        %v2990 = vld [vmem:[%s3 + $0x8] sm:$0xf]
        %v2991 = vld [vmem:[%s3 + $0xc] sm:$0xf]
        %v2992 = vld [vmem:[#allocation4 + $0x8] sm:$0xff]
        %v2993 = vld [vmem:[#allocation4 + $0x10] sm:$0xff]
        %v2994 = vld [vmem:[#allocation4 + $0x18] sm:$0xff]
        %v2995 = vld [vmem:[#allocation4 + $0x20] sm:$0xff]
        %v2996 = vld [vmem:[#allocation4 + $0x28] sm:$0xff]
        %v2997 = vld [vmem:[#allocation4 + $0x30] sm:$0xff]
        %v2998 = vld [vmem:[#allocation4 + $0x38] sm:$0xff]
        %v2999 = vld [vmem:[#allocation4 + $0x40] sm:$0xff]
        %v3000 = vpack.c.bf16 %v2993, %v2992
        %v3001 = vpack.c.bf16 %v2995, %v2994
        %v3002 = vpack.c.bf16 %v2997, %v2996
        %v3003 = vpack.c.bf16 %v2999, %v2998
        %s3004 = scalar_lea.vmem %s3, 16
        %v3005 = vld [vmem:[%s3004] sm:$0xf]
        %v3006 = vld [vmem:[%s3004 + $0x4] sm:$0xf]
        %v3007 = vld [vmem:[%s3004 + $0x8] sm:$0xf]
        %v3008 = vld [vmem:[%s3004 + $0xc] sm:$0xf]
        %v3013 = vunpack.c.l.b16 %v3005
        %v3014 = vunpack.c.l.b16 %v3006
        %v3015 = vunpack.c.l.b16 %v3007
        %v3016 = vunpack.c.l.b16 %v3008
        %v3017 = vpack.c.b16 %v3014, %v3013
        %v3018 = vpack.c.b16 %v3016, %v3015
        %v3022 = vsel %vm2951, %v3000, 0
        %v3025 = vsel %vm2951, %v3001, 0
        %v3028 = vsel %vm2951, %v3002, 0
        %v3031 = vsel %vm2951, %v3003, 0
        %3033 = vmatprep.subr.bf16.mxu0 0
        %3034 = vmatpush1.bf16.msra.mxu0 %v3017
        %3035 = vmatprep.subr.bf16.mxu0 0
        %3036 = vmatpush1.bf16.msra.mxu0 %v3018
        %3037 = vmatprep.subr.bf16.mxu0 0
        %3038 = vmatpush1.bf16.msra.mxu0 0
        %3039 = vmatprep.subr.bf16.mxu0 0
        %3040 = vmatpush1.bf16.msra.mxu0 0
        %3041 = vmatprep.subr.bf16.mxu0 0
        %3042 = vmatpush1.bf16.msra.mxu0 0
        %3043 = vmatprep.subr.bf16.mxu0 0
        %3044 = vmatpush1.bf16.msra.mxu0 0
        %3045 = vmatprep.subr.bf16.mxu0 0
        %3046 = vmatpush1.bf16.msra.mxu0 0
        %3047 = vmatprep.subr.bf16.mxu0 0
        %3048 = vmatpush1.bf16.msra.mxu0 0
        %3049 = vmatprep.subr.bf16.mxu0 0
        %3050 = vmatpush1.bf16.msra.mxu0 0
        %3051 = vmatprep.subr.bf16.mxu0 0
        %3052 = vmatpush1.bf16.msra.mxu0 0
        %3053 = vmatprep.subr.bf16.mxu0 0
        %3054 = vmatpush1.bf16.msra.mxu0 0
        %3055 = vmatprep.subr.bf16.mxu0 0
        %3056 = vmatpush1.bf16.msra.mxu0 0
        %3057 = vmatprep.subr.bf16.mxu0 0
        %3058 = vmatpush1.bf16.msra.mxu0 0
        %3059 = vmatprep.subr.bf16.mxu0 0
        %3060 = vmatpush1.bf16.msra.mxu0 0
        %3061 = vmatprep.subr.bf16.mxu0 0
        %3062 = vmatpush1.bf16.msra.mxu0 0
        %3063 = vmatprep.subr.bf16.mxu0 0
        %3064 = vmatpush1.bf16.msra.mxu0 0
        %3065 = vmatprep.mubr.bf16.mxu0 0
        %3066 = vmatmul.mubr.bf16.gmra.mrb[0].mxu0 %v3022
        %v3067 = vpop.f32.mrb[0].mxu0
        %v3068 = vadd.f32 0.0, %v3067
        %v3069 = vpop.f32.mrb[0].mxu0
        %v3070 = vpop.f32.mrb[0].mxu0
        %v3071 = vadd.f32 0.0, %v3070
        %v3072 = vpop.f32.mrb[0].mxu0
        %3073 = vmatprep.mubr.bf16.mxu0 0
        %3074 = vmatmul.mubr.bf16.gmra.mrb[0].mxu0 %v3025
        %v3075 = vpop.f32.mrb[0].mxu0
        %v3076 = vadd.f32 0.0, %v3075
        %v3077 = vpop.f32.mrb[0].mxu0
        %v3078 = vpop.f32.mrb[0].mxu0
        %v3079 = vadd.f32 0.0, %v3078
        %v3080 = vpop.f32.mrb[0].mxu0
        %3081 = vmatprep.mubr.bf16.mxu0 0
        %3082 = vmatmul.mubr.bf16.gmra.mrb[0].mxu0 %v3028
        %v3083 = vpop.f32.mrb[0].mxu0
        %v3084 = vadd.f32 0.0, %v3083
        %v3085 = vpop.f32.mrb[0].mxu0
        %v3086 = vpop.f32.mrb[0].mxu0
        %v3087 = vadd.f32 0.0, %v3086
        %v3088 = vpop.f32.mrb[0].mxu0
        %3089 = vmatprep.mubr.bf16.mxu0 0
        %3090 = vmatmul.mubr.bf16.gmra.mrb[0].mxu0 %v3031
        %v3091 = vpop.f32.mrb[0].mxu0
        %v3092 = vadd.f32 0.0, %v3091
        %v3093 = vpop.f32.mrb[0].mxu0
        %v3094 = vpop.f32.mrb[0].mxu0
        %v3095 = vadd.f32 0.0, %v3094
        %v3096 = vpop.f32.mrb[0].mxu0
        %3097 = vdwg.mxu0
        %v3102 = vunpack.c.l.b16 %v2988
        %v3103 = vunpack.c.l.b16 %v2989
        %v3104 = vunpack.c.l.b16 %v2990
        %v3105 = vunpack.c.l.b16 %v2991
        %v3106 = vpack.c.b16 %v3103, %v3102
        %v3107 = vpack.c.b16 %v3105, %v3104
        %v3111 = vsel %vm2951, %v2984, 0
        %v3114 = vsel %vm2951, %v2985, 0
        %v3117 = vsel %vm2951, %v2986, 0
        %v3120 = vsel %vm2951, %v2987, 0
        %3122 = vmatprep.subr.bf16.mxu0 0
        %3123 = vmatpush1.bf16.msra.mxu0 %v3106
        %3124 = vmatprep.subr.bf16.mxu0 0
        %3125 = vmatpush1.bf16.msra.mxu0 %v3107
        %3126 = vmatprep.subr.bf16.mxu0 0
        %3127 = vmatpush1.bf16.msra.mxu0 0
        %3128 = vmatprep.subr.bf16.mxu0 0
        %3129 = vmatpush1.bf16.msra.mxu0 0
        %3130 = vmatprep.subr.bf16.mxu0 0
        %3131 = vmatpush1.bf16.msra.mxu0 0
        %3132 = vmatprep.subr.bf16.mxu0 0
        %3133 = vmatpush1.bf16.msra.mxu0 0
        %3134 = vmatprep.subr.bf16.mxu0 0
        %3135 = vmatpush1.bf16.msra.mxu0 0
        %3136 = vmatprep.subr.bf16.mxu0 0
        %3137 = vmatpush1.bf16.msra.mxu0 0
        %3138 = vmatprep.subr.bf16.mxu0 0
        %3139 = vmatpush1.bf16.msra.mxu0 0
        %3140 = vmatprep.subr.bf16.mxu0 0
        %3141 = vmatpush1.bf16.msra.mxu0 0
        %3142 = vmatprep.subr.bf16.mxu0 0
        %3143 = vmatpush1.bf16.msra.mxu0 0
        %3144 = vmatprep.subr.bf16.mxu0 0
        %3145 = vmatpush1.bf16.msra.mxu0 0
        %3146 = vmatprep.subr.bf16.mxu0 0
        %3147 = vmatpush1.bf16.msra.mxu0 0
        %3148 = vmatprep.subr.bf16.mxu0 0
        %3149 = vmatpush1.bf16.msra.mxu0 0
        %3150 = vmatprep.subr.bf16.mxu0 0
        %3151 = vmatpush1.bf16.msra.mxu0 0
        %3152 = vmatprep.subr.bf16.mxu0 0
        %3153 = vmatpush1.bf16.msra.mxu0 0
        %3154 = vmatprep.mubr.bf16.mxu0 0
        %3155 = vmatmul.mubr.bf16.gmra.mrb[0].mxu0 %v3111
        %v3156 = vpop.f32.mrb[0].mxu0
        %v3157 = vadd.f32 %v3068, %v3156
        %v3158 = vpop.f32.mrb[0].mxu0
        %v3159 = vpop.f32.mrb[0].mxu0
        %v3160 = vadd.f32 %v3071, %v3159
        %v3161 = vpop.f32.mrb[0].mxu0
        %3162 = vmatprep.mubr.bf16.mxu0 0
        %3163 = vmatmul.mubr.bf16.gmra.mrb[0].mxu0 %v3114
        %v3164 = vpop.f32.mrb[0].mxu0
        %v3165 = vadd.f32 %v3076, %v3164
        %v3166 = vpop.f32.mrb[0].mxu0
        %v3167 = vpop.f32.mrb[0].mxu0
        %v3168 = vadd.f32 %v3079, %v3167
        %v3169 = vpop.f32.mrb[0].mxu0
        %3170 = vmatprep.mubr.bf16.mxu0 0
        %3171 = vmatmul.mubr.bf16.gmra.mrb[0].mxu0 %v3117
        %v3172 = vpop.f32.mrb[0].mxu0
        %v3173 = vadd.f32 %v3084, %v3172
        %v3174 = vpop.f32.mrb[0].mxu0
        %v3175 = vpop.f32.mrb[0].mxu0
        %v3176 = vadd.f32 %v3087, %v3175
        %v3177 = vpop.f32.mrb[0].mxu0
        %3178 = vmatprep.mubr.bf16.mxu0 0
        %3179 = vmatmul.mubr.bf16.gmra.mrb[0].mxu0 %v3120
        %v3180 = vpop.f32.mrb[0].mxu0
        %v3181 = vadd.f32 %v3092, %v3180
        %v3182 = vpop.f32.mrb[0].mxu0
        %v3183 = vpop.f32.mrb[0].mxu0
        %v3184 = vadd.f32 %v3095, %v3183
        %v3185 = vpop.f32.mrb[0].mxu0
        %3186 = vdwg.mxu0
        %v3187 = vld [vmem:[#allocation4 + $0x9] sm:$0xff]
        %v3188 = vld [vmem:[#allocation4 + $0x11] sm:$0xff]
        %v3189 = vld [vmem:[#allocation4 + $0x19] sm:$0xff]
        %v3190 = vld [vmem:[#allocation4 + $0x21] sm:$0xff]
        %v3191 = vld [vmem:[#allocation4 + $0x29] sm:$0xff]
        %v3192 = vld [vmem:[#allocation4 + $0x31] sm:$0xff]
        %v3193 = vld [vmem:[#allocation4 + $0x39] sm:$0xff]
        %v3194 = vld [vmem:[#allocation4 + $0x41] sm:$0xff]
        %v3195 = vmul.f32 %v3187, %v722
        %v3196 = vmul.f32 %v3188, %v723
        %v3197 = vmul.f32 %v3189, %v724
        %v3198 = vmul.f32 %v3190, %v725
        %v3199 = vmul.f32 %v3191, %v726
        %v3200 = vmul.f32 %v3192, %v727
        %v3201 = vmul.f32 %v3193, %v728
        %v3202 = vmul.f32 %v3194, %v729
        %v3203 = vpack.c.bf16 %v3196, %v3195
        %v3204 = vpack.c.bf16 %v3198, %v3197
        %v3205 = vpack.c.bf16 %v3200, %v3199
        %v3206 = vpack.c.bf16 %v3202, %v3201
        %s3207 = scalar_lea.vmem %s3, 32
        %v3208 = vld [vmem:[%s3207] sm:$0xf]
        %v3209 = vld [vmem:[%s3207 + $0x4] sm:$0xf]
        %v3210 = vld [vmem:[%s3207 + $0x8] sm:$0xf]
        %v3211 = vld [vmem:[%s3207 + $0xc] sm:$0xf]
        %v3216 = vunpack.c.l.b16 %v3208
        %v3217 = vunpack.c.l.b16 %v3209
        %v3218 = vunpack.c.l.b16 %v3210
        %v3219 = vunpack.c.l.b16 %v3211
        %v3220 = vpack.c.b16 %v3217, %v3216
        %v3221 = vpack.c.b16 %v3219, %v3218
        %v3225 = vsel %vm2951, %v3203, 0
        %v3228 = vsel %vm2951, %v3204, 0
        %v3231 = vsel %vm2951, %v3205, 0
        %v3234 = vsel %vm2951, %v3206, 0
        %3236 = vmatprep.subr.bf16.mxu0 0
        %3237 = vmatpush1.bf16.msra.mxu0 %v3220
        %3238 = vmatprep.subr.bf16.mxu0 0
        %3239 = vmatpush1.bf16.msra.mxu0 %v3221
        %3240 = vmatprep.subr.bf16.mxu0 0
        %3241 = vmatpush1.bf16.msra.mxu0 0
        %3242 = vmatprep.subr.bf16.mxu0 0
        %3243 = vmatpush1.bf16.msra.mxu0 0
        %3244 = vmatprep.subr.bf16.mxu0 0
        %3245 = vmatpush1.bf16.msra.mxu0 0
        %3246 = vmatprep.subr.bf16.mxu0 0
        %3247 = vmatpush1.bf16.msra.mxu0 0
        %3248 = vmatprep.subr.bf16.mxu0 0
        %3249 = vmatpush1.bf16.msra.mxu0 0
        %3250 = vmatprep.subr.bf16.mxu0 0
        %3251 = vmatpush1.bf16.msra.mxu0 0
        %3252 = vmatprep.subr.bf16.mxu0 0
        %3253 = vmatpush1.bf16.msra.mxu0 0
        %3254 = vmatprep.subr.bf16.mxu0 0
        %3255 = vmatpush1.bf16.msra.mxu0 0
        %3256 = vmatprep.subr.bf16.mxu0 0
        %3257 = vmatpush1.bf16.msra.mxu0 0
        %3258 = vmatprep.subr.bf16.mxu0 0
        %3259 = vmatpush1.bf16.msra.mxu0 0
        %3260 = vmatprep.subr.bf16.mxu0 0
        %3261 = vmatpush1.bf16.msra.mxu0 0
        %3262 = vmatprep.subr.bf16.mxu0 0
        %3263 = vmatpush1.bf16.msra.mxu0 0
        %3264 = vmatprep.subr.bf16.mxu0 0
        %3265 = vmatpush1.bf16.msra.mxu0 0
        %3266 = vmatprep.subr.bf16.mxu0 0
        %3267 = vmatpush1.bf16.msra.mxu0 0
        %3268 = vmatprep.mubr.bf16.mxu0 0
        %3269 = vmatmul.mubr.bf16.gmra.mrb[0].mxu0 %v3225
        %v3270 = vpop.f32.mrb[0].mxu0
        %v3271 = vadd.f32 0.0, %v3270
        %v3272 = vpop.f32.mrb[0].mxu0
        %v3273 = vpop.f32.mrb[0].mxu0
        %v3274 = vadd.f32 0.0, %v3273
        %v3275 = vpop.f32.mrb[0].mxu0
        %3276 = vmatprep.mubr.bf16.mxu0 0
        %3277 = vmatmul.mubr.bf16.gmra.mrb[0].mxu0 %v3228
        %v3278 = vpop.f32.mrb[0].mxu0
        %v3279 = vadd.f32 0.0, %v3278
        %v3280 = vpop.f32.mrb[0].mxu0
        %v3281 = vpop.f32.mrb[0].mxu0
        %v3282 = vadd.f32 0.0, %v3281
        %v3283 = vpop.f32.mrb[0].mxu0
        %3284 = vmatprep.mubr.bf16.mxu0 0
        %3285 = vmatmul.mubr.bf16.gmra.mrb[0].mxu0 %v3231
        %v3286 = vpop.f32.mrb[0].mxu0
        %v3287 = vadd.f32 0.0, %v3286
        %v3288 = vpop.f32.mrb[0].mxu0
        %v3289 = vpop.f32.mrb[0].mxu0
        %v3290 = vadd.f32 0.0, %v3289
        %v3291 = vpop.f32.mrb[0].mxu0
        %3292 = vmatprep.mubr.bf16.mxu0 0
        %3293 = vmatmul.mubr.bf16.gmra.mrb[0].mxu0 %v3234
        %v3294 = vpop.f32.mrb[0].mxu0
        %v3295 = vadd.f32 0.0, %v3294
        %v3296 = vpop.f32.mrb[0].mxu0
        %v3297 = vpop.f32.mrb[0].mxu0
        %v3298 = vadd.f32 0.0, %v3297
        %v3299 = vpop.f32.mrb[0].mxu0
        %3300 = vdwg.mxu0
        %v3301 = vadd.f32 %v3157, %v3271
        %v3302 = vadd.f32 %v3160, %v3274
        %v3303 = vadd.f32 %v3165, %v3279
        %v3304 = vadd.f32 %v3168, %v3282
        %v3305 = vadd.f32 %v3173, %v3287
        %v3306 = vadd.f32 %v3176, %v3290
        %v3307 = vadd.f32 %v3181, %v3295
        %v3308 = vadd.f32 %v3184, %v3298
        %v3309 = vld [vmem:[#allocation4 + $0xf] sm:$0xff]
        %v3310 = vld [vmem:[#allocation4 + $0x17] sm:$0xff]
        %v3311 = vld [vmem:[#allocation4 + $0x1f] sm:$0xff]
        %v3312 = vld [vmem:[#allocation4 + $0x27] sm:$0xff]
        %v3313 = vld [vmem:[#allocation4 + $0x2f] sm:$0xff]
        %v3314 = vld [vmem:[#allocation4 + $0x37] sm:$0xff]
        %v3315 = vld [vmem:[#allocation4 + $0x3f] sm:$0xff]
        %v3316 = vld [vmem:[#allocation4 + $0x47] sm:$0xff]
        %v3317 = vmul.f32 %v3309, %v698
        %v3318 = vmul.f32 %v3310, %v699
        %v3319 = vmul.f32 %v3311, %v700
        %v3320 = vmul.f32 %v3312, %v701
        %v3321 = vmul.f32 %v3313, %v702
        %v3322 = vmul.f32 %v3314, %v703
        %v3323 = vmul.f32 %v3315, %v704
        %v3324 = vmul.f32 %v3316, %v705
        %v3325 = vpack.c.bf16 %v3318, %v3317
        %v3326 = vpack.c.bf16 %v3320, %v3319
        %v3327 = vpack.c.bf16 %v3322, %v3321
        %v3328 = vpack.c.bf16 %v3324, %v3323
        %s3329 = scalar_lea.vmem %s3, 48
        %v3330 = vld [vmem:[%s3329] sm:$0xf]
        %v3331 = vld [vmem:[%s3329 + $0x4] sm:$0xf]
        %v3332 = vld [vmem:[%s3329 + $0x8] sm:$0xf]
        %v3333 = vld [vmem:[%s3329 + $0xc] sm:$0xf]
        %v3338 = vunpack.c.l.b16 %v3330
        %v3339 = vunpack.c.l.b16 %v3331
        %v3340 = vunpack.c.l.b16 %v3332
        %v3341 = vunpack.c.l.b16 %v3333
        %v3342 = vpack.c.b16 %v3339, %v3338
        %v3343 = vpack.c.b16 %v3341, %v3340
        %v3347 = vsel %vm2951, %v3325, 0
        %v3350 = vsel %vm2951, %v3326, 0
        %v3353 = vsel %vm2951, %v3327, 0
        %v3356 = vsel %vm2951, %v3328, 0
        %3358 = vmatprep.subr.bf16.mxu0 0
        %3359 = vmatpush1.bf16.msra.mxu0 %v3342
        %3360 = vmatprep.subr.bf16.mxu0 0
        %3361 = vmatpush1.bf16.msra.mxu0 %v3343
        %3362 = vmatprep.subr.bf16.mxu0 0
        %3363 = vmatpush1.bf16.msra.mxu0 0
        %3364 = vmatprep.subr.bf16.mxu0 0
        %3365 = vmatpush1.bf16.msra.mxu0 0
        %3366 = vmatprep.subr.bf16.mxu0 0
        %3367 = vmatpush1.bf16.msra.mxu0 0
        %3368 = vmatprep.subr.bf16.mxu0 0
        %3369 = vmatpush1.bf16.msra.mxu0 0
        %3370 = vmatprep.subr.bf16.mxu0 0
        %3371 = vmatpush1.bf16.msra.mxu0 0
        %3372 = vmatprep.subr.bf16.mxu0 0
        %3373 = vmatpush1.bf16.msra.mxu0 0
        %3374 = vmatprep.subr.bf16.mxu0 0
        %3375 = vmatpush1.bf16.msra.mxu0 0
        %3376 = vmatprep.subr.bf16.mxu0 0
        %3377 = vmatpush1.bf16.msra.mxu0 0
        %3378 = vmatprep.subr.bf16.mxu0 0
        %3379 = vmatpush1.bf16.msra.mxu0 0
        %3380 = vmatprep.subr.bf16.mxu0 0
        %3381 = vmatpush1.bf16.msra.mxu0 0
        %3382 = vmatprep.subr.bf16.mxu0 0
        %3383 = vmatpush1.bf16.msra.mxu0 0
        %3384 = vmatprep.subr.bf16.mxu0 0
        %3385 = vmatpush1.bf16.msra.mxu0 0
        %3386 = vmatprep.subr.bf16.mxu0 0
        %3387 = vmatpush1.bf16.msra.mxu0 0
        %3388 = vmatprep.subr.bf16.mxu0 0
        %3389 = vmatpush1.bf16.msra.mxu0 0
        %3390 = vmatprep.mubr.bf16.mxu0 0
        %3391 = vmatmul.mubr.bf16.gmra.mrb[0].mxu0 %v3347
        %v3392 = vpop.f32.mrb[0].mxu0
        %v3393 = vadd.f32 0.0, %v3392
        %v3394 = vpop.f32.mrb[0].mxu0
        %v3395 = vpop.f32.mrb[0].mxu0
        %v3396 = vadd.f32 0.0, %v3395
        %v3397 = vpop.f32.mrb[0].mxu0
        %3398 = vmatprep.mubr.bf16.mxu0 0
        %3399 = vmatmul.mubr.bf16.gmra.mrb[0].mxu0 %v3350
        %v3400 = vpop.f32.mrb[0].mxu0
        %v3401 = vadd.f32 0.0, %v3400
        %v3402 = vpop.f32.mrb[0].mxu0
        %v3403 = vpop.f32.mrb[0].mxu0
        %v3404 = vadd.f32 0.0, %v3403
        %v3405 = vpop.f32.mrb[0].mxu0
        %3406 = vmatprep.mubr.bf16.mxu0 0
        %3407 = vmatmul.mubr.bf16.gmra.mrb[0].mxu0 %v3353
        %v3408 = vpop.f32.mrb[0].mxu0
        %v3409 = vadd.f32 0.0, %v3408
        %v3410 = vpop.f32.mrb[0].mxu0
        %v3411 = vpop.f32.mrb[0].mxu0
        %v3412 = vadd.f32 0.0, %v3411
        %v3413 = vpop.f32.mrb[0].mxu0
        %3414 = vmatprep.mubr.bf16.mxu0 0
        %3415 = vmatmul.mubr.bf16.gmra.mrb[0].mxu0 %v3356
        %v3416 = vpop.f32.mrb[0].mxu0
        %v3417 = vadd.f32 0.0, %v3416
        %v3418 = vpop.f32.mrb[0].mxu0
        %v3419 = vpop.f32.mrb[0].mxu0
        %v3420 = vadd.f32 0.0, %v3419
        %v3421 = vpop.f32.mrb[0].mxu0
        %3422 = vdwg.mxu0
        %v3423 = vadd.f32 %v3301, %v3393
        %v3424 = vadd.f32 %v3302, %v3396
        %v3425 = vadd.f32 %v3303, %v3401
        %v3426 = vadd.f32 %v3304, %v3404
        %v3427 = vadd.f32 %v3305, %v3409
        %v3428 = vadd.f32 %v3306, %v3412
        %v3429 = vadd.f32 %v3307, %v3417
        %v3430 = vadd.f32 %v3308, %v3420
        %v3431 = vld [vmem:[#allocation4 + $0x10] sm:$0xff]
        %v3432 = vld [vmem:[#allocation4 + $0x18] sm:$0xff]
        %v3433 = vld [vmem:[#allocation4 + $0x20] sm:$0xff]
        %v3434 = vld [vmem:[#allocation4 + $0x28] sm:$0xff]
        %v3435 = vld [vmem:[#allocation4 + $0x30] sm:$0xff]
        %v3436 = vld [vmem:[#allocation4 + $0x38] sm:$0xff]
        %v3437 = vld [vmem:[#allocation4 + $0x40] sm:$0xff]
        %v3438 = vld [vmem:[#allocation4 + $0x48] sm:$0xff]
        %v3439 = vpack.c.bf16 %v3432, %v3431
        %v3440 = vpack.c.bf16 %v3434, %v3433
        %v3441 = vpack.c.bf16 %v3436, %v3435
        %v3442 = vpack.c.bf16 %v3438, %v3437
        %s3443 = scalar_lea.vmem %s3, 64
        %v3444 = vld [vmem:[%s3443] sm:$0xf]
        %v3445 = vld [vmem:[%s3443 + $0x4] sm:$0xf]
        %v3446 = vld [vmem:[%s3443 + $0x8] sm:$0xf]
        %v3447 = vld [vmem:[%s3443 + $0xc] sm:$0xf]
        %v3452 = vunpack.c.l.b16 %v3444
        %v3453 = vunpack.c.l.b16 %v3445
        %v3454 = vunpack.c.l.b16 %v3446
        %v3455 = vunpack.c.l.b16 %v3447
        %v3456 = vpack.c.b16 %v3453, %v3452
        %v3457 = vpack.c.b16 %v3455, %v3454
        %v3461 = vsel %vm2951, %v3439, 0
        %v3464 = vsel %vm2951, %v3440, 0
        %v3467 = vsel %vm2951, %v3441, 0
        %v3470 = vsel %vm2951, %v3442, 0
        %3472 = vmatprep.subr.bf16.mxu0 0
        %3473 = vmatpush1.bf16.msra.mxu0 %v3456
        %3474 = vmatprep.subr.bf16.mxu0 0
        %3475 = vmatpush1.bf16.msra.mxu0 %v3457
        %3476 = vmatprep.subr.bf16.mxu0 0
        %3477 = vmatpush1.bf16.msra.mxu0 0
        %3478 = vmatprep.subr.bf16.mxu0 0
        %3479 = vmatpush1.bf16.msra.mxu0 0
        %3480 = vmatprep.subr.bf16.mxu0 0
        %3481 = vmatpush1.bf16.msra.mxu0 0
        %3482 = vmatprep.subr.bf16.mxu0 0
        %3483 = vmatpush1.bf16.msra.mxu0 0
        %3484 = vmatprep.subr.bf16.mxu0 0
        %3485 = vmatpush1.bf16.msra.mxu0 0
        %3486 = vmatprep.subr.bf16.mxu0 0
        %3487 = vmatpush1.bf16.msra.mxu0 0
        %3488 = vmatprep.subr.bf16.mxu0 0
        %3489 = vmatpush1.bf16.msra.mxu0 0
        %3490 = vmatprep.subr.bf16.mxu0 0
        %3491 = vmatpush1.bf16.msra.mxu0 0
        %3492 = vmatprep.subr.bf16.mxu0 0
        %3493 = vmatpush1.bf16.msra.mxu0 0
        %3494 = vmatprep.subr.bf16.mxu0 0
        %3495 = vmatpush1.bf16.msra.mxu0 0
        %3496 = vmatprep.subr.bf16.mxu0 0
        %3497 = vmatpush1.bf16.msra.mxu0 0
        %3498 = vmatprep.subr.bf16.mxu0 0
        %3499 = vmatpush1.bf16.msra.mxu0 0
        %3500 = vmatprep.subr.bf16.mxu0 0
        %3501 = vmatpush1.bf16.msra.mxu0 0
        %3502 = vmatprep.subr.bf16.mxu0 0
        %3503 = vmatpush1.bf16.msra.mxu0 0
        %3504 = vmatprep.mubr.bf16.mxu0 0
        %3505 = vmatmul.mubr.bf16.gmra.mrb[0].mxu0 %v3461
        %v3506 = vpop.f32.mrb[0].mxu0
        %v3507 = vadd.f32 0.0, %v3506
        %v3508 = vpop.f32.mrb[0].mxu0
        %v3509 = vpop.f32.mrb[0].mxu0
        %v3510 = vadd.f32 0.0, %v3509
        %v3511 = vpop.f32.mrb[0].mxu0
        %3512 = vmatprep.mubr.bf16.mxu0 0
        %3513 = vmatmul.mubr.bf16.gmra.mrb[0].mxu0 %v3464
        %v3514 = vpop.f32.mrb[0].mxu0
        %v3515 = vadd.f32 0.0, %v3514
        %v3516 = vpop.f32.mrb[0].mxu0
        %v3517 = vpop.f32.mrb[0].mxu0
        %v3518 = vadd.f32 0.0, %v3517
        %v3519 = vpop.f32.mrb[0].mxu0
        %3520 = vmatprep.mubr.bf16.mxu0 0
        %3521 = vmatmul.mubr.bf16.gmra.mrb[0].mxu0 %v3467
        %v3522 = vpop.f32.mrb[0].mxu0
        %v3523 = vadd.f32 0.0, %v3522
        %v3524 = vpop.f32.mrb[0].mxu0
        %v3525 = vpop.f32.mrb[0].mxu0
        %v3526 = vadd.f32 0.0, %v3525
        %v3527 = vpop.f32.mrb[0].mxu0
        %3528 = vmatprep.mubr.bf16.mxu0 0
        %3529 = vmatmul.mubr.bf16.gmra.mrb[0].mxu0 %v3470
        %v3530 = vpop.f32.mrb[0].mxu0
        %v3531 = vadd.f32 0.0, %v3530
        %v3532 = vpop.f32.mrb[0].mxu0
        %v3533 = vpop.f32.mrb[0].mxu0
        %v3534 = vadd.f32 0.0, %v3533
        %v3535 = vpop.f32.mrb[0].mxu0
        %3536 = vdwg.mxu0
        %v3537 = vadd.f32 %v3423, %v3507
        %v3538 = vadd.f32 %v3424, %v3510
        %v3539 = vadd.f32 %v3425, %v3515
        %v3540 = vadd.f32 %v3426, %v3518
        %v3541 = vadd.f32 %v3427, %v3523
        %v3542 = vadd.f32 %v3428, %v3526
        %v3543 = vadd.f32 %v3429, %v3531
        %v3544 = vadd.f32 %v3430, %v3534
        %v3545 = vld [vmem:[#allocation4 + $0x11] sm:$0xff]
        %v3546 = vld [vmem:[#allocation4 + $0x19] sm:$0xff]
        %v3547 = vld [vmem:[#allocation4 + $0x21] sm:$0xff]
        %v3548 = vld [vmem:[#allocation4 + $0x29] sm:$0xff]
        %v3549 = vld [vmem:[#allocation4 + $0x31] sm:$0xff]
        %v3550 = vld [vmem:[#allocation4 + $0x39] sm:$0xff]
        %v3551 = vld [vmem:[#allocation4 + $0x41] sm:$0xff]
        %v3552 = vld [vmem:[#allocation4 + $0x49] sm:$0xff]
        %v3553 = vmul.f32 %v3545, %v722
        %v3554 = vmul.f32 %v3546, %v723
        %v3555 = vmul.f32 %v3547, %v724
        %v3556 = vmul.f32 %v3548, %v725
        %v3557 = vmul.f32 %v3549, %v726
        %v3558 = vmul.f32 %v3550, %v727
        %v3559 = vmul.f32 %v3551, %v728
        %v3560 = vmul.f32 %v3552, %v729
        %v3561 = vpack.c.bf16 %v3554, %v3553
        %v3562 = vpack.c.bf16 %v3556, %v3555
        %v3563 = vpack.c.bf16 %v3558, %v3557
        %v3564 = vpack.c.bf16 %v3560, %v3559
        %s3565 = scalar_lea.vmem %s3, 80
        %v3566 = vld [vmem:[%s3565] sm:$0xf]
        %v3567 = vld [vmem:[%s3565 + $0x4] sm:$0xf]
        %v3568 = vld [vmem:[%s3565 + $0x8] sm:$0xf]
        %v3569 = vld [vmem:[%s3565 + $0xc] sm:$0xf]
        %v3574 = vunpack.c.l.b16 %v3566
        %v3575 = vunpack.c.l.b16 %v3567
        %v3576 = vunpack.c.l.b16 %v3568
        %v3577 = vunpack.c.l.b16 %v3569
        %v3578 = vpack.c.b16 %v3575, %v3574
        %v3579 = vpack.c.b16 %v3577, %v3576
        %v3583 = vsel %vm2951, %v3561, 0
        %v3586 = vsel %vm2951, %v3562, 0
        %v3589 = vsel %vm2951, %v3563, 0
        %v3592 = vsel %vm2951, %v3564, 0
        %3594 = vmatprep.subr.bf16.mxu0 0
        %3595 = vmatpush1.bf16.msra.mxu0 %v3578
        %3596 = vmatprep.subr.bf16.mxu0 0
        %3597 = vmatpush1.bf16.msra.mxu0 %v3579
        %3598 = vmatprep.subr.bf16.mxu0 0
        %3599 = vmatpush1.bf16.msra.mxu0 0
        %3600 = vmatprep.subr.bf16.mxu0 0
        %3601 = vmatpush1.bf16.msra.mxu0 0
        %3602 = vmatprep.subr.bf16.mxu0 0
        %3603 = vmatpush1.bf16.msra.mxu0 0
        %3604 = vmatprep.subr.bf16.mxu0 0
        %3605 = vmatpush1.bf16.msra.mxu0 0
        %3606 = vmatprep.subr.bf16.mxu0 0
        %3607 = vmatpush1.bf16.msra.mxu0 0
        %3608 = vmatprep.subr.bf16.mxu0 0
        %3609 = vmatpush1.bf16.msra.mxu0 0
        %3610 = vmatprep.subr.bf16.mxu0 0
        %3611 = vmatpush1.bf16.msra.mxu0 0
        %3612 = vmatprep.subr.bf16.mxu0 0
        %3613 = vmatpush1.bf16.msra.mxu0 0
        %3614 = vmatprep.subr.bf16.mxu0 0
        %3615 = vmatpush1.bf16.msra.mxu0 0
        %3616 = vmatprep.subr.bf16.mxu0 0
        %3617 = vmatpush1.bf16.msra.mxu0 0
        %3618 = vmatprep.subr.bf16.mxu0 0
        %3619 = vmatpush1.bf16.msra.mxu0 0
        %3620 = vmatprep.subr.bf16.mxu0 0
        %3621 = vmatpush1.bf16.msra.mxu0 0
        %3622 = vmatprep.subr.bf16.mxu0 0
        %3623 = vmatpush1.bf16.msra.mxu0 0
        %3624 = vmatprep.subr.bf16.mxu0 0
        %3625 = vmatpush1.bf16.msra.mxu0 0
        %3626 = vmatprep.mubr.bf16.mxu0 0
        %3627 = vmatmul.mubr.bf16.gmra.mrb[0].mxu0 %v3583
        %v3628 = vpop.f32.mrb[0].mxu0
        %v3629 = vadd.f32 0.0, %v3628
        %v3630 = vpop.f32.mrb[0].mxu0
        %v3631 = vpop.f32.mrb[0].mxu0
        %v3632 = vadd.f32 0.0, %v3631
        %v3633 = vpop.f32.mrb[0].mxu0
        %3634 = vmatprep.mubr.bf16.mxu0 0
        %3635 = vmatmul.mubr.bf16.gmra.mrb[0].mxu0 %v3586
        %v3636 = vpop.f32.mrb[0].mxu0
        %v3637 = vadd.f32 0.0, %v3636
        %v3638 = vpop.f32.mrb[0].mxu0
        %v3639 = vpop.f32.mrb[0].mxu0
        %v3640 = vadd.f32 0.0, %v3639
        %v3641 = vpop.f32.mrb[0].mxu0
        %3642 = vmatprep.mubr.bf16.mxu0 0
        %3643 = vmatmul.mubr.bf16.gmra.mrb[0].mxu0 %v3589
        %v3644 = vpop.f32.mrb[0].mxu0
        %v3645 = vadd.f32 0.0, %v3644
        %v3646 = vpop.f32.mrb[0].mxu0
        %v3647 = vpop.f32.mrb[0].mxu0
        %v3648 = vadd.f32 0.0, %v3647
        %v3649 = vpop.f32.mrb[0].mxu0
        %3650 = vmatprep.mubr.bf16.mxu0 0
        %3651 = vmatmul.mubr.bf16.gmra.mrb[0].mxu0 %v3592
        %v3652 = vpop.f32.mrb[0].mxu0
        %v3653 = vadd.f32 0.0, %v3652
        %v3654 = vpop.f32.mrb[0].mxu0
        %v3655 = vpop.f32.mrb[0].mxu0
        %v3656 = vadd.f32 0.0, %v3655
        %v3657 = vpop.f32.mrb[0].mxu0
        %3658 = vdwg.mxu0
        %v3659 = vadd.f32 %v3537, %v3629
        %v3660 = vadd.f32 %v3538, %v3632
        %v3661 = vadd.f32 %v3539, %v3637
        %v3662 = vadd.f32 %v3540, %v3640
        %v3663 = vadd.f32 %v3541, %v3645
        %v3664 = vadd.f32 %v3542, %v3648
        %v3665 = vadd.f32 %v3543, %v3653
        %v3666 = vadd.f32 %v3544, %v3656
        %v3667 = vld [vmem:[#allocation4 + $0x17] sm:$0xff]
        %v3668 = vld [vmem:[#allocation4 + $0x1f] sm:$0xff]
        %v3669 = vld [vmem:[#allocation4 + $0x27] sm:$0xff]
        %v3670 = vld [vmem:[#allocation4 + $0x2f] sm:$0xff]
        %v3671 = vld [vmem:[#allocation4 + $0x37] sm:$0xff]
        %v3672 = vld [vmem:[#allocation4 + $0x3f] sm:$0xff]
        %v3673 = vld [vmem:[#allocation4 + $0x47] sm:$0xff]
        %v3674 = vld [vmem:[#allocation4 + $0x4f] sm:$0xff]
        %v3675 = vmul.f32 %v3667, %v698
        %v3676 = vmul.f32 %v3668, %v699
        %v3677 = vmul.f32 %v3669, %v700
        %v3678 = vmul.f32 %v3670, %v701
        %v3679 = vmul.f32 %v3671, %v702
        %v3680 = vmul.f32 %v3672, %v703
        %v3681 = vmul.f32 %v3673, %v704
        %v3682 = vmul.f32 %v3674, %v705
        %v3683 = vpack.c.bf16 %v3676, %v3675
        %v3684 = vpack.c.bf16 %v3678, %v3677
        %v3685 = vpack.c.bf16 %v3680, %v3679
        %v3686 = vpack.c.bf16 %v3682, %v3681
        %s3687 = scalar_lea.vmem %s3, 96
        %v3688 = vld [vmem:[%s3687] sm:$0xf]
        %v3689 = vld [vmem:[%s3687 + $0x4] sm:$0xf]
        %v3690 = vld [vmem:[%s3687 + $0x8] sm:$0xf]
        %v3691 = vld [vmem:[%s3687 + $0xc] sm:$0xf]
        %v3696 = vunpack.c.l.b16 %v3688
        %v3697 = vunpack.c.l.b16 %v3689
        %v3698 = vunpack.c.l.b16 %v3690
        %v3699 = vunpack.c.l.b16 %v3691
        %v3700 = vpack.c.b16 %v3697, %v3696
        %v3701 = vpack.c.b16 %v3699, %v3698
        %v3705 = vsel %vm2951, %v3683, 0
        %v3708 = vsel %vm2951, %v3684, 0
        %v3711 = vsel %vm2951, %v3685, 0
        %v3714 = vsel %vm2951, %v3686, 0
        %3716 = vmatprep.subr.bf16.mxu0 0
        %3717 = vmatpush1.bf16.msra.mxu0 %v3700
        %3718 = vmatprep.subr.bf16.mxu0 0
        %3719 = vmatpush1.bf16.msra.mxu0 %v3701
        %3720 = vmatprep.subr.bf16.mxu0 0
        %3721 = vmatpush1.bf16.msra.mxu0 0
        %3722 = vmatprep.subr.bf16.mxu0 0
        %3723 = vmatpush1.bf16.msra.mxu0 0
        %3724 = vmatprep.subr.bf16.mxu0 0
        %3725 = vmatpush1.bf16.msra.mxu0 0
        %3726 = vmatprep.subr.bf16.mxu0 0
        %3727 = vmatpush1.bf16.msra.mxu0 0
        %3728 = vmatprep.subr.bf16.mxu0 0
        %3729 = vmatpush1.bf16.msra.mxu0 0
        %3730 = vmatprep.subr.bf16.mxu0 0
        %3731 = vmatpush1.bf16.msra.mxu0 0
        %3732 = vmatprep.subr.bf16.mxu0 0
        %3733 = vmatpush1.bf16.msra.mxu0 0
        %3734 = vmatprep.subr.bf16.mxu0 0
        %3735 = vmatpush1.bf16.msra.mxu0 0
        %3736 = vmatprep.subr.bf16.mxu0 0
        %3737 = vmatpush1.bf16.msra.mxu0 0
        %3738 = vmatprep.subr.bf16.mxu0 0
        %3739 = vmatpush1.bf16.msra.mxu0 0
        %3740 = vmatprep.subr.bf16.mxu0 0
        %3741 = vmatpush1.bf16.msra.mxu0 0
        %3742 = vmatprep.subr.bf16.mxu0 0
        %3743 = vmatpush1.bf16.msra.mxu0 0
        %3744 = vmatprep.subr.bf16.mxu0 0
        %3745 = vmatpush1.bf16.msra.mxu0 0
        %3746 = vmatprep.subr.bf16.mxu0 0
        %3747 = vmatpush1.bf16.msra.mxu0 0
        %3748 = vmatprep.mubr.bf16.mxu0 0
        %3749 = vmatmul.mubr.bf16.gmra.mrb[0].mxu0 %v3705
        %v3750 = vpop.f32.mrb[0].mxu0
        %v3751 = vadd.f32 0.0, %v3750
        %v3752 = vpop.f32.mrb[0].mxu0
        %v3753 = vpop.f32.mrb[0].mxu0
        %v3754 = vadd.f32 0.0, %v3753
        %v3755 = vpop.f32.mrb[0].mxu0
        %3756 = vmatprep.mubr.bf16.mxu0 0
        %3757 = vmatmul.mubr.bf16.gmra.mrb[0].mxu0 %v3708
        %v3758 = vpop.f32.mrb[0].mxu0
        %v3759 = vadd.f32 0.0, %v3758
        %v3760 = vpop.f32.mrb[0].mxu0
        %v3761 = vpop.f32.mrb[0].mxu0
        %v3762 = vadd.f32 0.0, %v3761
        %v3763 = vpop.f32.mrb[0].mxu0
        %3764 = vmatprep.mubr.bf16.mxu0 0
        %3765 = vmatmul.mubr.bf16.gmra.mrb[0].mxu0 %v3711
        %v3766 = vpop.f32.mrb[0].mxu0
        %v3767 = vadd.f32 0.0, %v3766
        %v3768 = vpop.f32.mrb[0].mxu0
        %v3769 = vpop.f32.mrb[0].mxu0
        %v3770 = vadd.f32 0.0, %v3769
        %v3771 = vpop.f32.mrb[0].mxu0
        %3772 = vmatprep.mubr.bf16.mxu0 0
        %3773 = vmatmul.mubr.bf16.gmra.mrb[0].mxu0 %v3714
        %v3774 = vpop.f32.mrb[0].mxu0
        %v3775 = vadd.f32 0.0, %v3774
        %v3776 = vpop.f32.mrb[0].mxu0
        %v3777 = vpop.f32.mrb[0].mxu0
        %v3778 = vadd.f32 0.0, %v3777
        %v3779 = vpop.f32.mrb[0].mxu0
        %3780 = vdwg.mxu0
        %v3781 = vadd.f32 %v3659, %v3751
        %v3782 = vadd.f32 %v3660, %v3754
        %v3783 = vadd.f32 %v3661, %v3759
        %v3784 = vadd.f32 %v3662, %v3762
        %v3785 = vadd.f32 %v3663, %v3767
        %v3786 = vadd.f32 %v3664, %v3770
        %v3787 = vadd.f32 %v3665, %v3775
        %v3788 = vadd.f32 %v3666, %v3778
        %v3789 = vld [vmem:[#allocation4 + $0x18] sm:$0xff]
        %v3790 = vld [vmem:[#allocation4 + $0x20] sm:$0xff]
        %v3791 = vld [vmem:[#allocation4 + $0x28] sm:$0xff]
        %v3792 = vld [vmem:[#allocation4 + $0x30] sm:$0xff]
        %v3793 = vld [vmem:[#allocation4 + $0x38] sm:$0xff]
        %v3794 = vld [vmem:[#allocation4 + $0x40] sm:$0xff]
        %v3795 = vld [vmem:[#allocation4 + $0x48] sm:$0xff]
        %v3796 = vld [vmem:[#allocation4 + $0x50] sm:$0xff]
        %v3797 = vpack.c.bf16 %v3790, %v3789
        %v3798 = vpack.c.bf16 %v3792, %v3791
        %v3799 = vpack.c.bf16 %v3794, %v3793
        %v3800 = vpack.c.bf16 %v3796, %v3795
        %s3801 = scalar_lea.vmem %s3, 112
        %v3802 = vld [vmem:[%s3801] sm:$0xf]
        %v3803 = vld [vmem:[%s3801 + $0x4] sm:$0xf]
        %v3804 = vld [vmem:[%s3801 + $0x8] sm:$0xf]
        %v3805 = vld [vmem:[%s3801 + $0xc] sm:$0xf]
        %v3810 = vunpack.c.l.b16 %v3802
        %v3811 = vunpack.c.l.b16 %v3803
        %v3812 = vunpack.c.l.b16 %v3804
        %v3813 = vunpack.c.l.b16 %v3805
        %v3814 = vpack.c.b16 %v3811, %v3810
        %v3815 = vpack.c.b16 %v3813, %v3812
        %v3819 = vsel %vm2951, %v3797, 0
        %v3822 = vsel %vm2951, %v3798, 0
        %v3825 = vsel %vm2951, %v3799, 0
        %v3828 = vsel %vm2951, %v3800, 0
        %3830 = vmatprep.subr.bf16.mxu0 0
        %3831 = vmatpush1.bf16.msra.mxu0 %v3814
        %3832 = vmatprep.subr.bf16.mxu0 0
        %3833 = vmatpush1.bf16.msra.mxu0 %v3815
        %3834 = vmatprep.subr.bf16.mxu0 0
        %3835 = vmatpush1.bf16.msra.mxu0 0
        %3836 = vmatprep.subr.bf16.mxu0 0
        %3837 = vmatpush1.bf16.msra.mxu0 0
        %3838 = vmatprep.subr.bf16.mxu0 0
        %3839 = vmatpush1.bf16.msra.mxu0 0
        %3840 = vmatprep.subr.bf16.mxu0 0
        %3841 = vmatpush1.bf16.msra.mxu0 0
        %3842 = vmatprep.subr.bf16.mxu0 0
        %3843 = vmatpush1.bf16.msra.mxu0 0
        %3844 = vmatprep.subr.bf16.mxu0 0
        %3845 = vmatpush1.bf16.msra.mxu0 0
        %3846 = vmatprep.subr.bf16.mxu0 0
        %3847 = vmatpush1.bf16.msra.mxu0 0
        %3848 = vmatprep.subr.bf16.mxu0 0
        %3849 = vmatpush1.bf16.msra.mxu0 0
        %3850 = vmatprep.subr.bf16.mxu0 0
        %3851 = vmatpush1.bf16.msra.mxu0 0
        %3852 = vmatprep.subr.bf16.mxu0 0
        %3853 = vmatpush1.bf16.msra.mxu0 0
        %3854 = vmatprep.subr.bf16.mxu0 0
        %3855 = vmatpush1.bf16.msra.mxu0 0
        %3856 = vmatprep.subr.bf16.mxu0 0
        %3857 = vmatpush1.bf16.msra.mxu0 0
        %3858 = vmatprep.subr.bf16.mxu0 0
        %3859 = vmatpush1.bf16.msra.mxu0 0
        %3860 = vmatprep.subr.bf16.mxu0 0
        %3861 = vmatpush1.bf16.msra.mxu0 0
        %3862 = vmatprep.mubr.bf16.mxu0 0
        %3863 = vmatmul.mubr.bf16.gmra.mrb[0].mxu0 %v3819
        %v3864 = vpop.f32.mrb[0].mxu0
        %v3865 = vadd.f32 0.0, %v3864
        %v3866 = vpop.f32.mrb[0].mxu0
        %v3867 = vpop.f32.mrb[0].mxu0
        %v3868 = vadd.f32 0.0, %v3867
        %v3869 = vpop.f32.mrb[0].mxu0
        %3870 = vmatprep.mubr.bf16.mxu0 0
        %3871 = vmatmul.mubr.bf16.gmra.mrb[0].mxu0 %v3822
        %v3872 = vpop.f32.mrb[0].mxu0
        %v3873 = vadd.f32 0.0, %v3872
        %v3874 = vpop.f32.mrb[0].mxu0
        %v3875 = vpop.f32.mrb[0].mxu0
        %v3876 = vadd.f32 0.0, %v3875
        %v3877 = vpop.f32.mrb[0].mxu0
        %3878 = vmatprep.mubr.bf16.mxu0 0
        %3879 = vmatmul.mubr.bf16.gmra.mrb[0].mxu0 %v3825
        %v3880 = vpop.f32.mrb[0].mxu0
        %v3881 = vadd.f32 0.0, %v3880
        %v3882 = vpop.f32.mrb[0].mxu0
        %v3883 = vpop.f32.mrb[0].mxu0
        %v3884 = vadd.f32 0.0, %v3883
        %v3885 = vpop.f32.mrb[0].mxu0
        %3886 = vmatprep.mubr.bf16.mxu0 0
        %3887 = vmatmul.mubr.bf16.gmra.mrb[0].mxu0 %v3828
        %v3888 = vpop.f32.mrb[0].mxu0
        %v3889 = vadd.f32 0.0, %v3888
        %v3890 = vpop.f32.mrb[0].mxu0
        %v3891 = vpop.f32.mrb[0].mxu0
        %v3892 = vadd.f32 0.0, %v3891
        %v3893 = vpop.f32.mrb[0].mxu0
        %3894 = vdwg.mxu0
        %v3895 = vadd.f32 %v3781, %v3865
        %v3896 = vadd.f32 %v3782, %v3868
        %v3897 = vadd.f32 %v3783, %v3873
        %v3898 = vadd.f32 %v3784, %v3876
        %v3899 = vadd.f32 %v3785, %v3881
        %v3900 = vadd.f32 %v3786, %v3884
        %v3901 = vadd.f32 %v3787, %v3889
        %v3902 = vadd.f32 %v3788, %v3892
        %v3903 = vld [vmem:[#allocation4 + $0x19] sm:$0xff]
        %v3904 = vld [vmem:[#allocation4 + $0x21] sm:$0xff]
        %v3905 = vld [vmem:[#allocation4 + $0x29] sm:$0xff]
        %v3906 = vld [vmem:[#allocation4 + $0x31] sm:$0xff]
        %v3907 = vld [vmem:[#allocation4 + $0x39] sm:$0xff]
        %v3908 = vld [vmem:[#allocation4 + $0x41] sm:$0xff]
        %v3909 = vld [vmem:[#allocation4 + $0x49] sm:$0xff]
        %v3910 = vld [vmem:[#allocation4 + $0x51] sm:$0xff]
        %v3911 = vmul.f32 %v3903, %v722
        %v3912 = vmul.f32 %v3904, %v723
        %v3913 = vmul.f32 %v3905, %v724
        %v3914 = vmul.f32 %v3906, %v725
        %v3915 = vmul.f32 %v3907, %v726
        %v3916 = vmul.f32 %v3908, %v727
        %v3917 = vmul.f32 %v3909, %v728
        %v3918 = vmul.f32 %v3910, %v729
        %v3919 = vpack.c.bf16 %v3912, %v3911
        %v3920 = vpack.c.bf16 %v3914, %v3913
        %v3921 = vpack.c.bf16 %v3916, %v3915
        %v3922 = vpack.c.bf16 %v3918, %v3917
        %s3923 = scalar_lea.vmem %s3, 128
        %v3924 = vld [vmem:[%s3923] sm:$0xf]
        %v3925 = vld [vmem:[%s3923 + $0x4] sm:$0xf]
        %v3926 = vld [vmem:[%s3923 + $0x8] sm:$0xf]
        %v3927 = vld [vmem:[%s3923 + $0xc] sm:$0xf]
        %v3932 = vunpack.c.l.b16 %v3924
        %v3933 = vunpack.c.l.b16 %v3925
        %v3934 = vunpack.c.l.b16 %v3926
        %v3935 = vunpack.c.l.b16 %v3927
        %v3936 = vpack.c.b16 %v3933, %v3932
        %v3937 = vpack.c.b16 %v3935, %v3934
        %v3941 = vsel %vm2951, %v3919, 0
        %v3944 = vsel %vm2951, %v3920, 0
        %v3947 = vsel %vm2951, %v3921, 0
        %v3950 = vsel %vm2951, %v3922, 0
        %3952 = vmatprep.subr.bf16.mxu0 0
        %3953 = vmatpush1.bf16.msra.mxu0 %v3936
        %3954 = vmatprep.subr.bf16.mxu0 0
        %3955 = vmatpush1.bf16.msra.mxu0 %v3937
        %3956 = vmatprep.subr.bf16.mxu0 0
        %3957 = vmatpush1.bf16.msra.mxu0 0
        %3958 = vmatprep.subr.bf16.mxu0 0
        %3959 = vmatpush1.bf16.msra.mxu0 0
        %3960 = vmatprep.subr.bf16.mxu0 0
        %3961 = vmatpush1.bf16.msra.mxu0 0
        %3962 = vmatprep.subr.bf16.mxu0 0
        %3963 = vmatpush1.bf16.msra.mxu0 0
        %3964 = vmatprep.subr.bf16.mxu0 0
        %3965 = vmatpush1.bf16.msra.mxu0 0
        %3966 = vmatprep.subr.bf16.mxu0 0
        %3967 = vmatpush1.bf16.msra.mxu0 0
        %3968 = vmatprep.subr.bf16.mxu0 0
        %3969 = vmatpush1.bf16.msra.mxu0 0
        %3970 = vmatprep.subr.bf16.mxu0 0
        %3971 = vmatpush1.bf16.msra.mxu0 0
        %3972 = vmatprep.subr.bf16.mxu0 0
        %3973 = vmatpush1.bf16.msra.mxu0 0
        %3974 = vmatprep.subr.bf16.mxu0 0
        %3975 = vmatpush1.bf16.msra.mxu0 0
        %3976 = vmatprep.subr.bf16.mxu0 0
        %3977 = vmatpush1.bf16.msra.mxu0 0
        %3978 = vmatprep.subr.bf16.mxu0 0
        %3979 = vmatpush1.bf16.msra.mxu0 0
        %3980 = vmatprep.subr.bf16.mxu0 0
        %3981 = vmatpush1.bf16.msra.mxu0 0
        %3982 = vmatprep.subr.bf16.mxu0 0
        %3983 = vmatpush1.bf16.msra.mxu0 0
        %3984 = vmatprep.mubr.bf16.mxu0 0
        %3985 = vmatmul.mubr.bf16.gmra.mrb[0].mxu0 %v3941
        %v3986 = vpop.f32.mrb[0].mxu0
        %v3987 = vadd.f32 0.0, %v3986
        %v3988 = vpop.f32.mrb[0].mxu0
        %v3989 = vpop.f32.mrb[0].mxu0
        %v3990 = vadd.f32 0.0, %v3989
        %v3991 = vpop.f32.mrb[0].mxu0
        %3992 = vmatprep.mubr.bf16.mxu0 0
        %3993 = vmatmul.mubr.bf16.gmra.mrb[0].mxu0 %v3944
        %v3994 = vpop.f32.mrb[0].mxu0
        %v3995 = vadd.f32 0.0, %v3994
        %v3996 = vpop.f32.mrb[0].mxu0
        %v3997 = vpop.f32.mrb[0].mxu0
        %v3998 = vadd.f32 0.0, %v3997
        %v3999 = vpop.f32.mrb[0].mxu0
        %4000 = vmatprep.mubr.bf16.mxu0 0
        %4001 = vmatmul.mubr.bf16.gmra.mrb[0].mxu0 %v3947
        %v4002 = vpop.f32.mrb[0].mxu0
        %v4003 = vadd.f32 0.0, %v4002
        %v4004 = vpop.f32.mrb[0].mxu0
        %v4005 = vpop.f32.mrb[0].mxu0
        %v4006 = vadd.f32 0.0, %v4005
        %v4007 = vpop.f32.mrb[0].mxu0
        %4008 = vmatprep.mubr.bf16.mxu0 0
        %4009 = vmatmul.mubr.bf16.gmra.mrb[0].mxu0 %v3950
        %v4010 = vpop.f32.mrb[0].mxu0
        %v4011 = vadd.f32 0.0, %v4010
        %v4012 = vpop.f32.mrb[0].mxu0
        %v4013 = vpop.f32.mrb[0].mxu0
        %v4014 = vadd.f32 0.0, %v4013
        %v4015 = vpop.f32.mrb[0].mxu0
        %4016 = vdwg.mxu0
        %v4017 = vadd.f32 %v3895, %v3987
        %v4018 = vadd.f32 %v3896, %v3990
        %v4019 = vadd.f32 %v3897, %v3995
        %v4020 = vadd.f32 %v3898, %v3998
        %v4021 = vadd.f32 %v3899, %v4003
        %v4022 = vadd.f32 %v3900, %v4006
        %v4023 = vadd.f32 %v3901, %v4011
        %v4024 = vadd.f32 %v3902, %v4014
        %v4025 = vadd.f32 %v2960, %v4017
        %v4026 = vadd.f32 %v2961, %v4018
        %v4027 = vadd.f32 %v2962, %v4019
        %v4028 = vadd.f32 %v2963, %v4020
        %v4029 = vadd.f32 %v2964, %v4021
        %v4030 = vadd.f32 %v2965, %v4022
        %v4031 = vadd.f32 %v2966, %v4023
        %v4032 = vadd.f32 %v2967, %v4024
        %vm4033 = vcmp.ge.f32.partialorder %v4025, 0.0
        %vm4034 = vcmp.ge.f32.partialorder %v4026, 0.0
        %vm4035 = vcmp.ge.f32.partialorder %v4027, 0.0
        %vm4036 = vcmp.ge.f32.partialorder %v4028, 0.0
        %vm4037 = vcmp.ge.f32.partialorder %v4029, 0.0
        %vm4038 = vcmp.ge.f32.partialorder %v4030, 0.0
        %vm4039 = vcmp.ge.f32.partialorder %v4031, 0.0
        %vm4040 = vcmp.ge.f32.partialorder %v4032, 0.0
        %v4041 = vmul.f32 %v4025, 0.1
        %v4042 = vmul.f32 %v4026, 0.1
        %v4043 = vmul.f32 %v4027, 0.1
        %v4044 = vmul.f32 %v4028, 0.1
        %v4045 = vmul.f32 %v4029, 0.1
        %v4046 = vmul.f32 %v4030, 0.1
        %v4047 = vmul.f32 %v4031, 0.1
        %v4048 = vmul.f32 %v4032, 0.1
        %v4049 = vsel %vm4033, %v4025, %v4041
        %v4050 = vsel %vm4034, %v4026, %v4042
        %v4051 = vsel %vm4035, %v4027, %v4043
        %v4052 = vsel %vm4036, %v4028, %v4044
        %v4053 = vsel %vm4037, %v4029, %v4045
        %v4054 = vsel %vm4038, %v4030, %v4046
        %v4055 = vsel %vm4039, %v4031, %v4047
        %v4056 = vsel %vm4040, %v4032, %v4048
        %4057 = vst.msk [vmem:[#allocation4 + $0x10] sm:$0xff] %vm2951, %v4049
        %4058 = vst.msk [vmem:[#allocation4 + $0x18] sm:$0xff] %vm2951, %v4050
        %4059 = vst.msk [vmem:[#allocation4 + $0x20] sm:$0xff] %vm2951, %v4051
        %4060 = vst.msk [vmem:[#allocation4 + $0x28] sm:$0xff] %vm2951, %v4052
        %4061 = vst.msk [vmem:[#allocation4 + $0x30] sm:$0xff] %vm2951, %v4053
        %4062 = vst.msk [vmem:[#allocation4 + $0x38] sm:$0xff] %vm2951, %v4054
        %4063 = vst.msk [vmem:[#allocation4 + $0x40] sm:$0xff] %vm2951, %v4055
        %4064 = vst.msk [vmem:[#allocation4 + $0x48] sm:$0xff] %vm2951, %v4056
        %v4065 = vld [vmem:[#allocation4 + $0x7] sm:$0xff]
        %v4066 = vld [vmem:[#allocation4 + $0xf] sm:$0xff]
        %v4067 = vld [vmem:[#allocation4 + $0x17] sm:$0xff]
        %v4068 = vld [vmem:[#allocation4 + $0x1f] sm:$0xff]
        %v4069 = vld [vmem:[#allocation4 + $0x27] sm:$0xff]
        %v4070 = vld [vmem:[#allocation4 + $0x2f] sm:$0xff]
        %v4071 = vld [vmem:[#allocation4 + $0x37] sm:$0xff]
        %v4072 = vld [vmem:[#allocation4 + $0x3f] sm:$0xff]
        %v4073 = vmul.f32 %v4065, %v698
        %v4074 = vmul.f32 %v4066, %v699
        %v4075 = vmul.f32 %v4067, %v700
        %v4076 = vmul.f32 %v4068, %v701
        %v4077 = vmul.f32 %v4069, %v702
        %v4078 = vmul.f32 %v4070, %v703
        %v4079 = vmul.f32 %v4071, %v704
        %v4080 = vmul.f32 %v4072, %v705
        %v4081 = vpack.c.bf16 %v4074, %v4073
        %v4082 = vpack.c.bf16 %v4076, %v4075
        %v4083 = vpack.c.bf16 %v4078, %v4077
        %v4084 = vpack.c.bf16 %v4080, %v4079
        %v4085 = vld [vmem:[#allocation11] sm:$0xf]
        %v4086 = vld [vmem:[#allocation11 + $0x4] sm:$0xf]
        %v4087 = vld [vmem:[#allocation11 + $0x8] sm:$0xf]
        %v4088 = vld [vmem:[#allocation11 + $0xc] sm:$0xf]
        %v4089 = vld [vmem:[#allocation4 + $0x8] sm:$0xff]
        %v4090 = vld [vmem:[#allocation4 + $0x10] sm:$0xff]
        %v4091 = vld [vmem:[#allocation4 + $0x18] sm:$0xff]
        %v4092 = vld [vmem:[#allocation4 + $0x20] sm:$0xff]
        %v4093 = vld [vmem:[#allocation4 + $0x28] sm:$0xff]
        %v4094 = vld [vmem:[#allocation4 + $0x30] sm:$0xff]
        %v4095 = vld [vmem:[#allocation4 + $0x38] sm:$0xff]
        %v4096 = vld [vmem:[#allocation4 + $0x40] sm:$0xff]
        %v4097 = vpack.c.bf16 %v4090, %v4089
        %v4098 = vpack.c.bf16 %v4092, %v4091
        %v4099 = vpack.c.bf16 %v4094, %v4093
        %v4100 = vpack.c.bf16 %v4096, %v4095
        %s4101 = scalar_lea.vmem [#allocation11], 16
        %v4102 = vld [vmem:[%s4101] sm:$0xf]
        %v4103 = vld [vmem:[%s4101 + $0x4] sm:$0xf]
        %v4104 = vld [vmem:[%s4101 + $0x8] sm:$0xf]
        %v4105 = vld [vmem:[%s4101 + $0xc] sm:$0xf]
        %v4110 = vunpack.c.l.b16 %v4102
        %v4111 = vunpack.c.l.b16 %v4103
        %v4112 = vunpack.c.l.b16 %v4104
        %v4113 = vunpack.c.l.b16 %v4105
        %v4114 = vpack.c.b16 %v4111, %v4110
        %v4115 = vpack.c.b16 %v4113, %v4112
        %v4119 = vsel %vm2951, %v4097, 0
        %v4122 = vsel %vm2951, %v4098, 0
        %v4125 = vsel %vm2951, %v4099, 0
        %v4128 = vsel %vm2951, %v4100, 0
        %4130 = vmatprep.subr.bf16.mxu0 0
        %4131 = vmatpush1.bf16.msra.mxu0 %v4114
        %4132 = vmatprep.subr.bf16.mxu0 0
        %4133 = vmatpush1.bf16.msra.mxu0 %v4115
        %4134 = vmatprep.subr.bf16.mxu0 0
        %4135 = vmatpush1.bf16.msra.mxu0 0
        %4136 = vmatprep.subr.bf16.mxu0 0
        %4137 = vmatpush1.bf16.msra.mxu0 0
        %4138 = vmatprep.subr.bf16.mxu0 0
        %4139 = vmatpush1.bf16.msra.mxu0 0
        %4140 = vmatprep.subr.bf16.mxu0 0
        %4141 = vmatpush1.bf16.msra.mxu0 0
        %4142 = vmatprep.subr.bf16.mxu0 0
        %4143 = vmatpush1.bf16.msra.mxu0 0
        %4144 = vmatprep.subr.bf16.mxu0 0
        %4145 = vmatpush1.bf16.msra.mxu0 0
        %4146 = vmatprep.subr.bf16.mxu0 0
        %4147 = vmatpush1.bf16.msra.mxu0 0
        %4148 = vmatprep.subr.bf16.mxu0 0
        %4149 = vmatpush1.bf16.msra.mxu0 0
        %4150 = vmatprep.subr.bf16.mxu0 0
        %4151 = vmatpush1.bf16.msra.mxu0 0
        %4152 = vmatprep.subr.bf16.mxu0 0
        %4153 = vmatpush1.bf16.msra.mxu0 0
        %4154 = vmatprep.subr.bf16.mxu0 0
        %4155 = vmatpush1.bf16.msra.mxu0 0
        %4156 = vmatprep.subr.bf16.mxu0 0
        %4157 = vmatpush1.bf16.msra.mxu0 0
        %4158 = vmatprep.subr.bf16.mxu0 0
        %4159 = vmatpush1.bf16.msra.mxu0 0
        %4160 = vmatprep.subr.bf16.mxu0 0
        %4161 = vmatpush1.bf16.msra.mxu0 0
        %4162 = vmatprep.mubr.bf16.mxu0 0
        %4163 = vmatmul.mubr.bf16.gmra.mrb[0].mxu0 %v4119
        %v4164 = vpop.f32.mrb[0].mxu0
        %v4165 = vadd.f32 0.0, %v4164
        %v4166 = vpop.f32.mrb[0].mxu0
        %v4167 = vpop.f32.mrb[0].mxu0
        %v4168 = vadd.f32 0.0, %v4167
        %v4169 = vpop.f32.mrb[0].mxu0
        %4170 = vmatprep.mubr.bf16.mxu0 0
        %4171 = vmatmul.mubr.bf16.gmra.mrb[0].mxu0 %v4122
        %v4172 = vpop.f32.mrb[0].mxu0
        %v4173 = vadd.f32 0.0, %v4172
        %v4174 = vpop.f32.mrb[0].mxu0
        %v4175 = vpop.f32.mrb[0].mxu0
        %v4176 = vadd.f32 0.0, %v4175
        %v4177 = vpop.f32.mrb[0].mxu0
        %4178 = vmatprep.mubr.bf16.mxu0 0
        %4179 = vmatmul.mubr.bf16.gmra.mrb[0].mxu0 %v4125
        %v4180 = vpop.f32.mrb[0].mxu0
        %v4181 = vadd.f32 0.0, %v4180
        %v4182 = vpop.f32.mrb[0].mxu0
        %v4183 = vpop.f32.mrb[0].mxu0
        %v4184 = vadd.f32 0.0, %v4183
        %v4185 = vpop.f32.mrb[0].mxu0
        %4186 = vmatprep.mubr.bf16.mxu0 0
        %4187 = vmatmul.mubr.bf16.gmra.mrb[0].mxu0 %v4128
        %v4188 = vpop.f32.mrb[0].mxu0
        %v4189 = vadd.f32 0.0, %v4188
        %v4190 = vpop.f32.mrb[0].mxu0
        %v4191 = vpop.f32.mrb[0].mxu0
        %v4192 = vadd.f32 0.0, %v4191
        %v4193 = vpop.f32.mrb[0].mxu0
        %4194 = vdwg.mxu0
        %v4199 = vunpack.c.l.b16 %v4085
        %v4200 = vunpack.c.l.b16 %v4086
        %v4201 = vunpack.c.l.b16 %v4087
        %v4202 = vunpack.c.l.b16 %v4088
        %v4203 = vpack.c.b16 %v4200, %v4199
        %v4204 = vpack.c.b16 %v4202, %v4201
        %v4208 = vsel %vm2951, %v4081, 0
        %v4211 = vsel %vm2951, %v4082, 0
        %v4214 = vsel %vm2951, %v4083, 0
        %v4217 = vsel %vm2951, %v4084, 0
        %4219 = vmatprep.subr.bf16.mxu0 0
        %4220 = vmatpush1.bf16.msra.mxu0 %v4203
        %4221 = vmatprep.subr.bf16.mxu0 0
        %4222 = vmatpush1.bf16.msra.mxu0 %v4204
        %4223 = vmatprep.subr.bf16.mxu0 0
        %4224 = vmatpush1.bf16.msra.mxu0 0
        %4225 = vmatprep.subr.bf16.mxu0 0
        %4226 = vmatpush1.bf16.msra.mxu0 0
        %4227 = vmatprep.subr.bf16.mxu0 0
        %4228 = vmatpush1.bf16.msra.mxu0 0
        %4229 = vmatprep.subr.bf16.mxu0 0
        %4230 = vmatpush1.bf16.msra.mxu0 0
        %4231 = vmatprep.subr.bf16.mxu0 0
        %4232 = vmatpush1.bf16.msra.mxu0 0
        %4233 = vmatprep.subr.bf16.mxu0 0
        %4234 = vmatpush1.bf16.msra.mxu0 0
        %4235 = vmatprep.subr.bf16.mxu0 0
        %4236 = vmatpush1.bf16.msra.mxu0 0
        %4237 = vmatprep.subr.bf16.mxu0 0
        %4238 = vmatpush1.bf16.msra.mxu0 0
        %4239 = vmatprep.subr.bf16.mxu0 0
        %4240 = vmatpush1.bf16.msra.mxu0 0
        %4241 = vmatprep.subr.bf16.mxu0 0
        %4242 = vmatpush1.bf16.msra.mxu0 0
        %4243 = vmatprep.subr.bf16.mxu0 0
        %4244 = vmatpush1.bf16.msra.mxu0 0
        %4245 = vmatprep.subr.bf16.mxu0 0
        %4246 = vmatpush1.bf16.msra.mxu0 0
        %4247 = vmatprep.subr.bf16.mxu0 0
        %4248 = vmatpush1.bf16.msra.mxu0 0
        %4249 = vmatprep.subr.bf16.mxu0 0
        %4250 = vmatpush1.bf16.msra.mxu0 0
        %4251 = vmatprep.mubr.bf16.mxu0 0
        %4252 = vmatmul.mubr.bf16.gmra.mrb[0].mxu0 %v4208
        %v4253 = vpop.f32.mrb[0].mxu0
        %v4254 = vadd.f32 %v4165, %v4253
        %v4255 = vpop.f32.mrb[0].mxu0
        %v4256 = vpop.f32.mrb[0].mxu0
        %v4257 = vadd.f32 %v4168, %v4256
        %v4258 = vpop.f32.mrb[0].mxu0
        %4259 = vmatprep.mubr.bf16.mxu0 0
        %4260 = vmatmul.mubr.bf16.gmra.mrb[0].mxu0 %v4211
        %v4261 = vpop.f32.mrb[0].mxu0
        %v4262 = vadd.f32 %v4173, %v4261
        %v4263 = vpop.f32.mrb[0].mxu0
        %v4264 = vpop.f32.mrb[0].mxu0
        %v4265 = vadd.f32 %v4176, %v4264
        %v4266 = vpop.f32.mrb[0].mxu0
        %4267 = vmatprep.mubr.bf16.mxu0 0
        %4268 = vmatmul.mubr.bf16.gmra.mrb[0].mxu0 %v4214
        %v4269 = vpop.f32.mrb[0].mxu0
        %v4270 = vadd.f32 %v4181, %v4269
        %v4271 = vpop.f32.mrb[0].mxu0
        %v4272 = vpop.f32.mrb[0].mxu0
        %v4273 = vadd.f32 %v4184, %v4272
        %v4274 = vpop.f32.mrb[0].mxu0
        %4275 = vmatprep.mubr.bf16.mxu0 0
        %4276 = vmatmul.mubr.bf16.gmra.mrb[0].mxu0 %v4217
        %v4277 = vpop.f32.mrb[0].mxu0
        %v4278 = vadd.f32 %v4189, %v4277
        %v4279 = vpop.f32.mrb[0].mxu0
        %v4280 = vpop.f32.mrb[0].mxu0
        %v4281 = vadd.f32 %v4192, %v4280
        %v4282 = vpop.f32.mrb[0].mxu0
        %4283 = vdwg.mxu0
        %v4284 = vld [vmem:[#allocation4 + $0x9] sm:$0xff]
        %v4285 = vld [vmem:[#allocation4 + $0x11] sm:$0xff]
        %v4286 = vld [vmem:[#allocation4 + $0x19] sm:$0xff]
        %v4287 = vld [vmem:[#allocation4 + $0x21] sm:$0xff]
        %v4288 = vld [vmem:[#allocation4 + $0x29] sm:$0xff]
        %v4289 = vld [vmem:[#allocation4 + $0x31] sm:$0xff]
        %v4290 = vld [vmem:[#allocation4 + $0x39] sm:$0xff]
        %v4291 = vld [vmem:[#allocation4 + $0x41] sm:$0xff]
        %v4292 = vmul.f32 %v4284, %v722
        %v4293 = vmul.f32 %v4285, %v723
        %v4294 = vmul.f32 %v4286, %v724
        %v4295 = vmul.f32 %v4287, %v725
        %v4296 = vmul.f32 %v4288, %v726
        %v4297 = vmul.f32 %v4289, %v727
        %v4298 = vmul.f32 %v4290, %v728
        %v4299 = vmul.f32 %v4291, %v729
        %v4300 = vpack.c.bf16 %v4293, %v4292
        %v4301 = vpack.c.bf16 %v4295, %v4294
        %v4302 = vpack.c.bf16 %v4297, %v4296
        %v4303 = vpack.c.bf16 %v4299, %v4298
        %s4304 = scalar_lea.vmem [#allocation11], 32
        %v4305 = vld [vmem:[%s4304] sm:$0xf]
        %v4306 = vld [vmem:[%s4304 + $0x4] sm:$0xf]
        %v4307 = vld [vmem:[%s4304 + $0x8] sm:$0xf]
        %v4308 = vld [vmem:[%s4304 + $0xc] sm:$0xf]
        %v4313 = vunpack.c.l.b16 %v4305
        %v4314 = vunpack.c.l.b16 %v4306
        %v4315 = vunpack.c.l.b16 %v4307
        %v4316 = vunpack.c.l.b16 %v4308
        %v4317 = vpack.c.b16 %v4314, %v4313
        %v4318 = vpack.c.b16 %v4316, %v4315
        %v4322 = vsel %vm2951, %v4300, 0
        %v4325 = vsel %vm2951, %v4301, 0
        %v4328 = vsel %vm2951, %v4302, 0
        %v4331 = vsel %vm2951, %v4303, 0
        %4333 = vmatprep.subr.bf16.mxu0 0
        %4334 = vmatpush1.bf16.msra.mxu0 %v4317
        %4335 = vmatprep.subr.bf16.mxu0 0
        %4336 = vmatpush1.bf16.msra.mxu0 %v4318
        %4337 = vmatprep.subr.bf16.mxu0 0
        %4338 = vmatpush1.bf16.msra.mxu0 0
        %4339 = vmatprep.subr.bf16.mxu0 0
        %4340 = vmatpush1.bf16.msra.mxu0 0
        %4341 = vmatprep.subr.bf16.mxu0 0
        %4342 = vmatpush1.bf16.msra.mxu0 0
        %4343 = vmatprep.subr.bf16.mxu0 0
        %4344 = vmatpush1.bf16.msra.mxu0 0
        %4345 = vmatprep.subr.bf16.mxu0 0
        %4346 = vmatpush1.bf16.msra.mxu0 0
        %4347 = vmatprep.subr.bf16.mxu0 0
        %4348 = vmatpush1.bf16.msra.mxu0 0
        %4349 = vmatprep.subr.bf16.mxu0 0
        %4350 = vmatpush1.bf16.msra.mxu0 0
        %4351 = vmatprep.subr.bf16.mxu0 0
        %4352 = vmatpush1.bf16.msra.mxu0 0
        %4353 = vmatprep.subr.bf16.mxu0 0
        %4354 = vmatpush1.bf16.msra.mxu0 0
        %4355 = vmatprep.subr.bf16.mxu0 0
        %4356 = vmatpush1.bf16.msra.mxu0 0
        %4357 = vmatprep.subr.bf16.mxu0 0
        %4358 = vmatpush1.bf16.msra.mxu0 0
        %4359 = vmatprep.subr.bf16.mxu0 0
        %4360 = vmatpush1.bf16.msra.mxu0 0
        %4361 = vmatprep.subr.bf16.mxu0 0
        %4362 = vmatpush1.bf16.msra.mxu0 0
        %4363 = vmatprep.subr.bf16.mxu0 0
        %4364 = vmatpush1.bf16.msra.mxu0 0
        %4365 = vmatprep.mubr.bf16.mxu0 0
        %4366 = vmatmul.mubr.bf16.gmra.mrb[0].mxu0 %v4322
        %v4367 = vpop.f32.mrb[0].mxu0
        %v4368 = vadd.f32 0.0, %v4367
        %v4369 = vpop.f32.mrb[0].mxu0
        %v4370 = vpop.f32.mrb[0].mxu0
        %v4371 = vadd.f32 0.0, %v4370
        %v4372 = vpop.f32.mrb[0].mxu0
        %4373 = vmatprep.mubr.bf16.mxu0 0
        %4374 = vmatmul.mubr.bf16.gmra.mrb[0].mxu0 %v4325
        %v4375 = vpop.f32.mrb[0].mxu0
        %v4376 = vadd.f32 0.0, %v4375
        %v4377 = vpop.f32.mrb[0].mxu0
        %v4378 = vpop.f32.mrb[0].mxu0
        %v4379 = vadd.f32 0.0, %v4378
        %v4380 = vpop.f32.mrb[0].mxu0
        %4381 = vmatprep.mubr.bf16.mxu0 0
        %4382 = vmatmul.mubr.bf16.gmra.mrb[0].mxu0 %v4328
        %v4383 = vpop.f32.mrb[0].mxu0
        %v4384 = vadd.f32 0.0, %v4383
        %v4385 = vpop.f32.mrb[0].mxu0
        %v4386 = vpop.f32.mrb[0].mxu0
        %v4387 = vadd.f32 0.0, %v4386
        %v4388 = vpop.f32.mrb[0].mxu0
        %4389 = vmatprep.mubr.bf16.mxu0 0
        %4390 = vmatmul.mubr.bf16.gmra.mrb[0].mxu0 %v4331
        %v4391 = vpop.f32.mrb[0].mxu0
        %v4392 = vadd.f32 0.0, %v4391
        %v4393 = vpop.f32.mrb[0].mxu0
        %v4394 = vpop.f32.mrb[0].mxu0
        %v4395 = vadd.f32 0.0, %v4394
        %v4396 = vpop.f32.mrb[0].mxu0
        %4397 = vdwg.mxu0
        %v4398 = vadd.f32 %v4254, %v4368
        %v4399 = vadd.f32 %v4257, %v4371
        %v4400 = vadd.f32 %v4262, %v4376
        %v4401 = vadd.f32 %v4265, %v4379
        %v4402 = vadd.f32 %v4270, %v4384
        %v4403 = vadd.f32 %v4273, %v4387
        %v4404 = vadd.f32 %v4278, %v4392
        %v4405 = vadd.f32 %v4281, %v4395
        %v4406 = vld [vmem:[#allocation4 + $0xf] sm:$0xff]
        %v4407 = vld [vmem:[#allocation4 + $0x17] sm:$0xff]
        %v4408 = vld [vmem:[#allocation4 + $0x1f] sm:$0xff]
        %v4409 = vld [vmem:[#allocation4 + $0x27] sm:$0xff]
        %v4410 = vld [vmem:[#allocation4 + $0x2f] sm:$0xff]
        %v4411 = vld [vmem:[#allocation4 + $0x37] sm:$0xff]
        %v4412 = vld [vmem:[#allocation4 + $0x3f] sm:$0xff]
        %v4413 = vld [vmem:[#allocation4 + $0x47] sm:$0xff]
        %v4414 = vmul.f32 %v4406, %v698
        %v4415 = vmul.f32 %v4407, %v699
        %v4416 = vmul.f32 %v4408, %v700
        %v4417 = vmul.f32 %v4409, %v701
        %v4418 = vmul.f32 %v4410, %v702
        %v4419 = vmul.f32 %v4411, %v703
        %v4420 = vmul.f32 %v4412, %v704
        %v4421 = vmul.f32 %v4413, %v705
        %v4422 = vpack.c.bf16 %v4415, %v4414
        %v4423 = vpack.c.bf16 %v4417, %v4416
        %v4424 = vpack.c.bf16 %v4419, %v4418
        %v4425 = vpack.c.bf16 %v4421, %v4420
        %s4426 = scalar_lea.vmem [#allocation11], 48
        %v4427 = vld [vmem:[%s4426] sm:$0xf]
        %v4428 = vld [vmem:[%s4426 + $0x4] sm:$0xf]
        %v4429 = vld [vmem:[%s4426 + $0x8] sm:$0xf]
        %v4430 = vld [vmem:[%s4426 + $0xc] sm:$0xf]
        %v4435 = vunpack.c.l.b16 %v4427
        %v4436 = vunpack.c.l.b16 %v4428
        %v4437 = vunpack.c.l.b16 %v4429
        %v4438 = vunpack.c.l.b16 %v4430
        %v4439 = vpack.c.b16 %v4436, %v4435
        %v4440 = vpack.c.b16 %v4438, %v4437
        %v4444 = vsel %vm2951, %v4422, 0
        %v4447 = vsel %vm2951, %v4423, 0
        %v4450 = vsel %vm2951, %v4424, 0
        %v4453 = vsel %vm2951, %v4425, 0
        %4455 = vmatprep.subr.bf16.mxu0 0
        %4456 = vmatpush1.bf16.msra.mxu0 %v4439
        %4457 = vmatprep.subr.bf16.mxu0 0
        %4458 = vmatpush1.bf16.msra.mxu0 %v4440
        %4459 = vmatprep.subr.bf16.mxu0 0
        %4460 = vmatpush1.bf16.msra.mxu0 0
        %4461 = vmatprep.subr.bf16.mxu0 0
        %4462 = vmatpush1.bf16.msra.mxu0 0
        %4463 = vmatprep.subr.bf16.mxu0 0
        %4464 = vmatpush1.bf16.msra.mxu0 0
        %4465 = vmatprep.subr.bf16.mxu0 0
        %4466 = vmatpush1.bf16.msra.mxu0 0
        %4467 = vmatprep.subr.bf16.mxu0 0
        %4468 = vmatpush1.bf16.msra.mxu0 0
        %4469 = vmatprep.subr.bf16.mxu0 0
        %4470 = vmatpush1.bf16.msra.mxu0 0
        %4471 = vmatprep.subr.bf16.mxu0 0
        %4472 = vmatpush1.bf16.msra.mxu0 0
        %4473 = vmatprep.subr.bf16.mxu0 0
        %4474 = vmatpush1.bf16.msra.mxu0 0
        %4475 = vmatprep.subr.bf16.mxu0 0
        %4476 = vmatpush1.bf16.msra.mxu0 0
        %4477 = vmatprep.subr.bf16.mxu0 0
        %4478 = vmatpush1.bf16.msra.mxu0 0
        %4479 = vmatprep.subr.bf16.mxu0 0
        %4480 = vmatpush1.bf16.msra.mxu0 0
        %4481 = vmatprep.subr.bf16.mxu0 0
        %4482 = vmatpush1.bf16.msra.mxu0 0
        %4483 = vmatprep.subr.bf16.mxu0 0
        %4484 = vmatpush1.bf16.msra.mxu0 0
        %4485 = vmatprep.subr.bf16.mxu0 0
        %4486 = vmatpush1.bf16.msra.mxu0 0
        %4487 = vmatprep.mubr.bf16.mxu0 0
        %4488 = vmatmul.mubr.bf16.gmra.mrb[0].mxu0 %v4444
        %v4489 = vpop.f32.mrb[0].mxu0
        %v4490 = vadd.f32 0.0, %v4489
        %v4491 = vpop.f32.mrb[0].mxu0
        %v4492 = vpop.f32.mrb[0].mxu0
        %v4493 = vadd.f32 0.0, %v4492
        %v4494 = vpop.f32.mrb[0].mxu0
        %4495 = vmatprep.mubr.bf16.mxu0 0
        %4496 = vmatmul.mubr.bf16.gmra.mrb[0].mxu0 %v4447
        %v4497 = vpop.f32.mrb[0].mxu0
        %v4498 = vadd.f32 0.0, %v4497
        %v4499 = vpop.f32.mrb[0].mxu0
        %v4500 = vpop.f32.mrb[0].mxu0
        %v4501 = vadd.f32 0.0, %v4500
        %v4502 = vpop.f32.mrb[0].mxu0
        %4503 = vmatprep.mubr.bf16.mxu0 0
        %4504 = vmatmul.mubr.bf16.gmra.mrb[0].mxu0 %v4450
        %v4505 = vpop.f32.mrb[0].mxu0
        %v4506 = vadd.f32 0.0, %v4505
        %v4507 = vpop.f32.mrb[0].mxu0
        %v4508 = vpop.f32.mrb[0].mxu0
        %v4509 = vadd.f32 0.0, %v4508
        %v4510 = vpop.f32.mrb[0].mxu0
        %4511 = vmatprep.mubr.bf16.mxu0 0
        %4512 = vmatmul.mubr.bf16.gmra.mrb[0].mxu0 %v4453
        %v4513 = vpop.f32.mrb[0].mxu0
        %v4514 = vadd.f32 0.0, %v4513
        %v4515 = vpop.f32.mrb[0].mxu0
        %v4516 = vpop.f32.mrb[0].mxu0
        %v4517 = vadd.f32 0.0, %v4516
        %v4518 = vpop.f32.mrb[0].mxu0
        %4519 = vdwg.mxu0
        %v4520 = vadd.f32 %v4398, %v4490
        %v4521 = vadd.f32 %v4399, %v4493
        %v4522 = vadd.f32 %v4400, %v4498
        %v4523 = vadd.f32 %v4401, %v4501
        %v4524 = vadd.f32 %v4402, %v4506
        %v4525 = vadd.f32 %v4403, %v4509
        %v4526 = vadd.f32 %v4404, %v4514
        %v4527 = vadd.f32 %v4405, %v4517
        %v4528 = vld [vmem:[#allocation4 + $0x10] sm:$0xff]
        %v4529 = vld [vmem:[#allocation4 + $0x18] sm:$0xff]
        %v4530 = vld [vmem:[#allocation4 + $0x20] sm:$0xff]
        %v4531 = vld [vmem:[#allocation4 + $0x28] sm:$0xff]
        %v4532 = vld [vmem:[#allocation4 + $0x30] sm:$0xff]
        %v4533 = vld [vmem:[#allocation4 + $0x38] sm:$0xff]
        %v4534 = vld [vmem:[#allocation4 + $0x40] sm:$0xff]
        %v4535 = vld [vmem:[#allocation4 + $0x48] sm:$0xff]
        %v4536 = vpack.c.bf16 %v4529, %v4528
        %v4537 = vpack.c.bf16 %v4531, %v4530
        %v4538 = vpack.c.bf16 %v4533, %v4532
        %v4539 = vpack.c.bf16 %v4535, %v4534
        %s4540 = scalar_lea.vmem [#allocation11], 64
        %v4541 = vld [vmem:[%s4540] sm:$0xf]
        %v4542 = vld [vmem:[%s4540 + $0x4] sm:$0xf]
        %v4543 = vld [vmem:[%s4540 + $0x8] sm:$0xf]
        %v4544 = vld [vmem:[%s4540 + $0xc] sm:$0xf]
        %v4549 = vunpack.c.l.b16 %v4541
        %v4550 = vunpack.c.l.b16 %v4542
        %v4551 = vunpack.c.l.b16 %v4543
        %v4552 = vunpack.c.l.b16 %v4544
        %v4553 = vpack.c.b16 %v4550, %v4549
        %v4554 = vpack.c.b16 %v4552, %v4551
        %v4558 = vsel %vm2951, %v4536, 0
        %v4561 = vsel %vm2951, %v4537, 0
        %v4564 = vsel %vm2951, %v4538, 0
        %v4567 = vsel %vm2951, %v4539, 0
        %4569 = vmatprep.subr.bf16.mxu0 0
        %4570 = vmatpush1.bf16.msra.mxu0 %v4553
        %4571 = vmatprep.subr.bf16.mxu0 0
        %4572 = vmatpush1.bf16.msra.mxu0 %v4554
        %4573 = vmatprep.subr.bf16.mxu0 0
        %4574 = vmatpush1.bf16.msra.mxu0 0
        %4575 = vmatprep.subr.bf16.mxu0 0
        %4576 = vmatpush1.bf16.msra.mxu0 0
        %4577 = vmatprep.subr.bf16.mxu0 0
        %4578 = vmatpush1.bf16.msra.mxu0 0
        %4579 = vmatprep.subr.bf16.mxu0 0
        %4580 = vmatpush1.bf16.msra.mxu0 0
        %4581 = vmatprep.subr.bf16.mxu0 0
        %4582 = vmatpush1.bf16.msra.mxu0 0
        %4583 = vmatprep.subr.bf16.mxu0 0
        %4584 = vmatpush1.bf16.msra.mxu0 0
        %4585 = vmatprep.subr.bf16.mxu0 0
        %4586 = vmatpush1.bf16.msra.mxu0 0
        %4587 = vmatprep.subr.bf16.mxu0 0
        %4588 = vmatpush1.bf16.msra.mxu0 0
        %4589 = vmatprep.subr.bf16.mxu0 0
        %4590 = vmatpush1.bf16.msra.mxu0 0
        %4591 = vmatprep.subr.bf16.mxu0 0
        %4592 = vmatpush1.bf16.msra.mxu0 0
        %4593 = vmatprep.subr.bf16.mxu0 0
        %4594 = vmatpush1.bf16.msra.mxu0 0
        %4595 = vmatprep.subr.bf16.mxu0 0
        %4596 = vmatpush1.bf16.msra.mxu0 0
        %4597 = vmatprep.subr.bf16.mxu0 0
        %4598 = vmatpush1.bf16.msra.mxu0 0
        %4599 = vmatprep.subr.bf16.mxu0 0
        %4600 = vmatpush1.bf16.msra.mxu0 0
        %4601 = vmatprep.mubr.bf16.mxu0 0
        %4602 = vmatmul.mubr.bf16.gmra.mrb[0].mxu0 %v4558
        %v4603 = vpop.f32.mrb[0].mxu0
        %v4604 = vadd.f32 0.0, %v4603
        %v4605 = vpop.f32.mrb[0].mxu0
        %v4606 = vpop.f32.mrb[0].mxu0
        %v4607 = vadd.f32 0.0, %v4606
        %v4608 = vpop.f32.mrb[0].mxu0
        %4609 = vmatprep.mubr.bf16.mxu0 0
        %4610 = vmatmul.mubr.bf16.gmra.mrb[0].mxu0 %v4561
        %v4611 = vpop.f32.mrb[0].mxu0
        %v4612 = vadd.f32 0.0, %v4611
        %v4613 = vpop.f32.mrb[0].mxu0
        %v4614 = vpop.f32.mrb[0].mxu0
        %v4615 = vadd.f32 0.0, %v4614
        %v4616 = vpop.f32.mrb[0].mxu0
        %4617 = vmatprep.mubr.bf16.mxu0 0
        %4618 = vmatmul.mubr.bf16.gmra.mrb[0].mxu0 %v4564
        %v4619 = vpop.f32.mrb[0].mxu0
        %v4620 = vadd.f32 0.0, %v4619
        %v4621 = vpop.f32.mrb[0].mxu0
        %v4622 = vpop.f32.mrb[0].mxu0
        %v4623 = vadd.f32 0.0, %v4622
        %v4624 = vpop.f32.mrb[0].mxu0
        %4625 = vmatprep.mubr.bf16.mxu0 0
        %4626 = vmatmul.mubr.bf16.gmra.mrb[0].mxu0 %v4567
        %v4627 = vpop.f32.mrb[0].mxu0
        %v4628 = vadd.f32 0.0, %v4627
        %v4629 = vpop.f32.mrb[0].mxu0
        %v4630 = vpop.f32.mrb[0].mxu0
        %v4631 = vadd.f32 0.0, %v4630
        %v4632 = vpop.f32.mrb[0].mxu0
        %4633 = vdwg.mxu0
        %v4634 = vadd.f32 %v4520, %v4604
        %v4635 = vadd.f32 %v4521, %v4607
        %v4636 = vadd.f32 %v4522, %v4612
        %v4637 = vadd.f32 %v4523, %v4615
        %v4638 = vadd.f32 %v4524, %v4620
        %v4639 = vadd.f32 %v4525, %v4623
        %v4640 = vadd.f32 %v4526, %v4628
        %v4641 = vadd.f32 %v4527, %v4631
        %v4642 = vld [vmem:[#allocation4 + $0x11] sm:$0xff]
        %v4643 = vld [vmem:[#allocation4 + $0x19] sm:$0xff]
        %v4644 = vld [vmem:[#allocation4 + $0x21] sm:$0xff]
        %v4645 = vld [vmem:[#allocation4 + $0x29] sm:$0xff]
        %v4646 = vld [vmem:[#allocation4 + $0x31] sm:$0xff]
        %v4647 = vld [vmem:[#allocation4 + $0x39] sm:$0xff]
        %v4648 = vld [vmem:[#allocation4 + $0x41] sm:$0xff]
        %v4649 = vld [vmem:[#allocation4 + $0x49] sm:$0xff]
        %v4650 = vmul.f32 %v4642, %v722
        %v4651 = vmul.f32 %v4643, %v723
        %v4652 = vmul.f32 %v4644, %v724
        %v4653 = vmul.f32 %v4645, %v725
        %v4654 = vmul.f32 %v4646, %v726
        %v4655 = vmul.f32 %v4647, %v727
        %v4656 = vmul.f32 %v4648, %v728
        %v4657 = vmul.f32 %v4649, %v729
        %v4658 = vpack.c.bf16 %v4651, %v4650
        %v4659 = vpack.c.bf16 %v4653, %v4652
        %v4660 = vpack.c.bf16 %v4655, %v4654
        %v4661 = vpack.c.bf16 %v4657, %v4656
        %s4662 = scalar_lea.vmem [#allocation11], 80
        %v4663 = vld [vmem:[%s4662] sm:$0xf]
        %v4664 = vld [vmem:[%s4662 + $0x4] sm:$0xf]
        %v4665 = vld [vmem:[%s4662 + $0x8] sm:$0xf]
        %v4666 = vld [vmem:[%s4662 + $0xc] sm:$0xf]
        %v4671 = vunpack.c.l.b16 %v4663
        %v4672 = vunpack.c.l.b16 %v4664
        %v4673 = vunpack.c.l.b16 %v4665
        %v4674 = vunpack.c.l.b16 %v4666
        %v4675 = vpack.c.b16 %v4672, %v4671
        %v4676 = vpack.c.b16 %v4674, %v4673
        %v4680 = vsel %vm2951, %v4658, 0
        %v4683 = vsel %vm2951, %v4659, 0
        %v4686 = vsel %vm2951, %v4660, 0
        %v4689 = vsel %vm2951, %v4661, 0
        %4691 = vmatprep.subr.bf16.mxu0 0
        %4692 = vmatpush1.bf16.msra.mxu0 %v4675
        %4693 = vmatprep.subr.bf16.mxu0 0
        %4694 = vmatpush1.bf16.msra.mxu0 %v4676
        %4695 = vmatprep.subr.bf16.mxu0 0
        %4696 = vmatpush1.bf16.msra.mxu0 0
        %4697 = vmatprep.subr.bf16.mxu0 0
        %4698 = vmatpush1.bf16.msra.mxu0 0
        %4699 = vmatprep.subr.bf16.mxu0 0
        %4700 = vmatpush1.bf16.msra.mxu0 0
        %4701 = vmatprep.subr.bf16.mxu0 0
        %4702 = vmatpush1.bf16.msra.mxu0 0
        %4703 = vmatprep.subr.bf16.mxu0 0
        %4704 = vmatpush1.bf16.msra.mxu0 0
        %4705 = vmatprep.subr.bf16.mxu0 0
        %4706 = vmatpush1.bf16.msra.mxu0 0
        %4707 = vmatprep.subr.bf16.mxu0 0
        %4708 = vmatpush1.bf16.msra.mxu0 0
        %4709 = vmatprep.subr.bf16.mxu0 0
        %4710 = vmatpush1.bf16.msra.mxu0 0
        %4711 = vmatprep.subr.bf16.mxu0 0
        %4712 = vmatpush1.bf16.msra.mxu0 0
        %4713 = vmatprep.subr.bf16.mxu0 0
        %4714 = vmatpush1.bf16.msra.mxu0 0
        %4715 = vmatprep.subr.bf16.mxu0 0
        %4716 = vmatpush1.bf16.msra.mxu0 0
        %4717 = vmatprep.subr.bf16.mxu0 0
        %4718 = vmatpush1.bf16.msra.mxu0 0
        %4719 = vmatprep.subr.bf16.mxu0 0
        %4720 = vmatpush1.bf16.msra.mxu0 0
        %4721 = vmatprep.subr.bf16.mxu0 0
        %4722 = vmatpush1.bf16.msra.mxu0 0
        %4723 = vmatprep.mubr.bf16.mxu0 0
        %4724 = vmatmul.mubr.bf16.gmra.mrb[0].mxu0 %v4680
        %v4725 = vpop.f32.mrb[0].mxu0
        %v4726 = vadd.f32 0.0, %v4725
        %v4727 = vpop.f32.mrb[0].mxu0
        %v4728 = vpop.f32.mrb[0].mxu0
        %v4729 = vadd.f32 0.0, %v4728
        %v4730 = vpop.f32.mrb[0].mxu0
        %4731 = vmatprep.mubr.bf16.mxu0 0
        %4732 = vmatmul.mubr.bf16.gmra.mrb[0].mxu0 %v4683
        %v4733 = vpop.f32.mrb[0].mxu0
        %v4734 = vadd.f32 0.0, %v4733
        %v4735 = vpop.f32.mrb[0].mxu0
        %v4736 = vpop.f32.mrb[0].mxu0
        %v4737 = vadd.f32 0.0, %v4736
        %v4738 = vpop.f32.mrb[0].mxu0
        %4739 = vmatprep.mubr.bf16.mxu0 0
        %4740 = vmatmul.mubr.bf16.gmra.mrb[0].mxu0 %v4686
        %v4741 = vpop.f32.mrb[0].mxu0
        %v4742 = vadd.f32 0.0, %v4741
        %v4743 = vpop.f32.mrb[0].mxu0
        %v4744 = vpop.f32.mrb[0].mxu0
        %v4745 = vadd.f32 0.0, %v4744
        %v4746 = vpop.f32.mrb[0].mxu0
        %4747 = vmatprep.mubr.bf16.mxu0 0
        %4748 = vmatmul.mubr.bf16.gmra.mrb[0].mxu0 %v4689
        %v4749 = vpop.f32.mrb[0].mxu0
        %v4750 = vadd.f32 0.0, %v4749
        %v4751 = vpop.f32.mrb[0].mxu0
        %v4752 = vpop.f32.mrb[0].mxu0
        %v4753 = vadd.f32 0.0, %v4752
        %v4754 = vpop.f32.mrb[0].mxu0
        %4755 = vdwg.mxu0
        %v4756 = vadd.f32 %v4634, %v4726
        %v4757 = vadd.f32 %v4635, %v4729
        %v4758 = vadd.f32 %v4636, %v4734
        %v4759 = vadd.f32 %v4637, %v4737
        %v4760 = vadd.f32 %v4638, %v4742
        %v4761 = vadd.f32 %v4639, %v4745
        %v4762 = vadd.f32 %v4640, %v4750
        %v4763 = vadd.f32 %v4641, %v4753
        %v4764 = vld [vmem:[#allocation4 + $0x17] sm:$0xff]
        %v4765 = vld [vmem:[#allocation4 + $0x1f] sm:$0xff]
        %v4766 = vld [vmem:[#allocation4 + $0x27] sm:$0xff]
        %v4767 = vld [vmem:[#allocation4 + $0x2f] sm:$0xff]
        %v4768 = vld [vmem:[#allocation4 + $0x37] sm:$0xff]
        %v4769 = vld [vmem:[#allocation4 + $0x3f] sm:$0xff]
        %v4770 = vld [vmem:[#allocation4 + $0x47] sm:$0xff]
        %v4771 = vld [vmem:[#allocation4 + $0x4f] sm:$0xff]
        %v4772 = vmul.f32 %v4764, %v698
        %v4773 = vmul.f32 %v4765, %v699
        %v4774 = vmul.f32 %v4766, %v700
        %v4775 = vmul.f32 %v4767, %v701
        %v4776 = vmul.f32 %v4768, %v702
        %v4777 = vmul.f32 %v4769, %v703
        %v4778 = vmul.f32 %v4770, %v704
        %v4779 = vmul.f32 %v4771, %v705
        %v4780 = vpack.c.bf16 %v4773, %v4772
        %v4781 = vpack.c.bf16 %v4775, %v4774
        %v4782 = vpack.c.bf16 %v4777, %v4776
        %v4783 = vpack.c.bf16 %v4779, %v4778
        %s4784 = scalar_lea.vmem [#allocation11], 96
        %v4785 = vld [vmem:[%s4784] sm:$0xf]
        %v4786 = vld [vmem:[%s4784 + $0x4] sm:$0xf]
        %v4787 = vld [vmem:[%s4784 + $0x8] sm:$0xf]
        %v4788 = vld [vmem:[%s4784 + $0xc] sm:$0xf]
        %v4793 = vunpack.c.l.b16 %v4785
        %v4794 = vunpack.c.l.b16 %v4786
        %v4795 = vunpack.c.l.b16 %v4787
        %v4796 = vunpack.c.l.b16 %v4788
        %v4797 = vpack.c.b16 %v4794, %v4793
        %v4798 = vpack.c.b16 %v4796, %v4795
        %v4802 = vsel %vm2951, %v4780, 0
        %v4805 = vsel %vm2951, %v4781, 0
        %v4808 = vsel %vm2951, %v4782, 0
        %v4811 = vsel %vm2951, %v4783, 0
        %4813 = vmatprep.subr.bf16.mxu0 0
        %4814 = vmatpush1.bf16.msra.mxu0 %v4797
        %4815 = vmatprep.subr.bf16.mxu0 0
        %4816 = vmatpush1.bf16.msra.mxu0 %v4798
        %4817 = vmatprep.subr.bf16.mxu0 0
        %4818 = vmatpush1.bf16.msra.mxu0 0
        %4819 = vmatprep.subr.bf16.mxu0 0
        %4820 = vmatpush1.bf16.msra.mxu0 0
        %4821 = vmatprep.subr.bf16.mxu0 0
        %4822 = vmatpush1.bf16.msra.mxu0 0
        %4823 = vmatprep.subr.bf16.mxu0 0
        %4824 = vmatpush1.bf16.msra.mxu0 0
        %4825 = vmatprep.subr.bf16.mxu0 0
        %4826 = vmatpush1.bf16.msra.mxu0 0
        %4827 = vmatprep.subr.bf16.mxu0 0
        %4828 = vmatpush1.bf16.msra.mxu0 0
        %4829 = vmatprep.subr.bf16.mxu0 0
        %4830 = vmatpush1.bf16.msra.mxu0 0
        %4831 = vmatprep.subr.bf16.mxu0 0
        %4832 = vmatpush1.bf16.msra.mxu0 0
        %4833 = vmatprep.subr.bf16.mxu0 0
        %4834 = vmatpush1.bf16.msra.mxu0 0
        %4835 = vmatprep.subr.bf16.mxu0 0
        %4836 = vmatpush1.bf16.msra.mxu0 0
        %4837 = vmatprep.subr.bf16.mxu0 0
        %4838 = vmatpush1.bf16.msra.mxu0 0
        %4839 = vmatprep.subr.bf16.mxu0 0
        %4840 = vmatpush1.bf16.msra.mxu0 0
        %4841 = vmatprep.subr.bf16.mxu0 0
        %4842 = vmatpush1.bf16.msra.mxu0 0
        %4843 = vmatprep.subr.bf16.mxu0 0
        %4844 = vmatpush1.bf16.msra.mxu0 0
        %4845 = vmatprep.mubr.bf16.mxu0 0
        %4846 = vmatmul.mubr.bf16.gmra.mrb[0].mxu0 %v4802
        %v4847 = vpop.f32.mrb[0].mxu0
        %v4848 = vadd.f32 0.0, %v4847
        %v4849 = vpop.f32.mrb[0].mxu0
        %v4850 = vpop.f32.mrb[0].mxu0
        %v4851 = vadd.f32 0.0, %v4850
        %v4852 = vpop.f32.mrb[0].mxu0
        %4853 = vmatprep.mubr.bf16.mxu0 0
        %4854 = vmatmul.mubr.bf16.gmra.mrb[0].mxu0 %v4805
        %v4855 = vpop.f32.mrb[0].mxu0
        %v4856 = vadd.f32 0.0, %v4855
        %v4857 = vpop.f32.mrb[0].mxu0
        %v4858 = vpop.f32.mrb[0].mxu0
        %v4859 = vadd.f32 0.0, %v4858
        %v4860 = vpop.f32.mrb[0].mxu0
        %4861 = vmatprep.mubr.bf16.mxu0 0
        %4862 = vmatmul.mubr.bf16.gmra.mrb[0].mxu0 %v4808
        %v4863 = vpop.f32.mrb[0].mxu0
        %v4864 = vadd.f32 0.0, %v4863
        %v4865 = vpop.f32.mrb[0].mxu0
        %v4866 = vpop.f32.mrb[0].mxu0
        %v4867 = vadd.f32 0.0, %v4866
        %v4868 = vpop.f32.mrb[0].mxu0
        %4869 = vmatprep.mubr.bf16.mxu0 0
        %4870 = vmatmul.mubr.bf16.gmra.mrb[0].mxu0 %v4811
        %v4871 = vpop.f32.mrb[0].mxu0
        %v4872 = vadd.f32 0.0, %v4871
        %v4873 = vpop.f32.mrb[0].mxu0
        %v4874 = vpop.f32.mrb[0].mxu0
        %v4875 = vadd.f32 0.0, %v4874
        %v4876 = vpop.f32.mrb[0].mxu0
        %4877 = vdwg.mxu0
        %v4878 = vadd.f32 %v4756, %v4848
        %v4879 = vadd.f32 %v4757, %v4851
        %v4880 = vadd.f32 %v4758, %v4856
        %v4881 = vadd.f32 %v4759, %v4859
        %v4882 = vadd.f32 %v4760, %v4864
        %v4883 = vadd.f32 %v4761, %v4867
        %v4884 = vadd.f32 %v4762, %v4872
        %v4885 = vadd.f32 %v4763, %v4875
        %v4886 = vld [vmem:[#allocation4 + $0x18] sm:$0xff]
        %v4887 = vld [vmem:[#allocation4 + $0x20] sm:$0xff]
        %v4888 = vld [vmem:[#allocation4 + $0x28] sm:$0xff]
        %v4889 = vld [vmem:[#allocation4 + $0x30] sm:$0xff]
        %v4890 = vld [vmem:[#allocation4 + $0x38] sm:$0xff]
        %v4891 = vld [vmem:[#allocation4 + $0x40] sm:$0xff]
        %v4892 = vld [vmem:[#allocation4 + $0x48] sm:$0xff]
        %v4893 = vld [vmem:[#allocation4 + $0x50] sm:$0xff]
        %v4894 = vpack.c.bf16 %v4887, %v4886
        %v4895 = vpack.c.bf16 %v4889, %v4888
        %v4896 = vpack.c.bf16 %v4891, %v4890
        %v4897 = vpack.c.bf16 %v4893, %v4892
        %s4898 = scalar_lea.vmem [#allocation11], 112
        %v4899 = vld [vmem:[%s4898] sm:$0xf]
        %v4900 = vld [vmem:[%s4898 + $0x4] sm:$0xf]
        %v4901 = vld [vmem:[%s4898 + $0x8] sm:$0xf]
        %v4902 = vld [vmem:[%s4898 + $0xc] sm:$0xf]
        %v4907 = vunpack.c.l.b16 %v4899
        %v4908 = vunpack.c.l.b16 %v4900
        %v4909 = vunpack.c.l.b16 %v4901
        %v4910 = vunpack.c.l.b16 %v4902
        %v4911 = vpack.c.b16 %v4908, %v4907
        %v4912 = vpack.c.b16 %v4910, %v4909
        %v4916 = vsel %vm2951, %v4894, 0
        %v4919 = vsel %vm2951, %v4895, 0
        %v4922 = vsel %vm2951, %v4896, 0
        %v4925 = vsel %vm2951, %v4897, 0
        %4927 = vmatprep.subr.bf16.mxu0 0
        %4928 = vmatpush1.bf16.msra.mxu0 %v4911
        %4929 = vmatprep.subr.bf16.mxu0 0
        %4930 = vmatpush1.bf16.msra.mxu0 %v4912
        %4931 = vmatprep.subr.bf16.mxu0 0
        %4932 = vmatpush1.bf16.msra.mxu0 0
        %4933 = vmatprep.subr.bf16.mxu0 0
        %4934 = vmatpush1.bf16.msra.mxu0 0
        %4935 = vmatprep.subr.bf16.mxu0 0
        %4936 = vmatpush1.bf16.msra.mxu0 0
        %4937 = vmatprep.subr.bf16.mxu0 0
        %4938 = vmatpush1.bf16.msra.mxu0 0
        %4939 = vmatprep.subr.bf16.mxu0 0
        %4940 = vmatpush1.bf16.msra.mxu0 0
        %4941 = vmatprep.subr.bf16.mxu0 0
        %4942 = vmatpush1.bf16.msra.mxu0 0
        %4943 = vmatprep.subr.bf16.mxu0 0
        %4944 = vmatpush1.bf16.msra.mxu0 0
        %4945 = vmatprep.subr.bf16.mxu0 0
        %4946 = vmatpush1.bf16.msra.mxu0 0
        %4947 = vmatprep.subr.bf16.mxu0 0
        %4948 = vmatpush1.bf16.msra.mxu0 0
        %4949 = vmatprep.subr.bf16.mxu0 0
        %4950 = vmatpush1.bf16.msra.mxu0 0
        %4951 = vmatprep.subr.bf16.mxu0 0
        %4952 = vmatpush1.bf16.msra.mxu0 0
        %4953 = vmatprep.subr.bf16.mxu0 0
        %4954 = vmatpush1.bf16.msra.mxu0 0
        %4955 = vmatprep.subr.bf16.mxu0 0
        %4956 = vmatpush1.bf16.msra.mxu0 0
        %4957 = vmatprep.subr.bf16.mxu0 0
        %4958 = vmatpush1.bf16.msra.mxu0 0
        %4959 = vmatprep.mubr.bf16.mxu0 0
        %4960 = vmatmul.mubr.bf16.gmra.mrb[0].mxu0 %v4916
        %v4961 = vpop.f32.mrb[0].mxu0
        %v4962 = vadd.f32 0.0, %v4961
        %v4963 = vpop.f32.mrb[0].mxu0
        %v4964 = vpop.f32.mrb[0].mxu0
        %v4965 = vadd.f32 0.0, %v4964
        %v4966 = vpop.f32.mrb[0].mxu0
        %4967 = vmatprep.mubr.bf16.mxu0 0
        %4968 = vmatmul.mubr.bf16.gmra.mrb[0].mxu0 %v4919
        %v4969 = vpop.f32.mrb[0].mxu0
        %v4970 = vadd.f32 0.0, %v4969
        %v4971 = vpop.f32.mrb[0].mxu0
        %v4972 = vpop.f32.mrb[0].mxu0
        %v4973 = vadd.f32 0.0, %v4972
        %v4974 = vpop.f32.mrb[0].mxu0
        %4975 = vmatprep.mubr.bf16.mxu0 0
        %4976 = vmatmul.mubr.bf16.gmra.mrb[0].mxu0 %v4922
        %v4977 = vpop.f32.mrb[0].mxu0
        %v4978 = vadd.f32 0.0, %v4977
        %v4979 = vpop.f32.mrb[0].mxu0
        %v4980 = vpop.f32.mrb[0].mxu0
        %v4981 = vadd.f32 0.0, %v4980
        %v4982 = vpop.f32.mrb[0].mxu0
        %4983 = vmatprep.mubr.bf16.mxu0 0
        %4984 = vmatmul.mubr.bf16.gmra.mrb[0].mxu0 %v4925
        %v4985 = vpop.f32.mrb[0].mxu0
        %v4986 = vadd.f32 0.0, %v4985
        %v4987 = vpop.f32.mrb[0].mxu0
        %v4988 = vpop.f32.mrb[0].mxu0
        %v4989 = vadd.f32 0.0, %v4988
        %v4990 = vpop.f32.mrb[0].mxu0
        %4991 = vdwg.mxu0
        %v4992 = vadd.f32 %v4878, %v4962
        %v4993 = vadd.f32 %v4879, %v4965
        %v4994 = vadd.f32 %v4880, %v4970
        %v4995 = vadd.f32 %v4881, %v4973
        %v4996 = vadd.f32 %v4882, %v4978
        %v4997 = vadd.f32 %v4883, %v4981
        %v4998 = vadd.f32 %v4884, %v4986
        %v4999 = vadd.f32 %v4885, %v4989
        %v5000 = vld [vmem:[#allocation4 + $0x19] sm:$0xff]
        %v5001 = vld [vmem:[#allocation4 + $0x21] sm:$0xff]
        %v5002 = vld [vmem:[#allocation4 + $0x29] sm:$0xff]
        %v5003 = vld [vmem:[#allocation4 + $0x31] sm:$0xff]
        %v5004 = vld [vmem:[#allocation4 + $0x39] sm:$0xff]
        %v5005 = vld [vmem:[#allocation4 + $0x41] sm:$0xff]
        %v5006 = vld [vmem:[#allocation4 + $0x49] sm:$0xff]
        %v5007 = vld [vmem:[#allocation4 + $0x51] sm:$0xff]
        %v5008 = vmul.f32 %v5000, %v722
        %v5009 = vmul.f32 %v5001, %v723
        %v5010 = vmul.f32 %v5002, %v724
        %v5011 = vmul.f32 %v5003, %v725
        %v5012 = vmul.f32 %v5004, %v726
        %v5013 = vmul.f32 %v5005, %v727
        %v5014 = vmul.f32 %v5006, %v728
        %v5015 = vmul.f32 %v5007, %v729
        %v5016 = vpack.c.bf16 %v5009, %v5008
        %v5017 = vpack.c.bf16 %v5011, %v5010
        %v5018 = vpack.c.bf16 %v5013, %v5012
        %v5019 = vpack.c.bf16 %v5015, %v5014
        %s5020 = scalar_lea.vmem [#allocation11], 128
        %v5021 = vld [vmem:[%s5020] sm:$0xf]
        %v5022 = vld [vmem:[%s5020 + $0x4] sm:$0xf]
        %v5023 = vld [vmem:[%s5020 + $0x8] sm:$0xf]
        %v5024 = vld [vmem:[%s5020 + $0xc] sm:$0xf]
        %v5029 = vunpack.c.l.b16 %v5021
        %v5030 = vunpack.c.l.b16 %v5022
        %v5031 = vunpack.c.l.b16 %v5023
        %v5032 = vunpack.c.l.b16 %v5024
        %v5033 = vpack.c.b16 %v5030, %v5029
        %v5034 = vpack.c.b16 %v5032, %v5031
        %v5038 = vsel %vm2951, %v5016, 0
        %v5041 = vsel %vm2951, %v5017, 0
        %v5044 = vsel %vm2951, %v5018, 0
        %v5047 = vsel %vm2951, %v5019, 0
        %5049 = vmatprep.subr.bf16.mxu0 0
        %5050 = vmatpush1.bf16.msra.mxu0 %v5033
        %5051 = vmatprep.subr.bf16.mxu0 0
        %5052 = vmatpush1.bf16.msra.mxu0 %v5034
        %5053 = vmatprep.subr.bf16.mxu0 0
        %5054 = vmatpush1.bf16.msra.mxu0 0
        %5055 = vmatprep.subr.bf16.mxu0 0
        %5056 = vmatpush1.bf16.msra.mxu0 0
        %5057 = vmatprep.subr.bf16.mxu0 0
        %5058 = vmatpush1.bf16.msra.mxu0 0
        %5059 = vmatprep.subr.bf16.mxu0 0
        %5060 = vmatpush1.bf16.msra.mxu0 0
        %5061 = vmatprep.subr.bf16.mxu0 0
        %5062 = vmatpush1.bf16.msra.mxu0 0
        %5063 = vmatprep.subr.bf16.mxu0 0
        %5064 = vmatpush1.bf16.msra.mxu0 0
        %5065 = vmatprep.subr.bf16.mxu0 0
        %5066 = vmatpush1.bf16.msra.mxu0 0
        %5067 = vmatprep.subr.bf16.mxu0 0
        %5068 = vmatpush1.bf16.msra.mxu0 0
        %5069 = vmatprep.subr.bf16.mxu0 0
        %5070 = vmatpush1.bf16.msra.mxu0 0
        %5071 = vmatprep.subr.bf16.mxu0 0
        %5072 = vmatpush1.bf16.msra.mxu0 0
        %5073 = vmatprep.subr.bf16.mxu0 0
        %5074 = vmatpush1.bf16.msra.mxu0 0
        %5075 = vmatprep.subr.bf16.mxu0 0
        %5076 = vmatpush1.bf16.msra.mxu0 0
        %5077 = vmatprep.subr.bf16.mxu0 0
        %5078 = vmatpush1.bf16.msra.mxu0 0
        %5079 = vmatprep.subr.bf16.mxu0 0
        %5080 = vmatpush1.bf16.msra.mxu0 0
        %5081 = vmatprep.mubr.bf16.mxu0 0
        %5082 = vmatmul.mubr.bf16.gmra.mrb[0].mxu0 %v5038
        %v5083 = vpop.f32.mrb[0].mxu0
        %v5084 = vadd.f32 0.0, %v5083
        %v5085 = vpop.f32.mrb[0].mxu0
        %v5086 = vpop.f32.mrb[0].mxu0
        %v5087 = vadd.f32 0.0, %v5086
        %v5088 = vpop.f32.mrb[0].mxu0
        %5089 = vmatprep.mubr.bf16.mxu0 0
        %5090 = vmatmul.mubr.bf16.gmra.mrb[0].mxu0 %v5041
        %v5091 = vpop.f32.mrb[0].mxu0
        %v5092 = vadd.f32 0.0, %v5091
        %v5093 = vpop.f32.mrb[0].mxu0
        %v5094 = vpop.f32.mrb[0].mxu0
        %v5095 = vadd.f32 0.0, %v5094
        %v5096 = vpop.f32.mrb[0].mxu0
        %5097 = vmatprep.mubr.bf16.mxu0 0
        %5098 = vmatmul.mubr.bf16.gmra.mrb[0].mxu0 %v5044
        %v5099 = vpop.f32.mrb[0].mxu0
        %v5100 = vadd.f32 0.0, %v5099
        %v5101 = vpop.f32.mrb[0].mxu0
        %v5102 = vpop.f32.mrb[0].mxu0
        %v5103 = vadd.f32 0.0, %v5102
        %v5104 = vpop.f32.mrb[0].mxu0
        %5105 = vmatprep.mubr.bf16.mxu0 0
        %5106 = vmatmul.mubr.bf16.gmra.mrb[0].mxu0 %v5047
        %v5107 = vpop.f32.mrb[0].mxu0
        %v5108 = vadd.f32 0.0, %v5107
        %v5109 = vpop.f32.mrb[0].mxu0
        %v5110 = vpop.f32.mrb[0].mxu0
        %v5111 = vadd.f32 0.0, %v5110
        %v5112 = vpop.f32.mrb[0].mxu0
        %5113 = vdwg.mxu0
        %v5114 = vadd.f32 %v4992, %v5084
        %v5115 = vadd.f32 %v4993, %v5087
        %v5116 = vadd.f32 %v4994, %v5092
        %v5117 = vadd.f32 %v4995, %v5095
        %v5118 = vadd.f32 %v4996, %v5100
        %v5119 = vadd.f32 %v4997, %v5103
        %v5120 = vadd.f32 %v4998, %v5108
        %v5121 = vadd.f32 %v4999, %v5111
        %v5122 = vld [vmem:[%s8] sm:$0x1]
        %v5124 = vlaneseq
        %v5125 = vshrl.u32 %v5124, 7
        %v5126 = vsub.s32 0, %v5125
        %v5127 = vrot.slane %v5122, %v5126
        %v5129 = vadd.f32 %v5114, %v5127
        %v5130 = vadd.f32 %v5115, %v5127
        %v5131 = vadd.f32 %v5116, %v5127
        %v5132 = vadd.f32 %v5117, %v5127
        %v5133 = vadd.f32 %v5118, %v5127
        %v5134 = vadd.f32 %v5119, %v5127
        %v5135 = vadd.f32 %v5120, %v5127
        %v5136 = vadd.f32 %v5121, %v5127
        %v5137 = vmul.f32 %v730, %v5129
        %v5138 = vmul.f32 %v731, %v5130
        %v5139 = vmul.f32 %v732, %v5131
        %v5140 = vmul.f32 %v733, %v5132
        %v5141 = vmul.f32 %v734, %v5133
        %v5142 = vmul.f32 %v735, %v5134
        %v5143 = vmul.f32 %v736, %v5135
        %v5144 = vmul.f32 %v737, %v5136
        %v5145 = vld [vmem:[#allocation3] sm:$0xff]
        %v5146 = vld [vmem:[#allocation3 + $0x8] sm:$0xff]
        %v5147 = vld [vmem:[#allocation3 + $0x10] sm:$0xff]
        %v5148 = vld [vmem:[#allocation3 + $0x18] sm:$0xff]
        %v5149 = vld [vmem:[#allocation3 + $0x20] sm:$0xff]
        %v5150 = vld [vmem:[#allocation3 + $0x28] sm:$0xff]
        %v5151 = vld [vmem:[#allocation3 + $0x30] sm:$0xff]
        %v5152 = vld [vmem:[#allocation3 + $0x38] sm:$0xff]
        %v5153 = vpack.c.bf16 %v5138, %v5137
        %v5154 = vpack.c.bf16 %v5140, %v5139
        %v5155 = vpack.c.bf16 %v5142, %v5141
        %v5156 = vpack.c.bf16 %v5144, %v5143
        %v5157 = vld [vmem:[%s510] sm:$0xf]
        %v5158 = vld [vmem:[%s510 + $0x4] sm:$0xf]
        %v5159 = vld [vmem:[%s510 + $0x8] sm:$0xf]
        %v5160 = vld [vmem:[%s510 + $0xc] sm:$0xf]
        %v5165 = vunpack.c.l.b16 %v5157
        %v5166 = vunpack.c.l.b16 %v5158
        %v5167 = vunpack.c.l.b16 %v5159
        %v5168 = vunpack.c.l.b16 %v5160
        %v5169 = vpack.c.b16 %v5166, %v5165
        %v5170 = vpack.c.b16 %v5168, %v5167
        %v5174 = vsel %vm2951, %v5153, 0
        %v5177 = vsel %vm2951, %v5154, 0
        %v5180 = vsel %vm2951, %v5155, 0
        %v5183 = vsel %vm2951, %v5156, 0
        %5185 = vmatprep.subr.bf16.mxu0 0
        %5186 = vmatpush1.bf16.msra.mxu0 %v5169
        %5187 = vmatprep.subr.bf16.mxu0 0
        %5188 = vmatpush1.bf16.msra.mxu0 %v5170
        %5189 = vmatprep.subr.bf16.mxu0 0
        %5190 = vmatpush1.bf16.msra.mxu0 0
        %5191 = vmatprep.subr.bf16.mxu0 0
        %5192 = vmatpush1.bf16.msra.mxu0 0
        %5193 = vmatprep.subr.bf16.mxu0 0
        %5194 = vmatpush1.bf16.msra.mxu0 0
        %5195 = vmatprep.subr.bf16.mxu0 0
        %5196 = vmatpush1.bf16.msra.mxu0 0
        %5197 = vmatprep.subr.bf16.mxu0 0
        %5198 = vmatpush1.bf16.msra.mxu0 0
        %5199 = vmatprep.subr.bf16.mxu0 0
        %5200 = vmatpush1.bf16.msra.mxu0 0
        %5201 = vmatprep.subr.bf16.mxu0 0
        %5202 = vmatpush1.bf16.msra.mxu0 0
        %5203 = vmatprep.subr.bf16.mxu0 0
        %5204 = vmatpush1.bf16.msra.mxu0 0
        %5205 = vmatprep.subr.bf16.mxu0 0
        %5206 = vmatpush1.bf16.msra.mxu0 0
        %5207 = vmatprep.subr.bf16.mxu0 0
        %5208 = vmatpush1.bf16.msra.mxu0 0
        %5209 = vmatprep.subr.bf16.mxu0 0
        %5210 = vmatpush1.bf16.msra.mxu0 0
        %5211 = vmatprep.subr.bf16.mxu0 0
        %5212 = vmatpush1.bf16.msra.mxu0 0
        %5213 = vmatprep.subr.bf16.mxu0 0
        %5214 = vmatpush1.bf16.msra.mxu0 0
        %5215 = vmatprep.subr.bf16.mxu0 0
        %5216 = vmatpush1.bf16.msra.mxu0 0
        %5217 = vmatprep.mubr.bf16.mxu0 0
        %5218 = vmatmul.mubr.bf16.gmra.mrb[0].mxu0 %v5174
        %v5219 = vpop.f32.mrb[0].mxu0
        %v5220 = vadd.f32 0.0, %v5219
        %v5221 = vpop.f32.mrb[0].mxu0
        %v5222 = vpop.f32.mrb[0].mxu0
        %v5223 = vadd.f32 0.0, %v5222
        %v5224 = vpop.f32.mrb[0].mxu0
        %5225 = vmatprep.mubr.bf16.mxu0 0
        %5226 = vmatmul.mubr.bf16.gmra.mrb[0].mxu0 %v5177
        %v5227 = vpop.f32.mrb[0].mxu0
        %v5228 = vadd.f32 0.0, %v5227
        %v5229 = vpop.f32.mrb[0].mxu0
        %v5230 = vpop.f32.mrb[0].mxu0
        %v5231 = vadd.f32 0.0, %v5230
        %v5232 = vpop.f32.mrb[0].mxu0
        %5233 = vmatprep.mubr.bf16.mxu0 0
        %5234 = vmatmul.mubr.bf16.gmra.mrb[0].mxu0 %v5180
        %v5235 = vpop.f32.mrb[0].mxu0
        %v5236 = vadd.f32 0.0, %v5235
        %v5237 = vpop.f32.mrb[0].mxu0
        %v5238 = vpop.f32.mrb[0].mxu0
        %v5239 = vadd.f32 0.0, %v5238
        %v5240 = vpop.f32.mrb[0].mxu0
        %5241 = vmatprep.mubr.bf16.mxu0 0
        %5242 = vmatmul.mubr.bf16.gmra.mrb[0].mxu0 %v5183
        %v5243 = vpop.f32.mrb[0].mxu0
        %v5244 = vadd.f32 0.0, %v5243
        %v5245 = vpop.f32.mrb[0].mxu0
        %v5246 = vpop.f32.mrb[0].mxu0
        %v5247 = vadd.f32 0.0, %v5246
        %v5248 = vpop.f32.mrb[0].mxu0
        %5249 = vdwg.mxu0
        %v5250 = vadd.f32 %v5145, %v5220
        %v5251 = vadd.f32 %v5146, %v5223
        %v5252 = vadd.f32 %v5147, %v5228
        %v5253 = vadd.f32 %v5148, %v5231
        %v5254 = vadd.f32 %v5149, %v5236
        %v5255 = vadd.f32 %v5150, %v5239
        %v5256 = vadd.f32 %v5151, %v5244
        %v5257 = vadd.f32 %v5152, %v5247
        %5258 = vst.msk [vmem:[#allocation3] sm:$0xff] %vm2951, %v5250
        %5259 = vst.msk [vmem:[#allocation3 + $0x8] sm:$0xff] %vm2951, %v5251
        %5260 = vst.msk [vmem:[#allocation3 + $0x10] sm:$0xff] %vm2951, %v5252
        %5261 = vst.msk [vmem:[#allocation3 + $0x18] sm:$0xff] %vm2951, %v5253
        %5262 = vst.msk [vmem:[#allocation3 + $0x20] sm:$0xff] %vm2951, %v5254
        %5263 = vst.msk [vmem:[#allocation3 + $0x28] sm:$0xff] %vm2951, %v5255
        %5264 = vst.msk [vmem:[#allocation3 + $0x30] sm:$0xff] %vm2951, %v5256
        %5265 = vst.msk [vmem:[#allocation3 + $0x38] sm:$0xff] %vm2951, %v5257
        %p5266 = scmp.eq.s32.totalorder %s35, 4
        // Predicated region
        $region93: #{tpu_custom_call.1} parent=67 // pred_check
          %p5267 = pneg %p5266
        $region94: #{tpu_custom_call.1} parent=67 // pred_check_branch
          %5269 = sbr.rel (%p5267) target = $region96
        $region95: #{tpu_custom_call.1} parent=67 // pred_region
          %v5270 = vld [vmem:[#allocation3] sm:$0xff]
          %v5271 = vld [vmem:[#allocation3 + $0x8] sm:$0xff]
          %v5272 = vld [vmem:[#allocation3 + $0x10] sm:$0xff]
          %v5273 = vld [vmem:[#allocation3 + $0x18] sm:$0xff]
          %v5274 = vld [vmem:[#allocation3 + $0x20] sm:$0xff]
          %v5275 = vld [vmem:[#allocation3 + $0x28] sm:$0xff]
          %v5276 = vld [vmem:[#allocation3 + $0x30] sm:$0xff]
          %v5277 = vld [vmem:[#allocation3 + $0x38] sm:$0xff]
          %vm5278 = vcmp.ge.f32.partialorder %v5270, 0.0
          %vm5279 = vcmp.ge.f32.partialorder %v5271, 0.0
          %vm5280 = vcmp.ge.f32.partialorder %v5272, 0.0
          %vm5281 = vcmp.ge.f32.partialorder %v5273, 0.0
          %vm5282 = vcmp.ge.f32.partialorder %v5274, 0.0
          %vm5283 = vcmp.ge.f32.partialorder %v5275, 0.0
          %vm5284 = vcmp.ge.f32.partialorder %v5276, 0.0
          %vm5285 = vcmp.ge.f32.partialorder %v5277, 0.0
          %v5286 = vmul.f32 %v5270, 0.1
          %v5287 = vmul.f32 %v5271, 0.1
          %v5288 = vmul.f32 %v5272, 0.1
          %v5289 = vmul.f32 %v5273, 0.1
          %v5290 = vmul.f32 %v5274, 0.1
          %v5291 = vmul.f32 %v5275, 0.1
          %v5292 = vmul.f32 %v5276, 0.1
          %v5293 = vmul.f32 %v5277, 0.1
          %v5294 = vsel %vm5278, %v5270, %v5286
          %v5295 = vsel %vm5279, %v5271, %v5287
          %v5296 = vsel %vm5280, %v5272, %v5288
          %v5297 = vsel %vm5281, %v5273, %v5289
          %v5298 = vsel %vm5282, %v5274, %v5290
          %v5299 = vsel %vm5283, %v5275, %v5291
          %v5300 = vsel %vm5284, %v5276, %v5292
          %v5301 = vsel %vm5285, %v5277, %v5293
          %5302 = vst.msk [vmem:[%s575] sm:$0xff] %vm2951, %v5294
          %5303 = vst.msk [vmem:[%s575 + $0x8] sm:$0xff] %vm2951, %v5295
          %5304 = vst.msk [vmem:[%s575 + $0x10] sm:$0xff] %vm2951, %v5296
          %5305 = vst.msk [vmem:[%s575 + $0x18] sm:$0xff] %vm2951, %v5297
          %5306 = vst.msk [vmem:[%s575 + $0x20] sm:$0xff] %vm2951, %v5298
          %5307 = vst.msk [vmem:[%s575 + $0x28] sm:$0xff] %vm2951, %v5299
          %5308 = vst.msk [vmem:[%s575 + $0x30] sm:$0xff] %vm2951, %v5300
          %5309 = vst.msk [vmem:[%s575 + $0x38] sm:$0xff] %vm2951, %v5301
        $region96: #{tpu_custom_call.1} parent=67 // pred_fallthru
          _
        %p5310 = scmp.lt.s32.totalorder %s34, 1
        %s5311 = scalar_select %p5310, %s34, 1
        %s5312 = smul.addr %s5311, 8
        %s5313 = smul.addr %s5312, 8
        %s5314 = scalar_lea.vmem %s12, %s5313
        // Predicated region
        $region97: #{tpu_custom_call.1} parent=67 // pred_check
          %p5315 = pneg %p334
        $region98: #{tpu_custom_call.1} parent=67 // pred_check_branch
          %5317 = sbr.rel (%p5315) target = $region100
        $region99: #{tpu_custom_call.1} parent=67 // pred_region
          _
        $region100: #{tpu_custom_call.1} parent=67 // pred_fallthru
          _
      $region68: #{tpu_custom_call.1} parent=5 // pred_fallthru
        _
      %p5318 = scmp.le.s32.totalorder 2, %s25
      // Predicated region
      $region101: #{tpu_custom_call.1} parent=5 // pred_check
        %p5319 = pneg %p5318
      $region102: #{tpu_custom_call.1} parent=5 // pred_check_branch
        %5321 = sbr.rel (%p5319) target = $region104
      $region103: #{tpu_custom_call.1} parent=5 // pred_region
        %s5322 = ssub.s32 %s25, 2
        // Predicated region
        $region105: #{tpu_custom_call.1} parent=103 // pred_check
          %p5323 = pneg %p340
        $region106: #{tpu_custom_call.1} parent=103 // pred_check_branch
          %5325 = sbr.rel (%p5323) target = $region108
        $region107: #{tpu_custom_call.1} parent=103 // pred_region
          %p5326 = scmp.lt.s32.totalorder %s36, 1
          %s5327 = scalar_select %p5326, %s36, 1
          %s5328 = smul.addr %s5327, 8
          %s5329 = smul.addr %s5328, 8
          %s5330 = scalar_lea.vmem %s12, %s5329
        $region108: #{tpu_custom_call.1} parent=103 // pred_fallthru
          _
      $region104: #{tpu_custom_call.1} parent=5 // pred_fallthru
        _
    $region6: #{tpu_custom_call.1} parent=1 // loop_footer
      %s29 = sadd.s32 1, %s25
    $region7: #{tpu_custom_call.1} parent=1 // loop_footer_branch
      %24 = sbr.rel target = $region3
    $region8: #{tpu_custom_call.1} parent=1 // loop_exit
      _
    %5331 = vsyncpa [#allocation7], 1
    %s5332 = scalar_lea.sflag [#allocation7], 1
    %5333 = vsyncpa %s5332, 1
    %5334 = vsyncpa [#allocation9], 1
    %s5335 = scalar_lea.sflag [#allocation9], 1
    %5336 = vsyncpa %s5335, 1
    %5337 = vsyncpa [#allocation12], 1

</llo_original>
